<compile_context>
chip_gen: v6e
topology: v6e:2x2x1
jax: 0.10.0
libtpu: 0.0.40
codegen_flags: <defaults>
</compile_context>

<pallas_src>
import functools

import jax
import jax.numpy as jnp
from jax.experimental import pallas as pl
from jax.experimental.pallas import tpu as pltpu


# --------------------- per-generation VMEM / tile sizing --------------------

def _vmem_capacity_bytes():
    try:
        cap = getattr(pltpu.get_tpu_info(), "vmem_capacity_bytes", None)
        if cap:
            return int(cap)
    except Exception:
        pass
    return 64 * 1024 * 1024          # conservative (v7x-sized) fallback


_VMEM_CAP = _vmem_capacity_bytes()
# ~80 MiB scoped on 128 MiB parts (v5e/v6e), ~40 MiB on 64 MiB parts (v7x).
_VMEM_LIMIT = min(int(_VMEM_CAP * 5 // 8), 80 * 1024 * 1024)
# Bigger row tiles where VMEM is plentiful; conservative on v7x.
_ROW_TILE = 512 if _VMEM_CAP >= 96 * 1024 * 1024 else 256


def _round_up(x, m):
    return ((x + m - 1) // m) * m


def _row_tile(M):
    """Fixed MXU-friendly row tile; small M gets a single 8-aligned block."""
    return _ROW_TILE if M > _ROW_TILE else max(8, _round_up(M, 8))


# ----------------------------- Pallas kernels ------------------------------

def _matmul_kernel(*refs, activation, has_residual):
    """y = act(x @ w + b) [+ residual]; full (K,N) weight resident, f32 math."""
    if has_residual:
        x_ref, w_ref, b_ref, res_ref, o_ref = refs
    else:
        x_ref, w_ref, b_ref, o_ref = refs
        res_ref = None
    y = jnp.dot(x_ref[...], w_ref[...],
                preferred_element_type=jnp.float32) + b_ref[...]
    if activation == "quick_gelu":                 # HF CLIP hidden_act (f32)
        y = y * jax.nn.sigmoid(1.702 * y)
    if res_ref is not None:
        y = y + res_ref[...].astype(jnp.float32)
    o_ref[...] = y.astype(o_ref.dtype)


def pallas_matmul(x, w, b, activation=None, residual=None,
                  out_dtype=jnp.bfloat16):
    """y = act(x @ w + b) (+ residual); x:[M,K] bf16, w:[K,N] bf16, b:[N] f32.

    Grid over row tiles only; the weight block has a constant index_map, so it
    is fetched from HBM exactly once per kernel (weight-resident blocking).
    # TODO(synk): add an N-tiled fallback for weights too large for VMEM
    # residency (not needed at CLIP ViT-B/L sizes).
    """
    M, K = x.shape
    _, N = w.shape
    tm = _row_tile(M)
    has_res = residual is not None

    in_specs = [pl.BlockSpec((tm, K), lambda i: (i, 0)),
                pl.BlockSpec((K, N), lambda i: (0, 0)),    # constant -> one DMA
                pl.BlockSpec((1, N), lambda i: (0, 0))]
    args = [x, w, b.reshape(1, N).astype(jnp.float32)]
    if has_res:
        in_specs.append(pl.BlockSpec((tm, N), lambda i: (i, 0)))
        args.append(residual)

    kern = functools.partial(_matmul_kernel, activation=activation,
                             has_residual=has_res)
    return pl.pallas_call(
        kern,
        out_shape=jax.ShapeDtypeStruct((M, N), out_dtype),
        grid=(pl.cdiv(M, tm),),
        in_specs=in_specs,
        out_specs=pl.BlockSpec((tm, N), lambda i: (i, 0)),
        compiler_params=pltpu.CompilerParams(
            dimension_semantics=("parallel",),
            vmem_limit_bytes=_VMEM_LIMIT),
    )(*args)


def _ln_matmul_kernel(x_ref, g_ref, bt_ref, w_ref, b_ref, o_ref, *, eps,
                      activation):
    """Fused LayerNorm (f32 stats) + matmul (bf16 MXU operands, f32 accum).
    Grid is rows-only, so LN runs exactly once per row tile."""
    x = x_ref[...].astype(jnp.float32)
    mean = jnp.mean(x, axis=-1, keepdims=True)
    var = jnp.mean(jnp.square(x - mean), axis=-1, keepdims=True)
    xn = (x - mean) * jax.lax.rsqrt(var + eps)
    xn = xn * g_ref[...] + bt_ref[...]
    y = jnp.dot(xn.astype(w_ref.dtype), w_ref[...],
                preferred_element_type=jnp.float32) + b_ref[...]
    if activation == "quick_gelu":
        y = y * jax.nn.sigmoid(1.702 * y)
    o_ref[...] = y.astype(o_ref.dtype)


def pallas_ln_matmul(x, gamma, beta, w, b, activation=None, eps=1e-5,
                     out_dtype=jnp.bfloat16):
    """y = act(layernorm(x) @ w + b); K kept whole (LN needs the row), weight
    (K, N) fully VMEM-resident with a constant index_map."""
    M, K = x.shape
    _, N = w.shape
    tm = _row_tile(M)
    kern = functools.partial(_ln_matmul_kernel, eps=eps, activation=activation)
    return pl.pallas_call(
        kern,
        out_shape=jax.ShapeDtypeStruct((M, N), out_dtype),
        grid=(pl.cdiv(M, tm),),
        in_specs=[pl.BlockSpec((tm, K), lambda i: (i, 0)),
                  pl.BlockSpec((1, K), lambda i: (0, 0)),
                  pl.BlockSpec((1, K), lambda i: (0, 0)),
                  pl.BlockSpec((K, N), lambda i: (0, 0)),   # constant -> one DMA
                  pl.BlockSpec((1, N), lambda i: (0, 0))],
        out_specs=pl.BlockSpec((tm, N), lambda i: (i, 0)),
        compiler_params=pltpu.CompilerParams(
            dimension_semantics=("parallel",),
            vmem_limit_bytes=_VMEM_LIMIT),
    )(x, gamma.reshape(1, K).astype(jnp.float32),
      beta.reshape(1, K).astype(jnp.float32),
      w, b.reshape(1, N).astype(jnp.float32))


def _layernorm_kernel(x_ref, g_ref, b_ref, o_ref, *, eps):
    x = x_ref[...].astype(jnp.float32)
    mean = jnp.mean(x, axis=-1, keepdims=True)
    var = jnp.mean(jnp.square(x - mean), axis=-1, keepdims=True)
    y = (x - mean) * jax.lax.rsqrt(var + eps)
    o_ref[...] = (y * g_ref[...] + b_ref[...]).astype(o_ref.dtype)


def pallas_layernorm(x, gamma, beta, eps=1e-5, out_dtype=jnp.bfloat16):
    """Standalone LN (only the vision pre-LN: its output is the residual
    stream so it must be materialized)."""
    M, D = x.shape
    tm = _row_tile(M)
    kern = functools.partial(_layernorm_kernel, eps=eps)
    return pl.pallas_call(
        kern,
        out_shape=jax.ShapeDtypeStruct((M, D), out_dtype),
        grid=(pl.cdiv(M, tm),),
        in_specs=[pl.BlockSpec((tm, D), lambda i: (i, 0)),
                  pl.BlockSpec((1, D), lambda i: (0, 0)),
                  pl.BlockSpec((1, D), lambda i: (0, 0))],
        out_specs=pl.BlockSpec((tm, D), lambda i: (i, 0)),
        compiler_params=pltpu.CompilerParams(
            dimension_semantics=("parallel",),
            vmem_limit_bytes=_VMEM_LIMIT),
    )(x, gamma.reshape(1, D).astype(jnp.float32),
      beta.reshape(1, D).astype(jnp.float32))


def _attention_kernel(*refs, H, Dh, scale, causal, has_mask):
    """Per-batch MHA on a fused [S, 3*D] QKV block.
    q is pre-scaled by Dh**-0.5 (S*Dh mults/head, not S*S); causal+pad biases
    are merged into one additive bias built once; heads are processed in pairs
    so every result write is a 128-lane-aligned unmasked store (no H-way
    concatenate).  Softmax stats in f32, MXU dots in bf16."""
    if has_mask:
        qkv_ref, pad_ref, o_ref = refs
    else:
        qkv_ref, o_ref = refs
        pad_ref = None
    S = qkv_ref.shape[1]
    D = H * Dh
    neg = jnp.float32(-1e9)

    bias = None                         # shared by all heads -> build once
    if causal:
        qi = jax.lax.broadcasted_iota(jnp.int32, (S, S), 0)
        ki = jax.lax.broadcasted_iota(jnp.int32, (S, S), 1)
        bias = jnp.where(ki > qi, neg, jnp.float32(0.0))
    if pad_ref is not None:
        pb = (1.0 - pad_ref[0].astype(jnp.float32)) * neg        # [1, S]
        bias = pb if bias is None else bias + pb

    def head_out(h):
        q = qkv_ref[0, :, h * Dh:(h + 1) * Dh] * scale            # pre-scaled q
        k = qkv_ref[0, :, D + h * Dh:D + (h + 1) * Dh]
        v = qkv_ref[0, :, 2 * D + h * Dh:2 * D + (h + 1) * Dh]
        s = jax.lax.dot_general(q, k, (((1,), (1,)), ((), ())),
                                preferred_element_type=jnp.float32)
        if bias is not None:
            s = s + bias
        s = s - jnp.max(s, axis=-1, keepdims=True)
        p = jnp.exp(s)
        p = p * pl.reciprocal(jnp.sum(p, axis=-1, keepdims=True), approx=True)
        return jnp.dot(p.astype(v.dtype), v, preferred_element_type=jnp.float32)

    GP = 2 if H % 2 == 0 else 1          # head pair -> 128-lane writes at Dh=64
    for g in range(H // GP):
        outs = [head_out(g * GP + u) for u in range(GP)]
        blk = outs[0] if GP == 1 else jnp.concatenate(outs, axis=-1)
        o_ref[0, :, g * GP * Dh:(g + 1) * GP * Dh] = blk.astype(o_ref.dtype)


def pallas_attention(qkv, pad_mask, *, B, S, H, Dh, causal):
    """qkv: [B*S, 3*D] fused projections; pad_mask: [B, S] (1=keep) or None."""
    # TODO(synk): on v7x an extra head-group grid axis (grid=(B, H//2)) would
    # load-balance small batches across both TensorCores; kept (B,) here since
    # head-group BlockSpecs need 128-lane minor blocks that tiny test shapes
    # cannot satisfy.
    D = H * Dh
    kern = functools.partial(_attention_kernel, H=H, Dh=Dh, scale=Dh ** -0.5,
                             causal=causal, has_mask=pad_mask is not None)
    in_specs = [pl.BlockSpec((1, S, 3 * D), lambda b: (b, 0, 0))]
    args = [qkv.reshape(B, S, 3 * D)]
    if pad_mask is not None:
        in_specs.append(pl.BlockSpec((1, 1, S), lambda b: (b, 0, 0)))
        args.append(pad_mask.astype(jnp.float32).reshape(B, 1, S))
    return pl.pallas_call(
        kern,
        out_shape=jax.ShapeDtypeStruct((B, S, D), jnp.bfloat16),
        grid=(B,),
        in_specs=in_specs,
        out_specs=pl.BlockSpec((1, S, D), lambda b: (b, 0, 0)),
        compiler_params=pltpu.CompilerParams(
            dimension_semantics=("parallel",),
            vmem_limit_bytes=_VMEM_LIMIT),
    )(*args)


def _clip_probs_kernel(img_ref, txt_ref, scale_ref, probs_ref):
    img = img_ref[...].astype(jnp.float32)
    txt = txt_ref[...].astype(jnp.float32)
    img = img * jax.lax.rsqrt(jnp.sum(img * img, axis=-1, keepdims=True) + 1e-12)
    txt = txt * jax.lax.rsqrt(jnp.sum(txt * txt, axis=-1, keepdims=True) + 1e-12)
    # contract last dims directly -> no in-kernel transpose of text embeddings
    logits = jax.lax.dot_general(img, txt, (((1,), (1,)), ((), ())),
                                 preferred_element_type=jnp.float32)
    logits = logits * scale_ref[0, 0]
    logits = logits - jnp.max(logits, axis=1, keepdims=True)
    p = jnp.exp(logits)
    # exact reciprocal (approx=False) so probabilities sum to 1 within 1e-5
    probs_ref[...] = (p * pl.reciprocal(jnp.sum(p, axis=1, keepdims=True))
                      ).astype(probs_ref.dtype)


def clip_probs(image_embeds, text_embeds, logit_scale):
    # TODO(synk): HF clamps logit_scale during training (<=100); forward pass
    # applies exp() unclamped, matching CLIPModel.forward.
    Bi, P = image_embeds.shape
    Bt, _ = text_embeds.shape
    scale = jnp.exp(logit_scale).reshape(1, 1).astype(jnp.float32)
    return pl.pallas_call(
        _clip_probs_kernel,
        out_shape=jax.ShapeDtypeStruct((Bi, Bt), jnp.float32),
        grid=(1,),
        in_specs=[pl.BlockSpec((Bi, P), lambda i: (0, 0)),
                  pl.BlockSpec((Bt, P), lambda i: (0, 0)),
                  pl.BlockSpec((1, 1), lambda i: (0, 0))],
        out_specs=pl.BlockSpec((Bi, Bt), lambda i: (0, 0)),
        compiler_params=pltpu.CompilerParams(
            dimension_semantics=("arbitrary",),
            vmem_limit_bytes=_VMEM_LIMIT),
    )(image_embeds, text_embeds, scale)


# ----------------------------- model (glue) --------------------------------

def encoder_layer(x2, lp, pad_mask, B, S, D, H, causal):
    """Pre-LN CLIP encoder layer; x2: [B*S, D] bf16.
    LN1 fused into the QKV matmul, LN2 into fc1, residual adds fused into the
    o-proj / fc2 writeback.
    # TODO(synk): residual stream kept in bf16 (HF reference keeps fp32/fp16);
    # acceptable for inference, slight drift over many layers."""
    Dh = D // H
    residual = x2
    qkv = pallas_ln_matmul(x2, lp["ln1_g"], lp["ln1_b"],
                           lp["qkv_w"], lp["qkv_b"])
    attn = pallas_attention(qkv, pad_mask, B=B, S=S, H=H, Dh=Dh, causal=causal)
    x2 = pallas_matmul(attn.reshape(B * S, D), lp["o_w"], lp["o_b"],
                       residual=residual)
    residual = x2
    h = pallas_ln_matmul(x2, lp["ln2_g"], lp["ln2_b"],
                         lp["fc1_w"], lp["fc1_b"], activation="quick_gelu")
    return pallas_matmul(h, lp["fc2_w"], lp["fc2_b"], residual=residual)


def vision_forward(pixel_values, vp, cfg):
    B, C, Him, Wim = pixel_values.shape
    p, D, H = cfg["patch"], cfg["v_dim"], cfg["v_heads"]
    nH, nW = Him // p, Wim // p
    # conv2d(kernel=stride=patch, bias=False) as unfold + weight-resident matmul
    patches = pixel_values.reshape(B, C, nH, p, nW, p)
    patches = patches.transpose(0, 2, 4, 1, 3, 5).reshape(B * nH * nW, C * p * p)
    x = pallas_matmul(patches.astype(jnp.bfloat16), vp["patch_w2d"],
                      jnp.zeros((D,), jnp.float32))
    x = x.reshape(B, nH * nW, D)
    cls = jnp.broadcast_to(vp["class_emb"][None, None, :], (B, 1, D))
    x = jnp.concatenate([cls.astype(jnp.bfloat16), x], axis=1)    # [B, S, D]
    S = x.shape[1]
    x = x + vp["pos_emb"][None, :S, :]

    x2 = pallas_layernorm(x.reshape(B * S, D), vp["pre_ln_g"], vp["pre_ln_b"])
    for lp in vp["layers"]:
        x2 = encoder_layer(x2, lp, None, B, S, D, H, causal=False)
    pooled = x2.reshape(B, S, D)[:, 0, :]                          # CLS token
    # post-LN fused with the visual projection (LN is per-row, commutes w/ pool)
    return pallas_ln_matmul(pooled, vp["post_ln_g"], vp["post_ln_b"],
                            vp["proj_w"],
                            jnp.zeros((cfg["proj_dim"],), jnp.float32),
                            out_dtype=jnp.float32)


def text_forward(input_ids, attention_mask, tp, cfg):
    B, S = input_ids.shape
    D, H = cfg["t_dim"], cfg["t_heads"]
    x = jnp.take(tp["token_emb"], input_ids, axis=0) + tp["pos_emb"][None, :S, :]
    x2 = x.reshape(B * S, D).astype(jnp.bfloat16)

    for lp in tp["layers"]:
        x2 = encoder_layer(x2, lp, attention_mask, B, S, D, H, causal=True)

    x3 = x2.reshape(B, S, D)
    # HF CLIP pooling: hidden state at the EOS token position.
    # TODO(synk): legacy HF checkpoints use argmax(input_ids) (eos == max id);
    # here we locate eos_token_id explicitly (current HF behavior).
    eos_idx = jnp.argmax((input_ids == cfg["eos_token_id"]).astype(jnp.int32),
                         axis=-1)
    pooled = x3[jnp.arange(B), eos_idx]
    return pallas_ln_matmul(pooled, tp["final_ln_g"], tp["final_ln_b"],
                            tp["proj_w"],
                            jnp.zeros((cfg["proj_dim"],), jnp.float32),
                            out_dtype=jnp.float32)


def clip_forward(params, input_ids, attention_mask, pixel_values, cfg):
    image_embeds = vision_forward(pixel_values, params["vision"], cfg)
    text_embeds = text_forward(input_ids, attention_mask, params["text"], cfg)
    return clip_probs(image_embeds, text_embeds, params["logit_scale"])


# ----------------------------- init (synthetic) -----------------------------
# TODO(synk): original module loads pretrained weights via CLIPModel.from_pretrained;
# here parameters are initialized deterministically in-script (bf16 weights,
# f32 biases / LN params).

def init_clip_params(key, cfg):
    keys = iter(jax.random.split(key, 256))
    nxt = lambda: next(keys)

    def w_init(i, o):
        return (jax.random.normal(nxt(), (i, o), jnp.float32) * 0.02
                ).astype(jnp.bfloat16)

    def layer(D, mlp):
        return {
            "ln1_g": jnp.ones((D,), jnp.float32),
            "ln1_b": jnp.zeros((D,), jnp.float32),
            "qkv_w": w_init(D, 3 * D),                 # fused Q/K/V projection
            "qkv_b": jnp.zeros((3 * D,), jnp.float32),
            "o_w": w_init(D, D), "o_b": jnp.zeros((D,), jnp.float32),
            "ln2_g": jnp.ones((D,), jnp.float32),
            "ln2_b": jnp.zeros((D,), jnp.float32),
            "fc1_w": w_init(D, mlp), "fc1_b": jnp.zeros((mlp,), jnp.float32),
            "fc2_w": w_init(mlp, D), "fc2_b": jnp.zeros((D,), jnp.float32),
        }

    Dv, Dt, C, p = cfg["v_dim"], cfg["t_dim"], cfg["channels"], cfg["patch"]
    patch_w = jax.random.normal(nxt(), (Dv, C, p, p), jnp.float32) * 0.02
    vis = {
        "patch_w2d": patch_w.reshape(Dv, C * p * p).T.astype(jnp.bfloat16),
        "class_emb": (jax.random.normal(nxt(), (Dv,), jnp.float32) * 0.02
                      ).astype(jnp.bfloat16),
        "pos_emb": (jax.random.normal(nxt(), (cfg["v_seq"], Dv), jnp.float32)
                    * 0.02).astype(jnp.bfloat16),
        "pre_ln_g": jnp.ones((Dv,), jnp.float32),
        "pre_ln_b": jnp.zeros((Dv,), jnp.float32),
        "layers": [layer(Dv, cfg["v_mlp"]) for _ in range(cfg["v_layers"])],
        "post_ln_g": jnp.ones((Dv,), jnp.float32),
        "post_ln_b": jnp.zeros((Dv,), jnp.float32),
        "proj_w": w_init(Dv, cfg["proj_dim"]),
    }
    txt = {
        "token_emb": (jax.random.normal(nxt(), (cfg["vocab"], Dt), jnp.float32)
                      * 0.02).astype(jnp.bfloat16),
        "pos_emb": (jax.random.normal(nxt(), (cfg["t_seq"], Dt), jnp.float32)
                    * 0.02).astype(jnp.bfloat16),
        "layers": [layer(Dt, cfg["t_mlp"]) for _ in range(cfg["t_layers"])],
        "final_ln_g": jnp.ones((Dt,), jnp.float32),
        "final_ln_b": jnp.zeros((Dt,), jnp.float32),
        "proj_w": w_init(Dt, cfg["proj_dim"]),
    }
    return {"vision": vis, "text": txt,
            "logit_scale": jnp.log(jnp.float32(1.0 / 0.07))}


# --------------------------------- main -------------------------------------

if __name__ == "__main__":
    cfg = dict(channels=3, image_size=16, patch=8,
               v_dim=32, v_heads=2, v_layers=2, v_mlp=64,
               vocab=64, t_seq=8, t_dim=32, t_heads=2, t_layers=2, t_mlp=64,
               proj_dim=16, eos_token_id=63)
    cfg["v_seq"] = (cfg["image_size"] // cfg["patch"]) ** 2 + 1

    key = jax.random.PRNGKey(0)
    kp, ki, kpix = jax.random.split(key, 3)
    params = init_clip_params(kp, cfg)

    B_img, B_txt, S = 2, 2, cfg["t_seq"]
    input_ids = jax.random.randint(ki, (B_txt, S), 1, cfg["vocab"] - 1,
                                   dtype=jnp.int32)
    # place an explicit EOS token; sequence 1 is padded after position 5
    input_ids = input_ids.at[0, S - 1].set(cfg["eos_token_id"])
    input_ids = input_ids.at[1, 5].set(cfg["eos_token_id"])
    attention_mask = jnp.ones((B_txt, S), jnp.int32).at[1, 6:].set(0)
    pixel_values = jax.random.normal(
        kpix, (B_img, cfg["channels"], cfg["image_size"], cfg["image_size"]),
        jnp.float32)

    fwd = jax.jit(lambda p, ii, am, pv: clip_forward(p, ii, am, pv, cfg))
    probs = jax.block_until_ready(fwd(params, input_ids, attention_mask,
                                      pixel_values))

    assert probs.shape == (B_img, B_txt)
    assert bool(jnp.all(jnp.isfinite(probs)))
    assert bool(jnp.allclose(jnp.sum(probs, axis=1), 1.0, atol=1e-5))
    print("KERNEL_OK")
</pallas_src>

<mosaic_0001>
module attributes {stable_mosaic.version = 11 : i64} {
  func.func @_matmul_kernel(%arg0: i32, %arg1: memref<8x192xbf16, #tpu.memory_space<vmem>>, %arg2: memref<192x32xbf16, #tpu.memory_space<vmem>>, %arg3: memref<1x32xf32, #tpu.memory_space<vmem>>, %arg4: memref<8x32xbf16, #tpu.memory_space<vmem>>) attributes {dimension_semantics = [#tpu.dimension_semantics<parallel>], iteration_bounds = array<i64: 1>, scalar_prefetch = 0 : i64, scratch_operands = 0 : i64, tpu.core_type = #tpu.core_type<tc>, window_params = [{transform_indices = @transform_0, window_bounds = array<i64: 8, 192>}, {pipeline_mode = #tpu.pipeline_mode<synchronous>, transform_indices = @transform_1, window_bounds = array<i64: 192, 32>}, {pipeline_mode = #tpu.pipeline_mode<synchronous>, transform_indices = @transform_2, window_bounds = array<i64: 1, 32>}, {transform_indices = @transform_3, window_bounds = array<i64: 8, 32>}]} {
    %c0 = arith.constant 0 : index
    %c0_0 = arith.constant 0 : index
    %0 = vector.load %arg1[%c0, %c0_0] : memref<8x192xbf16, #tpu.memory_space<vmem>>, vector<8x192xbf16>
    %c0_1 = arith.constant 0 : index
    %c0_2 = arith.constant 0 : index
    %1 = vector.load %arg2[%c0_1, %c0_2] : memref<192x32xbf16, #tpu.memory_space<vmem>>, vector<192x32xbf16>
    %cst = arith.constant dense<0.000000e+00> : vector<8x32xf32>
    %2 = tpu.matmul %0, %1, %cst {dimension_numbers = #tpu.dot_dimension_numbers<[1], [0], [0], [1], [0, 0, 1, 1], [], []>} : vector<8x192xbf16>, vector<192x32xbf16>, vector<8x32xf32> -> vector<8x32xf32>
    %c0_3 = arith.constant 0 : index
    %c0_4 = arith.constant 0 : index
    %3 = vector.load %arg3[%c0_3, %c0_4] : memref<1x32xf32, #tpu.memory_space<vmem>>, vector<1x32xf32>
    %4 = vector.broadcast %3 : vector<1x32xf32> to vector<8x32xf32>
    %5 = arith.addf %2, %4 : vector<8x32xf32>
    %6 = arith.truncf %5 : vector<8x32xf32> to vector<8x32xbf16>
    %c0_5 = arith.constant 0 : index
    %c0_6 = arith.constant 0 : index
    %7 = vector.load %arg4[%c0_5, %c0_6] : memref<8x32xbf16, #tpu.memory_space<vmem>>, vector<8x32xbf16>
    tpu.vector_store %arg4[%c0_5, %c0_6], %6 {strides = array<i32>} : memref<8x32xbf16, #tpu.memory_space<vmem>>, vector<8x32xbf16>,
    return
  }
  func.func @transform_0(%arg0: i32) -> (i32, i32) {
    %c0_i32 = arith.constant 0 : i32
    %c0_i32_0 = arith.constant 0 : i32
    return %arg0, %c0_i32 : i32, i32
  }
  func.func @transform_1(%arg0: i32) -> (i32, i32) {
    %c0_i32 = arith.constant 0 : i32
    %c0_i32_0 = arith.constant 0 : i32
    %c0_i32_1 = arith.constant 0 : i32
    return %c0_i32, %c0_i32_0 : i32, i32
  }
  func.func @transform_2(%arg0: i32) -> (i32, i32) {
    %c0_i32 = arith.constant 0 : i32
    %c0_i32_0 = arith.constant 0 : i32
    %c0_i32_1 = arith.constant 0 : i32
    return %c0_i32, %c0_i32_0 : i32, i32
  }
  func.func @transform_3(%arg0: i32) -> (i32, i32) {
    %c0_i32 = arith.constant 0 : i32
    %c0_i32_0 = arith.constant 0 : i32
    return %arg0, %c0_i32 : i32, i32
  }
}

module attributes {stable_mosaic.version = 11 : i64} {
  func.func @_layernorm_kernel(%arg0: i32, %arg1: memref<16x32xbf16, #tpu.memory_space<vmem>>, %arg2: memref<1x32xf32, #tpu.memory_space<vmem>>, %arg3: memref<1x32xf32, #tpu.memory_space<vmem>>, %arg4: memref<16x32xbf16, #tpu.memory_space<vmem>>) attributes {dimension_semantics = [#tpu.dimension_semantics<parallel>], iteration_bounds = array<i64: 1>, scalar_prefetch = 0 : i64, scratch_operands = 0 : i64, tpu.core_type = #tpu.core_type<tc>, window_params = [{transform_indices = @transform_0, window_bounds = array<i64: 16, 32>}, {pipeline_mode = #tpu.pipeline_mode<synchronous>, transform_indices = @transform_1, window_bounds = array<i64: 1, 32>}, {pipeline_mode = #tpu.pipeline_mode<synchronous>, transform_indices = @transform_2, window_bounds = array<i64: 1, 32>}, {transform_indices = @transform_3, window_bounds = array<i64: 16, 32>}]} {
    %c0 = arith.constant 0 : index
    %c0_0 = arith.constant 0 : index
    %0 = vector.load %arg1[%c0, %c0_0] : memref<16x32xbf16, #tpu.memory_space<vmem>>, vector<16x32xbf16>
    %1 = arith.extf %0 : vector<16x32xbf16> to vector<16x32xf32>
    %cst = arith.constant dense<0.000000e+00> : vector<16xf32>
    %2 = vector.multi_reduction <add>, %1, %cst [1] : vector<16x32xf32> to vector<16xf32>
    %3 = vector.shape_cast %2 : vector<16xf32> to vector<16x1xf32>
    %cst_1 = arith.constant 3.200000e+01 : f32
    %4 = vector.broadcast %cst_1 : f32 to vector<16x1xf32>
    %5 = arith.divf %3, %4 : vector<16x1xf32>
    %6 = vector.broadcast %5 : vector<16x1xf32> to vector<16x32xf32>
    %7 = arith.subf %1, %6 : vector<16x32xf32>
    %8 = arith.mulf %7, %7 : vector<16x32xf32>
    %cst_2 = arith.constant dense<0.000000e+00> : vector<16xf32>
    %9 = vector.multi_reduction <add>, %8, %cst_2 [1] : vector<16x32xf32> to vector<16xf32>
    %10 = vector.shape_cast %9 : vector<16xf32> to vector<16x1xf32>
    %cst_3 = arith.constant 3.200000e+01 : f32
    %11 = vector.broadcast %cst_3 : f32 to vector<16x1xf32>
    %12 = arith.divf %10, %11 : vector<16x1xf32>
    %13 = vector.broadcast %5 : vector<16x1xf32> to vector<16x32xf32>
    %14 = arith.subf %1, %13 : vector<16x32xf32>
    %cst_4 = arith.constant 9.99999974E-6 : f32
    %15 = vector.broadcast %cst_4 : f32 to vector<16x1xf32>
    %16 = arith.addf %12, %15 : vector<16x1xf32>
    %17 = math.rsqrt %16 : vector<16x1xf32>
    %18 = vector.broadcast %17 : vector<16x1xf32> to vector<16x32xf32>
    %19 = arith.mulf %14, %18 : vector<16x32xf32>
    %c0_5 = arith.constant 0 : index
    %c0_6 = arith.constant 0 : index
    %20 = vector.load %arg2[%c0_5, %c0_6] : memref<1x32xf32, #tpu.memory_space<vmem>>, vector<1x32xf32>
    %21 = vector.broadcast %20 : vector<1x32xf32> to vector<16x32xf32>
    %22 = arith.mulf %19, %21 : vector<16x32xf32>
    %c0_7 = arith.constant 0 : index
    %c0_8 = arith.constant 0 : index
    %23 = vector.load %arg3[%c0_7, %c0_8] : memref<1x32xf32, #tpu.memory_space<vmem>>, vector<1x32xf32>
    %24 = vector.broadcast %23 : vector<1x32xf32> to vector<16x32xf32>
    %25 = arith.addf %22, %24 : vector<16x32xf32>
    %26 = arith.truncf %25 : vector<16x32xf32> to vector<16x32xbf16>
    %c0_9 = arith.constant 0 : index
    %c0_10 = arith.constant 0 : index
    %27 = vector.load %arg4[%c0_9, %c0_10] : memref<16x32xbf16, #tpu.memory_space<vmem>>, vector<16x32xbf16>
    tpu.vector_store %arg4[%c0_9, %c0_10], %26 {strides = array<i32>} : memref<16x32xbf16, #tpu.memory_space<vmem>>, vector<16x32xbf16>,
    return
  }
  func.func @transform_0(%arg0: i32) -> (i32, i32) {
    %c0_i32 = arith.constant 0 : i32
    %c0_i32_0 = arith.constant 0 : i32
    return %arg0, %c0_i32 : i32, i32
  }
  func.func @transform_1(%arg0: i32) -> (i32, i32) {
    %c0_i32 = arith.constant 0 : i32
    %c0_i32_0 = arith.constant 0 : i32
    %c0_i32_1 = arith.constant 0 : i32
    return %c0_i32, %c0_i32_0 : i32, i32
  }
  func.func @transform_2(%arg0: i32) -> (i32, i32) {
    %c0_i32 = arith.constant 0 : i32
    %c0_i32_0 = arith.constant 0 : i32
    %c0_i32_1 = arith.constant 0 : i32
    return %c0_i32, %c0_i32_0 : i32, i32
  }
  func.func @transform_3(%arg0: i32) -> (i32, i32) {
    %c0_i32 = arith.constant 0 : i32
    %c0_i32_0 = arith.constant 0 : i32
    return %arg0, %c0_i32 : i32, i32
  }
}

module attributes {stable_mosaic.version = 11 : i64} {
  func.func @_ln_matmul_kernel(%arg0: i32, %arg1: memref<16x32xbf16, #tpu.memory_space<vmem>>, %arg2: memref<1x32xf32, #tpu.memory_space<vmem>>, %arg3: memref<1x32xf32, #tpu.memory_space<vmem>>, %arg4: memref<32x96xbf16, #tpu.memory_space<vmem>>, %arg5: memref<1x96xf32, #tpu.memory_space<vmem>>, %arg6: memref<16x96xbf16, #tpu.memory_space<vmem>>) attributes {dimension_semantics = [#tpu.dimension_semantics<parallel>], iteration_bounds = array<i64: 1>, scalar_prefetch = 0 : i64, scratch_operands = 0 : i64, tpu.core_type = #tpu.core_type<tc>, window_params = [{transform_indices = @transform_0, window_bounds = array<i64: 16, 32>}, {pipeline_mode = #tpu.pipeline_mode<synchronous>, transform_indices = @transform_1, window_bounds = array<i64: 1, 32>}, {pipeline_mode = #tpu.pipeline_mode<synchronous>, transform_indices = @transform_2, window_bounds = array<i64: 1, 32>}, {pipeline_mode = #tpu.pipeline_mode<synchronous>, transform_indices = @transform_3, window_bounds = array<i64: 32, 96>}, {pipeline_mode = #tpu.pipeline_mode<synchronous>, transform_indices = @transform_4, window_bounds = array<i64: 1, 96>}, {transform_indices = @transform_5, window_bounds = array<i64: 16, 96>}]} {
    %c0 = arith.constant 0 : index
    %c0_0 = arith.constant 0 : index
    %0 = vector.load %arg1[%c0, %c0_0] : memref<16x32xbf16, #tpu.memory_space<vmem>>, vector<16x32xbf16>
    %1 = arith.extf %0 : vector<16x32xbf16> to vector<16x32xf32>
    %cst = arith.constant dense<0.000000e+00> : vector<16xf32>
    %2 = vector.multi_reduction <add>, %1, %cst [1] : vector<16x32xf32> to vector<16xf32>
    %3 = vector.shape_cast %2 : vector<16xf32> to vector<16x1xf32>
    %cst_1 = arith.constant 3.200000e+01 : f32
    %4 = vector.broadcast %cst_1 : f32 to vector<16x1xf32>
    %5 = arith.divf %3, %4 : vector<16x1xf32>
    %6 = vector.broadcast %5 : vector<16x1xf32> to vector<16x32xf32>
    %7 = arith.subf %1, %6 : vector<16x32xf32>
    %8 = arith.mulf %7, %7 : vector<16x32xf32>
    %cst_2 = arith.constant dense<0.000000e+00> : vector<16xf32>
    %9 = vector.multi_reduction <add>, %8, %cst_2 [1] : vector<16x32xf32> to vector<16xf32>
    %10 = vector.shape_cast %9 : vector<16xf32> to vector<16x1xf32>
    %cst_3 = arith.constant 3.200000e+01 : f32
    %11 = vector.broadcast %cst_3 : f32 to vector<16x1xf32>
    %12 = arith.divf %10, %11 : vector<16x1xf32>
    %13 = vector.broadcast %5 : vector<16x1xf32> to vector<16x32xf32>
    %14 = arith.subf %1, %13 : vector<16x32xf32>
    %cst_4 = arith.constant 9.99999974E-6 : f32
    %15 = vector.broadcast %cst_4 : f32 to vector<16x1xf32>
    %16 = arith.addf %12, %15 : vector<16x1xf32>
    %17 = math.rsqrt %16 : vector<16x1xf32>
    %18 = vector.broadcast %17 : vector<16x1xf32> to vector<16x32xf32>
    %19 = arith.mulf %14, %18 : vector<16x32xf32>
    %c0_5 = arith.constant 0 : index
    %c0_6 = arith.constant 0 : index
    %20 = vector.load %arg2[%c0_5, %c0_6] : memref<1x32xf32, #tpu.memory_space<vmem>>, vector<1x32xf32>
    %21 = vector.broadcast %20 : vector<1x32xf32> to vector<16x32xf32>
    %22 = arith.mulf %19, %21 : vector<16x32xf32>
    %c0_7 = arith.constant 0 : index
    %c0_8 = arith.constant 0 : index
    %23 = vector.load %arg3[%c0_7, %c0_8] : memref<1x32xf32, #tpu.memory_space<vmem>>, vector<1x32xf32>
    %24 = vector.broadcast %23 : vector<1x32xf32> to vector<16x32xf32>
    %25 = arith.addf %22, %24 : vector<16x32xf32>
    %26 = arith.truncf %25 : vector<16x32xf32> to vector<16x32xbf16>
    %c0_9 = arith.constant 0 : index
    %c0_10 = arith.constant 0 : index
    %27 = vector.load %arg4[%c0_9, %c0_10] : memref<32x96xbf16, #tpu.memory_space<vmem>>, vector<32x96xbf16>
    %cst_11 = arith.constant dense<0.000000e+00> : vector<16x96xf32>
    %28 = tpu.matmul %26, %27, %cst_11 {dimension_numbers = #tpu.dot_dimension_numbers<[1], [0], [0], [1], [0, 0, 1, 1], [], []>} : vector<16x32xbf16>, vector<32x96xbf16>, vector<16x96xf32> -> vector<16x96xf32>
    %c0_12 = arith.constant 0 : index
    %c0_13 = arith.constant 0 : index
    %29 = vector.load %arg5[%c0_12, %c0_13] : memref<1x96xf32, #tpu.memory_space<vmem>>, vector<1x96xf32>
    %30 = vector.broadcast %29 : vector<1x96xf32> to vector<16x96xf32>
    %31 = arith.addf %28, %30 : vector<16x96xf32>
    %32 = arith.truncf %31 : vector<16x96xf32> to vector<16x96xbf16>
    %c0_14 = arith.constant 0 : index
    %c0_15 = arith.constant 0 : index
    %33 = vector.load %arg6[%c0_14, %c0_15] : memref<16x96xbf16, #tpu.memory_space<vmem>>, vector<16x96xbf16>
    tpu.vector_store %arg6[%c0_14, %c0_15], %32 {strides = array<i32>} : memref<16x96xbf16, #tpu.memory_space<vmem>>, vector<16x96xbf16>,
    return
  }
  func.func @transform_0(%arg0: i32) -> (i32, i32) {
    %c0_i32 = arith.constant 0 : i32
    %c0_i32_0 = arith.constant 0 : i32
    return %arg0, %c0_i32 : i32, i32
  }
  func.func @transform_1(%arg0: i32) -> (i32, i32) {
    %c0_i32 = arith.constant 0 : i32
    %c0_i32_0 = arith.constant 0 : i32
    %c0_i32_1 = arith.constant 0 : i32
    return %c0_i32, %c0_i32_0 : i32, i32
  }
  func.func @transform_2(%arg0: i32) -> (i32, i32) {
    %c0_i32 = arith.constant 0 : i32
    %c0_i32_0 = arith.constant 0 : i32
    %c0_i32_1 = arith.constant 0 : i32
    return %c0_i32, %c0_i32_0 : i32, i32
  }
  func.func @transform_3(%arg0: i32) -> (i32, i32) {
    %c0_i32 = arith.constant 0 : i32
    %c0_i32_0 = arith.constant 0 : i32
    %c0_i32_1 = arith.constant 0 : i32
    return %c0_i32, %c0_i32_0 : i32, i32
  }
  func.func @transform_4(%arg0: i32) -> (i32, i32) {
    %c0_i32 = arith.constant 0 : i32
    %c0_i32_0 = arith.constant 0 : i32
    %c0_i32_1 = arith.constant 0 : i32
    return %c0_i32, %c0_i32_0 : i32, i32
  }
  func.func @transform_5(%arg0: i32) -> (i32, i32) {
    %c0_i32 = arith.constant 0 : i32
    %c0_i32_0 = arith.constant 0 : i32
    return %arg0, %c0_i32 : i32, i32
  }
}

module attributes {stable_mosaic.version = 11 : i64} {
  func.func @_attention_kernel(%arg0: i32, %arg1: memref<1x5x96xbf16, #tpu.memory_space<vmem>>, %arg2: memref<1x5x32xbf16, #tpu.memory_space<vmem>>) attributes {dimension_semantics = [#tpu.dimension_semantics<parallel>], iteration_bounds = array<i64: 2>, scalar_prefetch = 0 : i64, scratch_operands = 0 : i64, tpu.core_type = #tpu.core_type<tc>, window_params = [{transform_indices = @transform_0, window_bounds = array<i64: 1, 5, 96>}, {transform_indices = @transform_1, window_bounds = array<i64: 1, 5, 32>}]} {
    %c0 = arith.constant 0 : index
    %c0_0 = arith.constant 0 : index
    %c0_1 = arith.constant 0 : index
    %0 = vector.load %arg1[%c0, %c0_0, %c0_1] : memref<1x5x96xbf16, #tpu.memory_space<vmem>>, vector<1x5x16xbf16>
    %1 = vector.shape_cast %0 : vector<1x5x16xbf16> to vector<5x16xbf16>
    %cst = arith.constant 2.500000e-01 : bf16
    %2 = vector.broadcast %cst : bf16 to vector<5x16xbf16>
    %3 = arith.mulf %1, %2 : vector<5x16xbf16>
    %c0_2 = arith.constant 0 : index
    %c0_3 = arith.constant 0 : index
    %c32 = arith.constant 32 : index
    %4 = vector.load %arg1[%c0_2, %c0_3, %c32] : memref<1x5x96xbf16, #tpu.memory_space<vmem>>, vector<1x5x16xbf16>
    %5 = vector.shape_cast %4 : vector<1x5x16xbf16> to vector<5x16xbf16>
    %c0_4 = arith.constant 0 : index
    %c0_5 = arith.constant 0 : index
    %c64 = arith.constant 64 : index
    %6 = vector.load %arg1[%c0_4, %c0_5, %c64] : memref<1x5x96xbf16, #tpu.memory_space<vmem>>, vector<1x5x16xbf16>
    %7 = vector.shape_cast %6 : vector<1x5x16xbf16> to vector<5x16xbf16>
    %cst_6 = arith.constant dense<0.000000e+00> : vector<5x5xf32>
    %8 = tpu.matmul %3, %5, %cst_6 {dimension_numbers = #tpu.dot_dimension_numbers<[1], [1], [0], [0], [0, 0, 1, 0], [], []>} : vector<5x16xbf16>, vector<5x16xbf16>, vector<5x5xf32> -> vector<5x5xf32>
    %cst_7 = arith.constant dense<0xFF800000> : vector<5xf32>
    %9 = vector.multi_reduction <maximumf>, %8, %cst_7 [1] : vector<5x5xf32> to vector<5xf32>
    %10 = vector.shape_cast %9 : vector<5xf32> to vector<5x1xf32>
    %11 = vector.broadcast %10 : vector<5x1xf32> to vector<5x5xf32>
    %12 = arith.subf %8, %11 : vector<5x5xf32>
    %13 = math.exp %12 : vector<5x5xf32>
    %cst_8 = arith.constant dense<0.000000e+00> : vector<5xf32>
    %14 = vector.multi_reduction <add>, %13, %cst_8 [1] : vector<5x5xf32> to vector<5xf32>
    %15 = vector.shape_cast %14 : vector<5xf32> to vector<5x1xf32>
    %16 = tpu.reciprocal %15 {approx = true} : vector<5x1xf32> -> vector<5x1xf32>
    %17 = vector.broadcast %16 : vector<5x1xf32> to vector<5x5xf32>
    %18 = arith.mulf %13, %17 : vector<5x5xf32>
    %19 = arith.truncf %18 : vector<5x5xf32> to vector<5x5xbf16>
    %cst_9 = arith.constant dense<0.000000e+00> : vector<5x16xf32>
    %20 = tpu.matmul %19, %7, %cst_9 {dimension_numbers = #tpu.dot_dimension_numbers<[1], [0], [0], [1], [0, 0, 1, 1], [], []>} : vector<5x5xbf16>, vector<5x16xbf16>, vector<5x16xf32> -> vector<5x16xf32>
    %c0_10 = arith.constant 0 : index
    %c0_11 = arith.constant 0 : index
    %c16 = arith.constant 16 : index
    %21 = vector.load %arg1[%c0_10, %c0_11, %c16] : memref<1x5x96xbf16, #tpu.memory_space<vmem>>, vector<1x5x16xbf16>
    %22 = vector.shape_cast %21 : vector<1x5x16xbf16> to vector<5x16xbf16>
    %cst_12 = arith.constant 2.500000e-01 : bf16
    %23 = vector.broadcast %cst_12 : bf16 to vector<5x16xbf16>
    %24 = arith.mulf %22, %23 : vector<5x16xbf16>
    %c0_13 = arith.constant 0 : index
    %c0_14 = arith.constant 0 : index
    %c48 = arith.constant 48 : index
    %25 = vector.load %arg1[%c0_13, %c0_14, %c48] : memref<1x5x96xbf16, #tpu.memory_space<vmem>>, vector<1x5x16xbf16>
    %26 = vector.shape_cast %25 : vector<1x5x16xbf16> to vector<5x16xbf16>
    %c0_15 = arith.constant 0 : index
    %c0_16 = arith.constant 0 : index
    %c80 = arith.constant 80 : index
    %27 = vector.load %arg1[%c0_15, %c0_16, %c80] : memref<1x5x96xbf16, #tpu.memory_space<vmem>>, vector<1x5x16xbf16>
    %28 = vector.shape_cast %27 : vector<1x5x16xbf16> to vector<5x16xbf16>
    %cst_17 = arith.constant dense<0.000000e+00> : vector<5x5xf32>
    %29 = tpu.matmul %24, %26, %cst_17 {dimension_numbers = #tpu.dot_dimension_numbers<[1], [1], [0], [0], [0, 0, 1, 0], [], []>} : vector<5x16xbf16>, vector<5x16xbf16>, vector<5x5xf32> -> vector<5x5xf32>
    %cst_18 = arith.constant dense<0xFF800000> : vector<5xf32>
    %30 = vector.multi_reduction <maximumf>, %29, %cst_18 [1] : vector<5x5xf32> to vector<5xf32>
    %31 = vector.shape_cast %30 : vector<5xf32> to vector<5x1xf32>
    %32 = vector.broadcast %31 : vector<5x1xf32> to vector<5x5xf32>
    %33 = arith.subf %29, %32 : vector<5x5xf32>
    %34 = math.exp %33 : vector<5x5xf32>
    %cst_19 = arith.constant dense<0.000000e+00> : vector<5xf32>
    %35 = vector.multi_reduction <add>, %34, %cst_19 [1] : vector<5x5xf32> to vector<5xf32>
    %36 = vector.shape_cast %35 : vector<5xf32> to vector<5x1xf32>
    %37 = tpu.reciprocal %36 {approx = true} : vector<5x1xf32> -> vector<5x1xf32>
    %38 = vector.broadcast %37 : vector<5x1xf32> to vector<5x5xf32>
    %39 = arith.mulf %34, %38 : vector<5x5xf32>
    %40 = arith.truncf %39 : vector<5x5xf32> to vector<5x5xbf16>
    %cst_20 = arith.constant dense<0.000000e+00> : vector<5x16xf32>
    %41 = tpu.matmul %40, %28, %cst_20 {dimension_numbers = #tpu.dot_dimension_numbers<[1], [0], [0], [1], [0, 0, 1, 1], [], []>} : vector<5x5xbf16>, vector<5x16xbf16>, vector<5x16xf32> -> vector<5x16xf32>
    %42 = tpu.concatenate %20, %41 in 1 : vector<5x16xf32>, vector<5x16xf32> -> vector<5x32xf32>
    %43 = arith.truncf %42 : vector<5x32xf32> to vector<5x32xbf16>
    %c0_21 = arith.constant 0 : index
    %c0_22 = arith.constant 0 : index
    %c0_23 = arith.constant 0 : index
    %44 = vector.load %arg2[%c0_21, %c0_22, %c0_23] : memref<1x5x32xbf16, #tpu.memory_space<vmem>>, vector<1x5x32xbf16>
    %45 = vector.shape_cast %44 : vector<1x5x32xbf16> to vector<5x32xbf16>
    %46 = vector.shape_cast %43 : vector<5x32xbf16> to vector<1x5x32xbf16>
    tpu.vector_store %arg2[%c0_21, %c0_22, %c0_23], %46 {strides = array<i32>} : memref<1x5x32xbf16, #tpu.memory_space<vmem>>, vector<1x5x32xbf16>,
    return
  }
  func.func @transform_0(%arg0: i32) -> (i32, i32, i32) {
    %c0_i32 = arith.constant 0 : i32
    %c0_i32_0 = arith.constant 0 : i32
    %c0_i32_1 = arith.constant 0 : i32
    return %arg0, %c0_i32, %c0_i32_0 : i32, i32, i32
  }
  func.func @transform_1(%arg0: i32) -> (i32, i32, i32) {
    %c0_i32 = arith.constant 0 : i32
    %c0_i32_0 = arith.constant 0 : i32
    %c0_i32_1 = arith.constant 0 : i32
    return %arg0, %c0_i32, %c0_i32_0 : i32, i32, i32
  }
}

module attributes {stable_mosaic.version = 11 : i64} {
  func.func @_matmul_kernel(%arg0: i32, %arg1: memref<16x32xbf16, #tpu.memory_space<vmem>>, %arg2: memref<32x32xbf16, #tpu.memory_space<vmem>>, %arg3: memref<1x32xf32, #tpu.memory_space<vmem>>, %arg4: memref<16x32xbf16, #tpu.memory_space<vmem>>, %arg5: memref<16x32xbf16, #tpu.memory_space<vmem>>) attributes {dimension_semantics = [#tpu.dimension_semantics<parallel>], iteration_bounds = array<i64: 1>, scalar_prefetch = 0 : i64, scratch_operands = 0 : i64, tpu.core_type = #tpu.core_type<tc>, window_params = [{transform_indices = @transform_0, window_bounds = array<i64: 16, 32>}, {pipeline_mode = #tpu.pipeline_mode<synchronous>, transform_indices = @transform_1, window_bounds = array<i64: 32, 32>}, {pipeline_mode = #tpu.pipeline_mode<synchronous>, transform_indices = @transform_2, window_bounds = array<i64: 1, 32>}, {transform_indices = @transform_3, window_bounds = array<i64: 16, 32>}, {transform_indices = @transform_4, window_bounds = array<i64: 16, 32>}]} {
    %c0 = arith.constant 0 : index
    %c0_0 = arith.constant 0 : index
    %0 = vector.load %arg1[%c0, %c0_0] : memref<16x32xbf16, #tpu.memory_space<vmem>>, vector<16x32xbf16>
    %c0_1 = arith.constant 0 : index
    %c0_2 = arith.constant 0 : index
    %1 = vector.load %arg2[%c0_1, %c0_2] : memref<32x32xbf16, #tpu.memory_space<vmem>>, vector<32x32xbf16>
    %cst = arith.constant dense<0.000000e+00> : vector<16x32xf32>
    %2 = tpu.matmul %0, %1, %cst {dimension_numbers = #tpu.dot_dimension_numbers<[1], [0], [0], [1], [0, 0, 1, 1], [], []>} : vector<16x32xbf16>, vector<32x32xbf16>, vector<16x32xf32> -> vector<16x32xf32>
    %c0_3 = arith.constant 0 : index
    %c0_4 = arith.constant 0 : index
    %3 = vector.load %arg3[%c0_3, %c0_4] : memref<1x32xf32, #tpu.memory_space<vmem>>, vector<1x32xf32>
    %4 = vector.broadcast %3 : vector<1x32xf32> to vector<16x32xf32>
    %5 = arith.addf %2, %4 : vector<16x32xf32>
    %c0_5 = arith.constant 0 : index
    %c0_6 = arith.constant 0 : index
    %6 = vector.load %arg4[%c0_5, %c0_6] : memref<16x32xbf16, #tpu.memory_space<vmem>>, vector<16x32xbf16>
    %7 = arith.extf %6 : vector<16x32xbf16> to vector<16x32xf32>
    %8 = arith.addf %5, %7 : vector<16x32xf32>
    %9 = arith.truncf %8 : vector<16x32xf32> to vector<16x32xbf16>
    %c0_7 = arith.constant 0 : index
    %c0_8 = arith.constant 0 : index
    %10 = vector.load %arg5[%c0_7, %c0_8] : memref<16x32xbf16, #tpu.memory_space<vmem>>, vector<16x32xbf16>
    tpu.vector_store %arg5[%c0_7, %c0_8], %9 {strides = array<i32>} : memref<16x32xbf16, #tpu.memory_space<vmem>>, vector<16x32xbf16>,
    return
  }
  func.func @transform_0(%arg0: i32) -> (i32, i32) {
    %c0_i32 = arith.constant 0 : i32
    %c0_i32_0 = arith.constant 0 : i32
    return %arg0, %c0_i32 : i32, i32
  }
  func.func @transform_1(%arg0: i32) -> (i32, i32) {
    %c0_i32 = arith.constant 0 : i32
    %c0_i32_0 = arith.constant 0 : i32
    %c0_i32_1 = arith.constant 0 : i32
    return %c0_i32, %c0_i32_0 : i32, i32
  }
  func.func @transform_2(%arg0: i32) -> (i32, i32) {
    %c0_i32 = arith.constant 0 : i32
    %c0_i32_0 = arith.constant 0 : i32
    %c0_i32_1 = arith.constant 0 : i32
    return %c0_i32, %c0_i32_0 : i32, i32
  }
  func.func @transform_3(%arg0: i32) -> (i32, i32) {
    %c0_i32 = arith.constant 0 : i32
    %c0_i32_0 = arith.constant 0 : i32
    return %arg0, %c0_i32 : i32, i32
  }
  func.func @transform_4(%arg0: i32) -> (i32, i32) {
    %c0_i32 = arith.constant 0 : i32
    %c0_i32_0 = arith.constant 0 : i32
    return %arg0, %c0_i32 : i32, i32
  }
}

module attributes {stable_mosaic.version = 11 : i64} {
  func.func @_ln_matmul_kernel(%arg0: i32, %arg1: memref<16x32xbf16, #tpu.memory_space<vmem>>, %arg2: memref<1x32xf32, #tpu.memory_space<vmem>>, %arg3: memref<1x32xf32, #tpu.memory_space<vmem>>, %arg4: memref<32x64xbf16, #tpu.memory_space<vmem>>, %arg5: memref<1x64xf32, #tpu.memory_space<vmem>>, %arg6: memref<16x64xbf16, #tpu.memory_space<vmem>>) attributes {dimension_semantics = [#tpu.dimension_semantics<parallel>], iteration_bounds = array<i64: 1>, scalar_prefetch = 0 : i64, scratch_operands = 0 : i64, tpu.core_type = #tpu.core_type<tc>, window_params = [{transform_indices = @transform_0, window_bounds = array<i64: 16, 32>}, {pipeline_mode = #tpu.pipeline_mode<synchronous>, transform_indices = @transform_1, window_bounds = array<i64: 1, 32>}, {pipeline_mode = #tpu.pipeline_mode<synchronous>, transform_indices = @transform_2, window_bounds = array<i64: 1, 32>}, {pipeline_mode = #tpu.pipeline_mode<synchronous>, transform_indices = @transform_3, window_bounds = array<i64: 32, 64>}, {pipeline_mode = #tpu.pipeline_mode<synchronous>, transform_indices = @transform_4, window_bounds = array<i64: 1, 64>}, {transform_indices = @transform_5, window_bounds = array<i64: 16, 64>}]} {
    %c0 = arith.constant 0 : index
    %c0_0 = arith.constant 0 : index
    %0 = vector.load %arg1[%c0, %c0_0] : memref<16x32xbf16, #tpu.memory_space<vmem>>, vector<16x32xbf16>
    %1 = arith.extf %0 : vector<16x32xbf16> to vector<16x32xf32>
    %cst = arith.constant dense<0.000000e+00> : vector<16xf32>
    %2 = vector.multi_reduction <add>, %1, %cst [1] : vector<16x32xf32> to vector<16xf32>
    %3 = vector.shape_cast %2 : vector<16xf32> to vector<16x1xf32>
    %cst_1 = arith.constant 3.200000e+01 : f32
    %4 = vector.broadcast %cst_1 : f32 to vector<16x1xf32>
    %5 = arith.divf %3, %4 : vector<16x1xf32>
    %6 = vector.broadcast %5 : vector<16x1xf32> to vector<16x32xf32>
    %7 = arith.subf %1, %6 : vector<16x32xf32>
    %8 = arith.mulf %7, %7 : vector<16x32xf32>
    %cst_2 = arith.constant dense<0.000000e+00> : vector<16xf32>
    %9 = vector.multi_reduction <add>, %8, %cst_2 [1] : vector<16x32xf32> to vector<16xf32>
    %10 = vector.shape_cast %9 : vector<16xf32> to vector<16x1xf32>
    %cst_3 = arith.constant 3.200000e+01 : f32
    %11 = vector.broadcast %cst_3 : f32 to vector<16x1xf32>
    %12 = arith.divf %10, %11 : vector<16x1xf32>
    %13 = vector.broadcast %5 : vector<16x1xf32> to vector<16x32xf32>
    %14 = arith.subf %1, %13 : vector<16x32xf32>
    %cst_4 = arith.constant 9.99999974E-6 : f32
    %15 = vector.broadcast %cst_4 : f32 to vector<16x1xf32>
    %16 = arith.addf %12, %15 : vector<16x1xf32>
    %17 = math.rsqrt %16 : vector<16x1xf32>
    %18 = vector.broadcast %17 : vector<16x1xf32> to vector<16x32xf32>
    %19 = arith.mulf %14, %18 : vector<16x32xf32>
    %c0_5 = arith.constant 0 : index
    %c0_6 = arith.constant 0 : index
    %20 = vector.load %arg2[%c0_5, %c0_6] : memref<1x32xf32, #tpu.memory_space<vmem>>, vector<1x32xf32>
    %21 = vector.broadcast %20 : vector<1x32xf32> to vector<16x32xf32>
    %22 = arith.mulf %19, %21 : vector<16x32xf32>
    %c0_7 = arith.constant 0 : index
    %c0_8 = arith.constant 0 : index
    %23 = vector.load %arg3[%c0_7, %c0_8] : memref<1x32xf32, #tpu.memory_space<vmem>>, vector<1x32xf32>
    %24 = vector.broadcast %23 : vector<1x32xf32> to vector<16x32xf32>
    %25 = arith.addf %22, %24 : vector<16x32xf32>
    %26 = arith.truncf %25 : vector<16x32xf32> to vector<16x32xbf16>
    %c0_9 = arith.constant 0 : index
    %c0_10 = arith.constant 0 : index
    %27 = vector.load %arg4[%c0_9, %c0_10] : memref<32x64xbf16, #tpu.memory_space<vmem>>, vector<32x64xbf16>
    %cst_11 = arith.constant dense<0.000000e+00> : vector<16x64xf32>
    %28 = tpu.matmul %26, %27, %cst_11 {dimension_numbers = #tpu.dot_dimension_numbers<[1], [0], [0], [1], [0, 0, 1, 1], [], []>} : vector<16x32xbf16>, vector<32x64xbf16>, vector<16x64xf32> -> vector<16x64xf32>
    %c0_12 = arith.constant 0 : index
    %c0_13 = arith.constant 0 : index
    %29 = vector.load %arg5[%c0_12, %c0_13] : memref<1x64xf32, #tpu.memory_space<vmem>>, vector<1x64xf32>
    %30 = vector.broadcast %29 : vector<1x64xf32> to vector<16x64xf32>
    %31 = arith.addf %28, %30 : vector<16x64xf32>
    %cst_14 = arith.constant 1.702000e+00 : f32
    %32 = vector.broadcast %cst_14 : f32 to vector<16x64xf32>
    %33 = arith.mulf %32, %31 : vector<16x64xf32>
    %34 = arith.negf %33 : vector<16x64xf32>
    %35 = math.exp %34 : vector<16x64xf32>
    %cst_15 = arith.constant 1.000000e+00 : f32
    %36 = vector.broadcast %cst_15 : f32 to vector<16x64xf32>
    %37 = arith.addf %36, %35 : vector<16x64xf32>
    %38 = arith.divf %36, %37 : vector<16x64xf32>
    %39 = arith.mulf %31, %38 : vector<16x64xf32>
    %40 = arith.truncf %39 : vector<16x64xf32> to vector<16x64xbf16>
    %c0_16 = arith.constant 0 : index
    %c0_17 = arith.constant 0 : index
    %41 = vector.load %arg6[%c0_16, %c0_17] : memref<16x64xbf16, #tpu.memory_space<vmem>>, vector<16x64xbf16>
    tpu.vector_store %arg6[%c0_16, %c0_17], %40 {strides = array<i32>} : memref<16x64xbf16, #tpu.memory_space<vmem>>, vector<16x64xbf16>,
    return
  }
  func.func @transform_0(%arg0: i32) -> (i32, i32) {
    %c0_i32 = arith.constant 0 : i32
    %c0_i32_0 = arith.constant 0 : i32
    return %arg0, %c0_i32 : i32, i32
  }
  func.func @transform_1(%arg0: i32) -> (i32, i32) {
    %c0_i32 = arith.constant 0 : i32
    %c0_i32_0 = arith.constant 0 : i32
    %c0_i32_1 = arith.constant 0 : i32
    return %c0_i32, %c0_i32_0 : i32, i32
  }
  func.func @transform_2(%arg0: i32) -> (i32, i32) {
    %c0_i32 = arith.constant 0 : i32
    %c0_i32_0 = arith.constant 0 : i32
    %c0_i32_1 = arith.constant 0 : i32
    return %c0_i32, %c0_i32_0 : i32, i32
  }
  func.func @transform_3(%arg0: i32) -> (i32, i32) {
    %c0_i32 = arith.constant 0 : i32
    %c0_i32_0 = arith.constant 0 : i32
    %c0_i32_1 = arith.constant 0 : i32
    return %c0_i32, %c0_i32_0 : i32, i32
  }
  func.func @transform_4(%arg0: i32) -> (i32, i32) {
    %c0_i32 = arith.constant 0 : i32
    %c0_i32_0 = arith.constant 0 : i32
    %c0_i32_1 = arith.constant 0 : i32
    return %c0_i32, %c0_i32_0 : i32, i32
  }
  func.func @transform_5(%arg0: i32) -> (i32, i32) {
    %c0_i32 = arith.constant 0 : i32
    %c0_i32_0 = arith.constant 0 : i32
    return %arg0, %c0_i32 : i32, i32
  }
}

module attributes {stable_mosaic.version = 11 : i64} {
  func.func @_matmul_kernel(%arg0: i32, %arg1: memref<16x64xbf16, #tpu.memory_space<vmem>>, %arg2: memref<64x32xbf16, #tpu.memory_space<vmem>>, %arg3: memref<1x32xf32, #tpu.memory_space<vmem>>, %arg4: memref<16x32xbf16, #tpu.memory_space<vmem>>, %arg5: memref<16x32xbf16, #tpu.memory_space<vmem>>) attributes {dimension_semantics = [#tpu.dimension_semantics<parallel>], iteration_bounds = array<i64: 1>, scalar_prefetch = 0 : i64, scratch_operands = 0 : i64, tpu.core_type = #tpu.core_type<tc>, window_params = [{transform_indices = @transform_0, window_bounds = array<i64: 16, 64>}, {pipeline_mode = #tpu.pipeline_mode<synchronous>, transform_indices = @transform_1, window_bounds = array<i64: 64, 32>}, {pipeline_mode = #tpu.pipeline_mode<synchronous>, transform_indices = @transform_2, window_bounds = array<i64: 1, 32>}, {transform_indices = @transform_3, window_bounds = array<i64: 16, 32>}, {transform_indices = @transform_4, window_bounds = array<i64: 16, 32>}]} {
    %c0 = arith.constant 0 : index
    %c0_0 = arith.constant 0 : index
    %0 = vector.load %arg1[%c0, %c0_0] : memref<16x64xbf16, #tpu.memory_space<vmem>>, vector<16x64xbf16>
    %c0_1 = arith.constant 0 : index
    %c0_2 = arith.constant 0 : index
    %1 = vector.load %arg2[%c0_1, %c0_2] : memref<64x32xbf16, #tpu.memory_space<vmem>>, vector<64x32xbf16>
    %cst = arith.constant dense<0.000000e+00> : vector<16x32xf32>
    %2 = tpu.matmul %0, %1, %cst {dimension_numbers = #tpu.dot_dimension_numbers<[1], [0], [0], [1], [0, 0, 1, 1], [], []>} : vector<16x64xbf16>, vector<64x32xbf16>, vector<16x32xf32> -> vector<16x32xf32>
    %c0_3 = arith.constant 0 : index
    %c0_4 = arith.constant 0 : index
    %3 = vector.load %arg3[%c0_3, %c0_4] : memref<1x32xf32, #tpu.memory_space<vmem>>, vector<1x32xf32>
    %4 = vector.broadcast %3 : vector<1x32xf32> to vector<16x32xf32>
    %5 = arith.addf %2, %4 : vector<16x32xf32>
    %c0_5 = arith.constant 0 : index
    %c0_6 = arith.constant 0 : index
    %6 = vector.load %arg4[%c0_5, %c0_6] : memref<16x32xbf16, #tpu.memory_space<vmem>>, vector<16x32xbf16>
    %7 = arith.extf %6 : vector<16x32xbf16> to vector<16x32xf32>
    %8 = arith.addf %5, %7 : vector<16x32xf32>
    %9 = arith.truncf %8 : vector<16x32xf32> to vector<16x32xbf16>
    %c0_7 = arith.constant 0 : index
    %c0_8 = arith.constant 0 : index
    %10 = vector.load %arg5[%c0_7, %c0_8] : memref<16x32xbf16, #tpu.memory_space<vmem>>, vector<16x32xbf16>
    tpu.vector_store %arg5[%c0_7, %c0_8], %9 {strides = array<i32>} : memref<16x32xbf16, #tpu.memory_space<vmem>>, vector<16x32xbf16>,
    return
  }
  func.func @transform_0(%arg0: i32) -> (i32, i32) {
    %c0_i32 = arith.constant 0 : i32
    %c0_i32_0 = arith.constant 0 : i32
    return %arg0, %c0_i32 : i32, i32
  }
  func.func @transform_1(%arg0: i32) -> (i32, i32) {
    %c0_i32 = arith.constant 0 : i32
    %c0_i32_0 = arith.constant 0 : i32
    %c0_i32_1 = arith.constant 0 : i32
    return %c0_i32, %c0_i32_0 : i32, i32
  }
  func.func @transform_2(%arg0: i32) -> (i32, i32) {
    %c0_i32 = arith.constant 0 : i32
    %c0_i32_0 = arith.constant 0 : i32
    %c0_i32_1 = arith.constant 0 : i32
    return %c0_i32, %c0_i32_0 : i32, i32
  }
  func.func @transform_3(%arg0: i32) -> (i32, i32) {
    %c0_i32 = arith.constant 0 : i32
    %c0_i32_0 = arith.constant 0 : i32
    return %arg0, %c0_i32 : i32, i32
  }
  func.func @transform_4(%arg0: i32) -> (i32, i32) {
    %c0_i32 = arith.constant 0 : i32
    %c0_i32_0 = arith.constant 0 : i32
    return %arg0, %c0_i32 : i32, i32
  }
}

module attributes {stable_mosaic.version = 11 : i64} {
  func.func @_ln_matmul_kernel(%arg0: i32, %arg1: memref<8x32xbf16, #tpu.memory_space<vmem>>, %arg2: memref<1x32xf32, #tpu.memory_space<vmem>>, %arg3: memref<1x32xf32, #tpu.memory_space<vmem>>, %arg4: memref<32x16xbf16, #tpu.memory_space<vmem>>, %arg5: memref<1x16xf32, #tpu.memory_space<vmem>>, %arg6: memref<8x16xf32, #tpu.memory_space<vmem>>) attributes {dimension_semantics = [#tpu.dimension_semantics<parallel>], iteration_bounds = array<i64: 1>, scalar_prefetch = 0 : i64, scratch_operands = 0 : i64, tpu.core_type = #tpu.core_type<tc>, window_params = [{transform_indices = @transform_0, window_bounds = array<i64: 8, 32>}, {pipeline_mode = #tpu.pipeline_mode<synchronous>, transform_indices = @transform_1, window_bounds = array<i64: 1, 32>}, {pipeline_mode = #tpu.pipeline_mode<synchronous>, transform_indices = @transform_2, window_bounds = array<i64: 1, 32>}, {pipeline_mode = #tpu.pipeline_mode<synchronous>, transform_indices = @transform_3, window_bounds = array<i64: 32, 16>}, {pipeline_mode = #tpu.pipeline_mode<synchronous>, transform_indices = @transform_4, window_bounds = array<i64: 1, 16>}, {transform_indices = @transform_5, window_bounds = array<i64: 8, 16>}]} {
    %c0 = arith.constant 0 : index
    %c0_0 = arith.constant 0 : index
    %0 = vector.load %arg1[%c0, %c0_0] : memref<8x32xbf16, #tpu.memory_space<vmem>>, vector<8x32xbf16>
    %1 = arith.extf %0 : vector<8x32xbf16> to vector<8x32xf32>
    %cst = arith.constant dense<0.000000e+00> : vector<8xf32>
    %2 = vector.multi_reduction <add>, %1, %cst [1] : vector<8x32xf32> to vector<8xf32>
    %3 = vector.shape_cast %2 : vector<8xf32> to vector<8x1xf32>
    %cst_1 = arith.constant 3.200000e+01 : f32
    %4 = vector.broadcast %cst_1 : f32 to vector<8x1xf32>
    %5 = arith.divf %3, %4 : vector<8x1xf32>
    %6 = vector.broadcast %5 : vector<8x1xf32> to vector<8x32xf32>
    %7 = arith.subf %1, %6 : vector<8x32xf32>
    %8 = arith.mulf %7, %7 : vector<8x32xf32>
    %cst_2 = arith.constant dense<0.000000e+00> : vector<8xf32>
    %9 = vector.multi_reduction <add>, %8, %cst_2 [1] : vector<8x32xf32> to vector<8xf32>
    %10 = vector.shape_cast %9 : vector<8xf32> to vector<8x1xf32>
    %cst_3 = arith.constant 3.200000e+01 : f32
    %11 = vector.broadcast %cst_3 : f32 to vector<8x1xf32>
    %12 = arith.divf %10, %11 : vector<8x1xf32>
    %13 = vector.broadcast %5 : vector<8x1xf32> to vector<8x32xf32>
    %14 = arith.subf %1, %13 : vector<8x32xf32>
    %cst_4 = arith.constant 9.99999974E-6 : f32
    %15 = vector.broadcast %cst_4 : f32 to vector<8x1xf32>
    %16 = arith.addf %12, %15 : vector<8x1xf32>
    %17 = math.rsqrt %16 : vector<8x1xf32>
    %18 = vector.broadcast %17 : vector<8x1xf32> to vector<8x32xf32>
    %19 = arith.mulf %14, %18 : vector<8x32xf32>
    %c0_5 = arith.constant 0 : index
    %c0_6 = arith.constant 0 : index
    %20 = vector.load %arg2[%c0_5, %c0_6] : memref<1x32xf32, #tpu.memory_space<vmem>>, vector<1x32xf32>
    %21 = vector.broadcast %20 : vector<1x32xf32> to vector<8x32xf32>
    %22 = arith.mulf %19, %21 : vector<8x32xf32>
    %c0_7 = arith.constant 0 : index
    %c0_8 = arith.constant 0 : index
    %23 = vector.load %arg3[%c0_7, %c0_8] : memref<1x32xf32, #tpu.memory_space<vmem>>, vector<1x32xf32>
    %24 = vector.broadcast %23 : vector<1x32xf32> to vector<8x32xf32>
    %25 = arith.addf %22, %24 : vector<8x32xf32>
    %26 = arith.truncf %25 : vector<8x32xf32> to vector<8x32xbf16>
    %c0_9 = arith.constant 0 : index
    %c0_10 = arith.constant 0 : index
    %27 = vector.load %arg4[%c0_9, %c0_10] : memref<32x16xbf16, #tpu.memory_space<vmem>>, vector<32x16xbf16>
    %cst_11 = arith.constant dense<0.000000e+00> : vector<8x16xf32>
    %28 = tpu.matmul %26, %27, %cst_11 {dimension_numbers = #tpu.dot_dimension_numbers<[1], [0], [0], [1], [0, 0, 1, 1], [], []>} : vector<8x32xbf16>, vector<32x16xbf16>, vector<8x16xf32> -> vector<8x16xf32>
    %c0_12 = arith.constant 0 : index
    %c0_13 = arith.constant 0 : index
    %29 = vector.load %arg5[%c0_12, %c0_13] : memref<1x16xf32, #tpu.memory_space<vmem>>, vector<1x16xf32>
    %30 = vector.broadcast %29 : vector<1x16xf32> to vector<8x16xf32>
    %31 = arith.addf %28, %30 : vector<8x16xf32>
    %c0_14 = arith.constant 0 : index
    %c0_15 = arith.constant 0 : index
    %32 = vector.load %arg6[%c0_14, %c0_15] : memref<8x16xf32, #tpu.memory_space<vmem>>, vector<8x16xf32>
    tpu.vector_store %arg6[%c0_14, %c0_15], %31 {strides = array<i32>} : memref<8x16xf32, #tpu.memory_space<vmem>>, vector<8x16xf32>,
    return
  }
  func.func @transform_0(%arg0: i32) -> (i32, i32) {
    %c0_i32 = arith.constant 0 : i32
    %c0_i32_0 = arith.constant 0 : i32
    return %arg0, %c0_i32 : i32, i32
  }
  func.func @transform_1(%arg0: i32) -> (i32, i32) {
    %c0_i32 = arith.constant 0 : i32
    %c0_i32_0 = arith.constant 0 : i32
    %c0_i32_1 = arith.constant 0 : i32
    return %c0_i32, %c0_i32_0 : i32, i32
  }
  func.func @transform_2(%arg0: i32) -> (i32, i32) {
    %c0_i32 = arith.constant 0 : i32
    %c0_i32_0 = arith.constant 0 : i32
    %c0_i32_1 = arith.constant 0 : i32
    return %c0_i32, %c0_i32_0 : i32, i32
  }
  func.func @transform_3(%arg0: i32) -> (i32, i32) {
    %c0_i32 = arith.constant 0 : i32
    %c0_i32_0 = arith.constant 0 : i32
    %c0_i32_1 = arith.constant 0 : i32
    return %c0_i32, %c0_i32_0 : i32, i32
  }
  func.func @transform_4(%arg0: i32) -> (i32, i32) {
    %c0_i32 = arith.constant 0 : i32
    %c0_i32_0 = arith.constant 0 : i32
    %c0_i32_1 = arith.constant 0 : i32
    return %c0_i32, %c0_i32_0 : i32, i32
  }
  func.func @transform_5(%arg0: i32) -> (i32, i32) {
    %c0_i32 = arith.constant 0 : i32
    %c0_i32_0 = arith.constant 0 : i32
    return %arg0, %c0_i32 : i32, i32
  }
}

module attributes {stable_mosaic.version = 11 : i64} {
  func.func @_ln_matmul_kernel(%arg0: i32, %arg1: memref<16x32xbf16, #tpu.memory_space<vmem>>, %arg2: memref<1x32xf32, #tpu.memory_space<vmem>>, %arg3: memref<1x32xf32, #tpu.memory_space<vmem>>, %arg4: memref<32x96xbf16, #tpu.memory_space<vmem>>, %arg5: memref<1x96xf32, #tpu.memory_space<vmem>>, %arg6: memref<16x96xbf16, #tpu.memory_space<vmem>>) attributes {dimension_semantics = [#tpu.dimension_semantics<parallel>], iteration_bounds = array<i64: 1>, scalar_prefetch = 0 : i64, scratch_operands = 0 : i64, tpu.core_type = #tpu.core_type<tc>, window_params = [{transform_indices = @transform_0, window_bounds = array<i64: 16, 32>}, {pipeline_mode = #tpu.pipeline_mode<synchronous>, transform_indices = @transform_1, window_bounds = array<i64: 1, 32>}, {pipeline_mode = #tpu.pipeline_mode<synchronous>, transform_indices = @transform_2, window_bounds = array<i64: 1, 32>}, {pipeline_mode = #tpu.pipeline_mode<synchronous>, transform_indices = @transform_3, window_bounds = array<i64: 32, 96>}, {pipeline_mode = #tpu.pipeline_mode<synchronous>, transform_indices = @transform_4, window_bounds = array<i64: 1, 96>}, {transform_indices = @transform_5, window_bounds = array<i64: 16, 96>}]} {
    %c0 = arith.constant 0 : index
    %c0_0 = arith.constant 0 : index
    %0 = vector.load %arg1[%c0, %c0_0] : memref<16x32xbf16, #tpu.memory_space<vmem>>, vector<16x32xbf16>
    %1 = arith.extf %0 : vector<16x32xbf16> to vector<16x32xf32>
    %cst = arith.constant dense<0.000000e+00> : vector<16xf32>
    %2 = vector.multi_reduction <add>, %1, %cst [1] : vector<16x32xf32> to vector<16xf32>
    %3 = vector.shape_cast %2 : vector<16xf32> to vector<16x1xf32>
    %cst_1 = arith.constant 3.200000e+01 : f32
    %4 = vector.broadcast %cst_1 : f32 to vector<16x1xf32>
    %5 = arith.divf %3, %4 : vector<16x1xf32>
    %6 = vector.broadcast %5 : vector<16x1xf32> to vector<16x32xf32>
    %7 = arith.subf %1, %6 : vector<16x32xf32>
    %8 = arith.mulf %7, %7 : vector<16x32xf32>
    %cst_2 = arith.constant dense<0.000000e+00> : vector<16xf32>
    %9 = vector.multi_reduction <add>, %8, %cst_2 [1] : vector<16x32xf32> to vector<16xf32>
    %10 = vector.shape_cast %9 : vector<16xf32> to vector<16x1xf32>
    %cst_3 = arith.constant 3.200000e+01 : f32
    %11 = vector.broadcast %cst_3 : f32 to vector<16x1xf32>
    %12 = arith.divf %10, %11 : vector<16x1xf32>
    %13 = vector.broadcast %5 : vector<16x1xf32> to vector<16x32xf32>
    %14 = arith.subf %1, %13 : vector<16x32xf32>
    %cst_4 = arith.constant 9.99999974E-6 : f32
    %15 = vector.broadcast %cst_4 : f32 to vector<16x1xf32>
    %16 = arith.addf %12, %15 : vector<16x1xf32>
    %17 = math.rsqrt %16 : vector<16x1xf32>
    %18 = vector.broadcast %17 : vector<16x1xf32> to vector<16x32xf32>
    %19 = arith.mulf %14, %18 : vector<16x32xf32>
    %c0_5 = arith.constant 0 : index
    %c0_6 = arith.constant 0 : index
    %20 = vector.load %arg2[%c0_5, %c0_6] : memref<1x32xf32, #tpu.memory_space<vmem>>, vector<1x32xf32>
    %21 = vector.broadcast %20 : vector<1x32xf32> to vector<16x32xf32>
    %22 = arith.mulf %19, %21 : vector<16x32xf32>
    %c0_7 = arith.constant 0 : index
    %c0_8 = arith.constant 0 : index
    %23 = vector.load %arg3[%c0_7, %c0_8] : memref<1x32xf32, #tpu.memory_space<vmem>>, vector<1x32xf32>
    %24 = vector.broadcast %23 : vector<1x32xf32> to vector<16x32xf32>
    %25 = arith.addf %22, %24 : vector<16x32xf32>
    %26 = arith.truncf %25 : vector<16x32xf32> to vector<16x32xbf16>
    %c0_9 = arith.constant 0 : index
    %c0_10 = arith.constant 0 : index
    %27 = vector.load %arg4[%c0_9, %c0_10] : memref<32x96xbf16, #tpu.memory_space<vmem>>, vector<32x96xbf16>
    %cst_11 = arith.constant dense<0.000000e+00> : vector<16x96xf32>
    %28 = tpu.matmul %26, %27, %cst_11 {dimension_numbers = #tpu.dot_dimension_numbers<[1], [0], [0], [1], [0, 0, 1, 1], [], []>} : vector<16x32xbf16>, vector<32x96xbf16>, vector<16x96xf32> -> vector<16x96xf32>
    %c0_12 = arith.constant 0 : index
    %c0_13 = arith.constant 0 : index
    %29 = vector.load %arg5[%c0_12, %c0_13] : memref<1x96xf32, #tpu.memory_space<vmem>>, vector<1x96xf32>
    %30 = vector.broadcast %29 : vector<1x96xf32> to vector<16x96xf32>
    %31 = arith.addf %28, %30 : vector<16x96xf32>
    %32 = arith.truncf %31 : vector<16x96xf32> to vector<16x96xbf16>
    %c0_14 = arith.constant 0 : index
    %c0_15 = arith.constant 0 : index
    %33 = vector.load %arg6[%c0_14, %c0_15] : memref<16x96xbf16, #tpu.memory_space<vmem>>, vector<16x96xbf16>
    tpu.vector_store %arg6[%c0_14, %c0_15], %32 {strides = array<i32>} : memref<16x96xbf16, #tpu.memory_space<vmem>>, vector<16x96xbf16>,
    return
  }
  func.func @transform_0(%arg0: i32) -> (i32, i32) {
    %c0_i32 = arith.constant 0 : i32
    %c0_i32_0 = arith.constant 0 : i32
    return %arg0, %c0_i32 : i32, i32
  }
  func.func @transform_1(%arg0: i32) -> (i32, i32) {
    %c0_i32 = arith.constant 0 : i32
    %c0_i32_0 = arith.constant 0 : i32
    %c0_i32_1 = arith.constant 0 : i32
    return %c0_i32, %c0_i32_0 : i32, i32
  }
  func.func @transform_2(%arg0: i32) -> (i32, i32) {
    %c0_i32 = arith.constant 0 : i32
    %c0_i32_0 = arith.constant 0 : i32
    %c0_i32_1 = arith.constant 0 : i32
    return %c0_i32, %c0_i32_0 : i32, i32
  }
  func.func @transform_3(%arg0: i32) -> (i32, i32) {
    %c0_i32 = arith.constant 0 : i32
    %c0_i32_0 = arith.constant 0 : i32
    %c0_i32_1 = arith.constant 0 : i32
    return %c0_i32, %c0_i32_0 : i32, i32
  }
  func.func @transform_4(%arg0: i32) -> (i32, i32) {
    %c0_i32 = arith.constant 0 : i32
    %c0_i32_0 = arith.constant 0 : i32
    %c0_i32_1 = arith.constant 0 : i32
    return %c0_i32, %c0_i32_0 : i32, i32
  }
  func.func @transform_5(%arg0: i32) -> (i32, i32) {
    %c0_i32 = arith.constant 0 : i32
    %c0_i32_0 = arith.constant 0 : i32
    return %arg0, %c0_i32 : i32, i32
  }
}

module attributes {stable_mosaic.version = 11 : i64} {
  func.func @_attention_kernel(%arg0: i32, %arg1: memref<1x8x96xbf16, #tpu.memory_space<vmem>>, %arg2: memref<1x1x8xf32, #tpu.memory_space<vmem>>, %arg3: memref<1x8x32xbf16, #tpu.memory_space<vmem>>) attributes {dimension_semantics = [#tpu.dimension_semantics<parallel>], iteration_bounds = array<i64: 2>, scalar_prefetch = 0 : i64, scratch_operands = 0 : i64, tpu.core_type = #tpu.core_type<tc>, window_params = [{transform_indices = @transform_0, window_bounds = array<i64: 1, 8, 96>}, {transform_indices = @transform_1, window_bounds = array<i64: 1, 1, 8>}, {transform_indices = @transform_2, window_bounds = array<i64: 1, 8, 32>}]} {
    %0 = tpu.iota {dimensions = array<i32: 0>} : vector<8x8xi32>
    %1 = tpu.iota {dimensions = array<i32: 1>} : vector<8x8xi32>
    %2 = arith.cmpi sgt, %1, %0 : vector<8x8xi32>
    %cst = arith.constant -1.000000e+09 : f32
    %cst_0 = arith.constant 0.000000e+00 : f32
    %3 = vector.broadcast %cst : f32 to vector<8x8xf32>
    %4 = vector.broadcast %cst_0 : f32 to vector<8x8xf32>
    %5 = arith.select %2, %3, %4 : vector<8x8xi1>, vector<8x8xf32>
    %c0 = arith.constant 0 : index
    %c0_1 = arith.constant 0 : index
    %c0_2 = arith.constant 0 : index
    %6 = vector.load %arg2[%c0, %c0_1, %c0_2] : memref<1x1x8xf32, #tpu.memory_space<vmem>>, vector<1x1x8xf32>
    %7 = vector.shape_cast %6 : vector<1x1x8xf32> to vector<1x8xf32>
    %cst_3 = arith.constant 1.000000e+00 : f32
    %8 = vector.broadcast %cst_3 : f32 to vector<1x8xf32>
    %9 = arith.subf %8, %7 : vector<1x8xf32>
    %cst_4 = arith.constant -1.000000e+09 : f32
    %10 = vector.broadcast %cst_4 : f32 to vector<1x8xf32>
    %11 = arith.mulf %9, %10 : vector<1x8xf32>
    %12 = vector.broadcast %11 : vector<1x8xf32> to vector<8x8xf32>
    %13 = arith.addf %5, %12 : vector<8x8xf32>
    %c0_5 = arith.constant 0 : index
    %c0_6 = arith.constant 0 : index
    %c0_7 = arith.constant 0 : index
    %14 = vector.load %arg1[%c0_5, %c0_6, %c0_7] : memref<1x8x96xbf16, #tpu.memory_space<vmem>>, vector<1x8x16xbf16>
    %15 = vector.shape_cast %14 : vector<1x8x16xbf16> to vector<8x16xbf16>
    %cst_8 = arith.constant 2.500000e-01 : bf16
    %16 = vector.broadcast %cst_8 : bf16 to vector<8x16xbf16>
    %17 = arith.mulf %15, %16 : vector<8x16xbf16>
    %c0_9 = arith.constant 0 : index
    %c0_10 = arith.constant 0 : index
    %c32 = arith.constant 32 : index
    %18 = vector.load %arg1[%c0_9, %c0_10, %c32] : memref<1x8x96xbf16, #tpu.memory_space<vmem>>, vector<1x8x16xbf16>
    %19 = vector.shape_cast %18 : vector<1x8x16xbf16> to vector<8x16xbf16>
    %c0_11 = arith.constant 0 : index
    %c0_12 = arith.constant 0 : index
    %c64 = arith.constant 64 : index
    %20 = vector.load %arg1[%c0_11, %c0_12, %c64] : memref<1x8x96xbf16, #tpu.memory_space<vmem>>, vector<1x8x16xbf16>
    %21 = vector.shape_cast %20 : vector<1x8x16xbf16> to vector<8x16xbf16>
    %cst_13 = arith.constant dense<0.000000e+00> : vector<8x8xf32>
    %22 = tpu.matmul %17, %19, %cst_13 {dimension_numbers = #tpu.dot_dimension_numbers<[1], [1], [0], [0], [0, 0, 1, 0], [], []>} : vector<8x16xbf16>, vector<8x16xbf16>, vector<8x8xf32> -> vector<8x8xf32>
    %23 = arith.addf %22, %13 : vector<8x8xf32>
    %cst_14 = arith.constant dense<0xFF800000> : vector<8xf32>
    %24 = vector.multi_reduction <maximumf>, %23, %cst_14 [1] : vector<8x8xf32> to vector<8xf32>
    %25 = vector.shape_cast %24 : vector<8xf32> to vector<8x1xf32>
    %26 = vector.broadcast %25 : vector<8x1xf32> to vector<8x8xf32>
    %27 = arith.subf %23, %26 : vector<8x8xf32>
    %28 = math.exp %27 : vector<8x8xf32>
    %cst_15 = arith.constant dense<0.000000e+00> : vector<8xf32>
    %29 = vector.multi_reduction <add>, %28, %cst_15 [1] : vector<8x8xf32> to vector<8xf32>
    %30 = vector.shape_cast %29 : vector<8xf32> to vector<8x1xf32>
    %31 = tpu.reciprocal %30 {approx = true} : vector<8x1xf32> -> vector<8x1xf32>
    %32 = vector.broadcast %31 : vector<8x1xf32> to vector<8x8xf32>
    %33 = arith.mulf %28, %32 : vector<8x8xf32>
    %34 = arith.truncf %33 : vector<8x8xf32> to vector<8x8xbf16>
    %cst_16 = arith.constant dense<0.000000e+00> : vector<8x16xf32>
    %35 = tpu.matmul %34, %21, %cst_16 {dimension_numbers = #tpu.dot_dimension_numbers<[1], [0], [0], [1], [0, 0, 1, 1], [], []>} : vector<8x8xbf16>, vector<8x16xbf16>, vector<8x16xf32> -> vector<8x16xf32>
    %c0_17 = arith.constant 0 : index
    %c0_18 = arith.constant 0 : index
    %c16 = arith.constant 16 : index
    %36 = vector.load %arg1[%c0_17, %c0_18, %c16] : memref<1x8x96xbf16, #tpu.memory_space<vmem>>, vector<1x8x16xbf16>
    %37 = vector.shape_cast %36 : vector<1x8x16xbf16> to vector<8x16xbf16>
    %cst_19 = arith.constant 2.500000e-01 : bf16
    %38 = vector.broadcast %cst_19 : bf16 to vector<8x16xbf16>
    %39 = arith.mulf %37, %38 : vector<8x16xbf16>
    %c0_20 = arith.constant 0 : index
    %c0_21 = arith.constant 0 : index
    %c48 = arith.constant 48 : index
    %40 = vector.load %arg1[%c0_20, %c0_21, %c48] : memref<1x8x96xbf16, #tpu.memory_space<vmem>>, vector<1x8x16xbf16>
    %41 = vector.shape_cast %40 : vector<1x8x16xbf16> to vector<8x16xbf16>
    %c0_22 = arith.constant 0 : index
    %c0_23 = arith.constant 0 : index
    %c80 = arith.constant 80 : index
    %42 = vector.load %arg1[%c0_22, %c0_23, %c80] : memref<1x8x96xbf16, #tpu.memory_space<vmem>>, vector<1x8x16xbf16>
    %43 = vector.shape_cast %42 : vector<1x8x16xbf16> to vector<8x16xbf16>
    %cst_24 = arith.constant dense<0.000000e+00> : vector<8x8xf32>
    %44 = tpu.matmul %39, %41, %cst_24 {dimension_numbers = #tpu.dot_dimension_numbers<[1], [1], [0], [0], [0, 0, 1, 0], [], []>} : vector<8x16xbf16>, vector<8x16xbf16>, vector<8x8xf32> -> vector<8x8xf32>
    %45 = arith.addf %44, %13 : vector<8x8xf32>
    %cst_25 = arith.constant dense<0xFF800000> : vector<8xf32>
    %46 = vector.multi_reduction <maximumf>, %45, %cst_25 [1] : vector<8x8xf32> to vector<8xf32>
    %47 = vector.shape_cast %46 : vector<8xf32> to vector<8x1xf32>
    %48 = vector.broadcast %47 : vector<8x1xf32> to vector<8x8xf32>
    %49 = arith.subf %45, %48 : vector<8x8xf32>
    %50 = math.exp %49 : vector<8x8xf32>
    %cst_26 = arith.constant dense<0.000000e+00> : vector<8xf32>
    %51 = vector.multi_reduction <add>, %50, %cst_26 [1] : vector<8x8xf32> to vector<8xf32>
    %52 = vector.shape_cast %51 : vector<8xf32> to vector<8x1xf32>
    %53 = tpu.reciprocal %52 {approx = true} : vector<8x1xf32> -> vector<8x1xf32>
    %54 = vector.broadcast %53 : vector<8x1xf32> to vector<8x8xf32>
    %55 = arith.mulf %50, %54 : vector<8x8xf32>
    %56 = arith.truncf %55 : vector<8x8xf32> to vector<8x8xbf16>
    %cst_27 = arith.constant dense<0.000000e+00> : vector<8x16xf32>
    %57 = tpu.matmul %56, %43, %cst_27 {dimension_numbers = #tpu.dot_dimension_numbers<[1], [0], [0], [1], [0, 0, 1, 1], [], []>} : vector<8x8xbf16>, vector<8x16xbf16>, vector<8x16xf32> -> vector<8x16xf32>
    %58 = tpu.concatenate %35, %57 in 1 : vector<8x16xf32>, vector<8x16xf32> -> vector<8x32xf32>
    %59 = arith.truncf %58 : vector<8x32xf32> to vector<8x32xbf16>
    %c0_28 = arith.constant 0 : index
    %c0_29 = arith.constant 0 : index
    %c0_30 = arith.constant 0 : index
    %60 = vector.load %arg3[%c0_28, %c0_29, %c0_30] : memref<1x8x32xbf16, #tpu.memory_space<vmem>>, vector<1x8x32xbf16>
    %61 = vector.shape_cast %60 : vector<1x8x32xbf16> to vector<8x32xbf16>
    %62 = vector.shape_cast %59 : vector<8x32xbf16> to vector<1x8x32xbf16>
    tpu.vector_store %arg3[%c0_28, %c0_29, %c0_30], %62 {strides = array<i32>} : memref<1x8x32xbf16, #tpu.memory_space<vmem>>, vector<1x8x32xbf16>,
    return
  }
  func.func @transform_0(%arg0: i32) -> (i32, i32, i32) {
    %c0_i32 = arith.constant 0 : i32
    %c0_i32_0 = arith.constant 0 : i32
    %c0_i32_1 = arith.constant 0 : i32
    return %arg0, %c0_i32, %c0_i32_0 : i32, i32, i32
  }
  func.func @transform_1(%arg0: i32) -> (i32, i32, i32) {
    %c0_i32 = arith.constant 0 : i32
    %c0_i32_0 = arith.constant 0 : i32
    %c0_i32_1 = arith.constant 0 : i32
    return %arg0, %c0_i32, %c0_i32_0 : i32, i32, i32
  }
  func.func @transform_2(%arg0: i32) -> (i32, i32, i32) {
    %c0_i32 = arith.constant 0 : i32
    %c0_i32_0 = arith.constant 0 : i32
    %c0_i32_1 = arith.constant 0 : i32
    return %arg0, %c0_i32, %c0_i32_0 : i32, i32, i32
  }
}

module attributes {stable_mosaic.version = 11 : i64} {
  func.func @_matmul_kernel(%arg0: i32, %arg1: memref<16x32xbf16, #tpu.memory_space<vmem>>, %arg2: memref<32x32xbf16, #tpu.memory_space<vmem>>, %arg3: memref<1x32xf32, #tpu.memory_space<vmem>>, %arg4: memref<16x32xbf16, #tpu.memory_space<vmem>>, %arg5: memref<16x32xbf16, #tpu.memory_space<vmem>>) attributes {dimension_semantics = [#tpu.dimension_semantics<parallel>], iteration_bounds = array<i64: 1>, scalar_prefetch = 0 : i64, scratch_operands = 0 : i64, tpu.core_type = #tpu.core_type<tc>, window_params = [{transform_indices = @transform_0, window_bounds = array<i64: 16, 32>}, {pipeline_mode = #tpu.pipeline_mode<synchronous>, transform_indices = @transform_1, window_bounds = array<i64: 32, 32>}, {pipeline_mode = #tpu.pipeline_mode<synchronous>, transform_indices = @transform_2, window_bounds = array<i64: 1, 32>}, {transform_indices = @transform_3, window_bounds = array<i64: 16, 32>}, {transform_indices = @transform_4, window_bounds = array<i64: 16, 32>}]} {
    %c0 = arith.constant 0 : index
    %c0_0 = arith.constant 0 : index
    %0 = vector.load %arg1[%c0, %c0_0] : memref<16x32xbf16, #tpu.memory_space<vmem>>, vector<16x32xbf16>
    %c0_1 = arith.constant 0 : index
    %c0_2 = arith.constant 0 : index
    %1 = vector.load %arg2[%c0_1, %c0_2] : memref<32x32xbf16, #tpu.memory_space<vmem>>, vector<32x32xbf16>
    %cst = arith.constant dense<0.000000e+00> : vector<16x32xf32>
    %2 = tpu.matmul %0, %1, %cst {dimension_numbers = #tpu.dot_dimension_numbers<[1], [0], [0], [1], [0, 0, 1, 1], [], []>} : vector<16x32xbf16>, vector<32x32xbf16>, vector<16x32xf32> -> vector<16x32xf32>
    %c0_3 = arith.constant 0 : index
    %c0_4 = arith.constant 0 : index
    %3 = vector.load %arg3[%c0_3, %c0_4] : memref<1x32xf32, #tpu.memory_space<vmem>>, vector<1x32xf32>
    %4 = vector.broadcast %3 : vector<1x32xf32> to vector<16x32xf32>
    %5 = arith.addf %2, %4 : vector<16x32xf32>
    %c0_5 = arith.constant 0 : index
    %c0_6 = arith.constant 0 : index
    %6 = vector.load %arg4[%c0_5, %c0_6] : memref<16x32xbf16, #tpu.memory_space<vmem>>, vector<16x32xbf16>
    %7 = arith.extf %6 : vector<16x32xbf16> to vector<16x32xf32>
    %8 = arith.addf %5, %7 : vector<16x32xf32>
    %9 = arith.truncf %8 : vector<16x32xf32> to vector<16x32xbf16>
    %c0_7 = arith.constant 0 : index
    %c0_8 = arith.constant 0 : index
    %10 = vector.load %arg5[%c0_7, %c0_8] : memref<16x32xbf16, #tpu.memory_space<vmem>>, vector<16x32xbf16>
    tpu.vector_store %arg5[%c0_7, %c0_8], %9 {strides = array<i32>} : memref<16x32xbf16, #tpu.memory_space<vmem>>, vector<16x32xbf16>,
    return
  }
  func.func @transform_0(%arg0: i32) -> (i32, i32) {
    %c0_i32 = arith.constant 0 : i32
    %c0_i32_0 = arith.constant 0 : i32
    return %arg0, %c0_i32 : i32, i32
  }
  func.func @transform_1(%arg0: i32) -> (i32, i32) {
    %c0_i32 = arith.constant 0 : i32
    %c0_i32_0 = arith.constant 0 : i32
    %c0_i32_1 = arith.constant 0 : i32
    return %c0_i32, %c0_i32_0 : i32, i32
  }
  func.func @transform_2(%arg0: i32) -> (i32, i32) {
    %c0_i32 = arith.constant 0 : i32
    %c0_i32_0 = arith.constant 0 : i32
    %c0_i32_1 = arith.constant 0 : i32
    return %c0_i32, %c0_i32_0 : i32, i32
  }
  func.func @transform_3(%arg0: i32) -> (i32, i32) {
    %c0_i32 = arith.constant 0 : i32
    %c0_i32_0 = arith.constant 0 : i32
    return %arg0, %c0_i32 : i32, i32
  }
  func.func @transform_4(%arg0: i32) -> (i32, i32) {
    %c0_i32 = arith.constant 0 : i32
    %c0_i32_0 = arith.constant 0 : i32
    return %arg0, %c0_i32 : i32, i32
  }
}

module attributes {stable_mosaic.version = 11 : i64} {
  func.func @_ln_matmul_kernel(%arg0: i32, %arg1: memref<16x32xbf16, #tpu.memory_space<vmem>>, %arg2: memref<1x32xf32, #tpu.memory_space<vmem>>, %arg3: memref<1x32xf32, #tpu.memory_space<vmem>>, %arg4: memref<32x64xbf16, #tpu.memory_space<vmem>>, %arg5: memref<1x64xf32, #tpu.memory_space<vmem>>, %arg6: memref<16x64xbf16, #tpu.memory_space<vmem>>) attributes {dimension_semantics = [#tpu.dimension_semantics<parallel>], iteration_bounds = array<i64: 1>, scalar_prefetch = 0 : i64, scratch_operands = 0 : i64, tpu.core_type = #tpu.core_type<tc>, window_params = [{transform_indices = @transform_0, window_bounds = array<i64: 16, 32>}, {pipeline_mode = #tpu.pipeline_mode<synchronous>, transform_indices = @transform_1, window_bounds = array<i64: 1, 32>}, {pipeline_mode = #tpu.pipeline_mode<synchronous>, transform_indices = @transform_2, window_bounds = array<i64: 1, 32>}, {pipeline_mode = #tpu.pipeline_mode<synchronous>, transform_indices = @transform_3, window_bounds = array<i64: 32, 64>}, {pipeline_mode = #tpu.pipeline_mode<synchronous>, transform_indices = @transform_4, window_bounds = array<i64: 1, 64>}, {transform_indices = @transform_5, window_bounds = array<i64: 16, 64>}]} {
    %c0 = arith.constant 0 : index
    %c0_0 = arith.constant 0 : index
    %0 = vector.load %arg1[%c0, %c0_0] : memref<16x32xbf16, #tpu.memory_space<vmem>>, vector<16x32xbf16>
    %1 = arith.extf %0 : vector<16x32xbf16> to vector<16x32xf32>
    %cst = arith.constant dense<0.000000e+00> : vector<16xf32>
    %2 = vector.multi_reduction <add>, %1, %cst [1] : vector<16x32xf32> to vector<16xf32>
    %3 = vector.shape_cast %2 : vector<16xf32> to vector<16x1xf32>
    %cst_1 = arith.constant 3.200000e+01 : f32
    %4 = vector.broadcast %cst_1 : f32 to vector<16x1xf32>
    %5 = arith.divf %3, %4 : vector<16x1xf32>
    %6 = vector.broadcast %5 : vector<16x1xf32> to vector<16x32xf32>
    %7 = arith.subf %1, %6 : vector<16x32xf32>
    %8 = arith.mulf %7, %7 : vector<16x32xf32>
    %cst_2 = arith.constant dense<0.000000e+00> : vector<16xf32>
    %9 = vector.multi_reduction <add>, %8, %cst_2 [1] : vector<16x32xf32> to vector<16xf32>
    %10 = vector.shape_cast %9 : vector<16xf32> to vector<16x1xf32>
    %cst_3 = arith.constant 3.200000e+01 : f32
    %11 = vector.broadcast %cst_3 : f32 to vector<16x1xf32>
    %12 = arith.divf %10, %11 : vector<16x1xf32>
    %13 = vector.broadcast %5 : vector<16x1xf32> to vector<16x32xf32>
    %14 = arith.subf %1, %13 : vector<16x32xf32>
    %cst_4 = arith.constant 9.99999974E-6 : f32
    %15 = vector.broadcast %cst_4 : f32 to vector<16x1xf32>
    %16 = arith.addf %12, %15 : vector<16x1xf32>
    %17 = math.rsqrt %16 : vector<16x1xf32>
    %18 = vector.broadcast %17 : vector<16x1xf32> to vector<16x32xf32>
    %19 = arith.mulf %14, %18 : vector<16x32xf32>
    %c0_5 = arith.constant 0 : index
    %c0_6 = arith.constant 0 : index
    %20 = vector.load %arg2[%c0_5, %c0_6] : memref<1x32xf32, #tpu.memory_space<vmem>>, vector<1x32xf32>
    %21 = vector.broadcast %20 : vector<1x32xf32> to vector<16x32xf32>
    %22 = arith.mulf %19, %21 : vector<16x32xf32>
    %c0_7 = arith.constant 0 : index
    %c0_8 = arith.constant 0 : index
    %23 = vector.load %arg3[%c0_7, %c0_8] : memref<1x32xf32, #tpu.memory_space<vmem>>, vector<1x32xf32>
    %24 = vector.broadcast %23 : vector<1x32xf32> to vector<16x32xf32>
    %25 = arith.addf %22, %24 : vector<16x32xf32>
    %26 = arith.truncf %25 : vector<16x32xf32> to vector<16x32xbf16>
    %c0_9 = arith.constant 0 : index
    %c0_10 = arith.constant 0 : index
    %27 = vector.load %arg4[%c0_9, %c0_10] : memref<32x64xbf16, #tpu.memory_space<vmem>>, vector<32x64xbf16>
    %cst_11 = arith.constant dense<0.000000e+00> : vector<16x64xf32>
    %28 = tpu.matmul %26, %27, %cst_11 {dimension_numbers = #tpu.dot_dimension_numbers<[1], [0], [0], [1], [0, 0, 1, 1], [], []>} : vector<16x32xbf16>, vector<32x64xbf16>, vector<16x64xf32> -> vector<16x64xf32>
    %c0_12 = arith.constant 0 : index
    %c0_13 = arith.constant 0 : index
    %29 = vector.load %arg5[%c0_12, %c0_13] : memref<1x64xf32, #tpu.memory_space<vmem>>, vector<1x64xf32>
    %30 = vector.broadcast %29 : vector<1x64xf32> to vector<16x64xf32>
    %31 = arith.addf %28, %30 : vector<16x64xf32>
    %cst_14 = arith.constant 1.702000e+00 : f32
    %32 = vector.broadcast %cst_14 : f32 to vector<16x64xf32>
    %33 = arith.mulf %32, %31 : vector<16x64xf32>
    %34 = arith.negf %33 : vector<16x64xf32>
    %35 = math.exp %34 : vector<16x64xf32>
    %cst_15 = arith.constant 1.000000e+00 : f32
    %36 = vector.broadcast %cst_15 : f32 to vector<16x64xf32>
    %37 = arith.addf %36, %35 : vector<16x64xf32>
    %38 = arith.divf %36, %37 : vector<16x64xf32>
    %39 = arith.mulf %31, %38 : vector<16x64xf32>
    %40 = arith.truncf %39 : vector<16x64xf32> to vector<16x64xbf16>
    %c0_16 = arith.constant 0 : index
    %c0_17 = arith.constant 0 : index
    %41 = vector.load %arg6[%c0_16, %c0_17] : memref<16x64xbf16, #tpu.memory_space<vmem>>, vector<16x64xbf16>
    tpu.vector_store %arg6[%c0_16, %c0_17], %40 {strides = array<i32>} : memref<16x64xbf16, #tpu.memory_space<vmem>>, vector<16x64xbf16>,
    return
  }
  func.func @transform_0(%arg0: i32) -> (i32, i32) {
    %c0_i32 = arith.constant 0 : i32
    %c0_i32_0 = arith.constant 0 : i32
    return %arg0, %c0_i32 : i32, i32
  }
  func.func @transform_1(%arg0: i32) -> (i32, i32) {
    %c0_i32 = arith.constant 0 : i32
    %c0_i32_0 = arith.constant 0 : i32
    %c0_i32_1 = arith.constant 0 : i32
    return %c0_i32, %c0_i32_0 : i32, i32
  }
  func.func @transform_2(%arg0: i32) -> (i32, i32) {
    %c0_i32 = arith.constant 0 : i32
    %c0_i32_0 = arith.constant 0 : i32
    %c0_i32_1 = arith.constant 0 : i32
    return %c0_i32, %c0_i32_0 : i32, i32
  }
  func.func @transform_3(%arg0: i32) -> (i32, i32) {
    %c0_i32 = arith.constant 0 : i32
    %c0_i32_0 = arith.constant 0 : i32
    %c0_i32_1 = arith.constant 0 : i32
    return %c0_i32, %c0_i32_0 : i32, i32
  }
  func.func @transform_4(%arg0: i32) -> (i32, i32) {
    %c0_i32 = arith.constant 0 : i32
    %c0_i32_0 = arith.constant 0 : i32
    %c0_i32_1 = arith.constant 0 : i32
    return %c0_i32, %c0_i32_0 : i32, i32
  }
  func.func @transform_5(%arg0: i32) -> (i32, i32) {
    %c0_i32 = arith.constant 0 : i32
    %c0_i32_0 = arith.constant 0 : i32
    return %arg0, %c0_i32 : i32, i32
  }
}

module attributes {stable_mosaic.version = 11 : i64} {
  func.func @_matmul_kernel(%arg0: i32, %arg1: memref<16x64xbf16, #tpu.memory_space<vmem>>, %arg2: memref<64x32xbf16, #tpu.memory_space<vmem>>, %arg3: memref<1x32xf32, #tpu.memory_space<vmem>>, %arg4: memref<16x32xbf16, #tpu.memory_space<vmem>>, %arg5: memref<16x32xbf16, #tpu.memory_space<vmem>>) attributes {dimension_semantics = [#tpu.dimension_semantics<parallel>], iteration_bounds = array<i64: 1>, scalar_prefetch = 0 : i64, scratch_operands = 0 : i64, tpu.core_type = #tpu.core_type<tc>, window_params = [{transform_indices = @transform_0, window_bounds = array<i64: 16, 64>}, {pipeline_mode = #tpu.pipeline_mode<synchronous>, transform_indices = @transform_1, window_bounds = array<i64: 64, 32>}, {pipeline_mode = #tpu.pipeline_mode<synchronous>, transform_indices = @transform_2, window_bounds = array<i64: 1, 32>}, {transform_indices = @transform_3, window_bounds = array<i64: 16, 32>}, {transform_indices = @transform_4, window_bounds = array<i64: 16, 32>}]} {
    %c0 = arith.constant 0 : index
    %c0_0 = arith.constant 0 : index
    %0 = vector.load %arg1[%c0, %c0_0] : memref<16x64xbf16, #tpu.memory_space<vmem>>, vector<16x64xbf16>
    %c0_1 = arith.constant 0 : index
    %c0_2 = arith.constant 0 : index
    %1 = vector.load %arg2[%c0_1, %c0_2] : memref<64x32xbf16, #tpu.memory_space<vmem>>, vector<64x32xbf16>
    %cst = arith.constant dense<0.000000e+00> : vector<16x32xf32>
    %2 = tpu.matmul %0, %1, %cst {dimension_numbers = #tpu.dot_dimension_numbers<[1], [0], [0], [1], [0, 0, 1, 1], [], []>} : vector<16x64xbf16>, vector<64x32xbf16>, vector<16x32xf32> -> vector<16x32xf32>
    %c0_3 = arith.constant 0 : index
    %c0_4 = arith.constant 0 : index
    %3 = vector.load %arg3[%c0_3, %c0_4] : memref<1x32xf32, #tpu.memory_space<vmem>>, vector<1x32xf32>
    %4 = vector.broadcast %3 : vector<1x32xf32> to vector<16x32xf32>
    %5 = arith.addf %2, %4 : vector<16x32xf32>
    %c0_5 = arith.constant 0 : index
    %c0_6 = arith.constant 0 : index
    %6 = vector.load %arg4[%c0_5, %c0_6] : memref<16x32xbf16, #tpu.memory_space<vmem>>, vector<16x32xbf16>
    %7 = arith.extf %6 : vector<16x32xbf16> to vector<16x32xf32>
    %8 = arith.addf %5, %7 : vector<16x32xf32>
    %9 = arith.truncf %8 : vector<16x32xf32> to vector<16x32xbf16>
    %c0_7 = arith.constant 0 : index
    %c0_8 = arith.constant 0 : index
    %10 = vector.load %arg5[%c0_7, %c0_8] : memref<16x32xbf16, #tpu.memory_space<vmem>>, vector<16x32xbf16>
    tpu.vector_store %arg5[%c0_7, %c0_8], %9 {strides = array<i32>} : memref<16x32xbf16, #tpu.memory_space<vmem>>, vector<16x32xbf16>,
    return
  }
  func.func @transform_0(%arg0: i32) -> (i32, i32) {
    %c0_i32 = arith.constant 0 : i32
    %c0_i32_0 = arith.constant 0 : i32
    return %arg0, %c0_i32 : i32, i32
  }
  func.func @transform_1(%arg0: i32) -> (i32, i32) {
    %c0_i32 = arith.constant 0 : i32
    %c0_i32_0 = arith.constant 0 : i32
    %c0_i32_1 = arith.constant 0 : i32
    return %c0_i32, %c0_i32_0 : i32, i32
  }
  func.func @transform_2(%arg0: i32) -> (i32, i32) {
    %c0_i32 = arith.constant 0 : i32
    %c0_i32_0 = arith.constant 0 : i32
    %c0_i32_1 = arith.constant 0 : i32
    return %c0_i32, %c0_i32_0 : i32, i32
  }
  func.func @transform_3(%arg0: i32) -> (i32, i32) {
    %c0_i32 = arith.constant 0 : i32
    %c0_i32_0 = arith.constant 0 : i32
    return %arg0, %c0_i32 : i32, i32
  }
  func.func @transform_4(%arg0: i32) -> (i32, i32) {
    %c0_i32 = arith.constant 0 : i32
    %c0_i32_0 = arith.constant 0 : i32
    return %arg0, %c0_i32 : i32, i32
  }
}

module attributes {stable_mosaic.version = 11 : i64} {
  func.func @_clip_probs_kernel(%arg0: i32, %arg1: memref<2x16xf32, #tpu.memory_space<vmem>>, %arg2: memref<2x16xf32, #tpu.memory_space<vmem>>, %arg3: memref<1x1xf32, #tpu.memory_space<vmem>>, %arg4: memref<2x2xf32, #tpu.memory_space<vmem>>) attributes {dimension_semantics = [#tpu.dimension_semantics<arbitrary>], iteration_bounds = array<i64: 1>, scalar_prefetch = 0 : i64, scratch_operands = 0 : i64, tpu.core_type = #tpu.core_type<tc>, window_params = [{pipeline_mode = #tpu.pipeline_mode<synchronous>, transform_indices = @transform_0, window_bounds = array<i64: 2, 16>}, {pipeline_mode = #tpu.pipeline_mode<synchronous>, transform_indices = @transform_1, window_bounds = array<i64: 2, 16>}, {pipeline_mode = #tpu.pipeline_mode<synchronous>, transform_indices = @transform_2, window_bounds = array<i64: 1, 1>}, {pipeline_mode = #tpu.pipeline_mode<synchronous>, transform_indices = @transform_3, window_bounds = array<i64: 2, 2>}]} {
    %c0 = arith.constant 0 : index
    %c0_0 = arith.constant 0 : index
    %0 = vector.load %arg1[%c0, %c0_0] : memref<2x16xf32, #tpu.memory_space<vmem>>, vector<2x16xf32>
    %c0_1 = arith.constant 0 : index
    %c0_2 = arith.constant 0 : index
    %1 = vector.load %arg2[%c0_1, %c0_2] : memref<2x16xf32, #tpu.memory_space<vmem>>, vector<2x16xf32>
    %2 = arith.mulf %0, %0 : vector<2x16xf32>
    %cst = arith.constant dense<0.000000e+00> : vector<2xf32>
    %3 = vector.multi_reduction <add>, %2, %cst [1] : vector<2x16xf32> to vector<2xf32>
    %4 = vector.shape_cast %3 : vector<2xf32> to vector<2x1xf32>
    %cst_3 = arith.constant 9.99999996E-13 : f32
    %5 = vector.broadcast %cst_3 : f32 to vector<2x1xf32>
    %6 = arith.addf %4, %5 : vector<2x1xf32>
    %7 = math.rsqrt %6 : vector<2x1xf32>
    %8 = vector.broadcast %7 : vector<2x1xf32> to vector<2x16xf32>
    %9 = arith.mulf %0, %8 : vector<2x16xf32>
    %10 = arith.mulf %1, %1 : vector<2x16xf32>
    %cst_4 = arith.constant dense<0.000000e+00> : vector<2xf32>
    %11 = vector.multi_reduction <add>, %10, %cst_4 [1] : vector<2x16xf32> to vector<2xf32>
    %12 = vector.shape_cast %11 : vector<2xf32> to vector<2x1xf32>
    %cst_5 = arith.constant 9.99999996E-13 : f32
    %13 = vector.broadcast %cst_5 : f32 to vector<2x1xf32>
    %14 = arith.addf %12, %13 : vector<2x1xf32>
    %15 = math.rsqrt %14 : vector<2x1xf32>
    %16 = vector.broadcast %15 : vector<2x1xf32> to vector<2x16xf32>
    %17 = arith.mulf %1, %16 : vector<2x16xf32>
    %cst_6 = arith.constant dense<0.000000e+00> : vector<2x2xf32>
    %18 = tpu.matmul %9, %17, %cst_6 {dimension_numbers = #tpu.dot_dimension_numbers<[1], [1], [0], [0], [0, 0, 1, 0], [], []>} : vector<2x16xf32>, vector<2x16xf32>, vector<2x2xf32> -> vector<2x2xf32>
    %c0_7 = arith.constant 0 : index
    %c0_8 = arith.constant 0 : index
    %19 = vector.load %arg3[%c0_7, %c0_8] : memref<1x1xf32, #tpu.memory_space<vmem>>, vector<1x1xf32>
    %20 = vector.extract %19[0, 0] : f32 from vector<1x1xf32>
    %21 = vector.broadcast %20 : f32 to vector<2x2xf32>
    %22 = arith.mulf %18, %21 : vector<2x2xf32>
    %cst_9 = arith.constant dense<0xFF800000> : vector<2xf32>
    %23 = vector.multi_reduction <maximumf>, %22, %cst_9 [1] : vector<2x2xf32> to vector<2xf32>
    %24 = vector.shape_cast %23 : vector<2xf32> to vector<2x1xf32>
    %25 = vector.broadcast %24 : vector<2x1xf32> to vector<2x2xf32>
    %26 = arith.subf %22, %25 : vector<2x2xf32>
    %27 = math.exp %26 : vector<2x2xf32>
    %cst_10 = arith.constant dense<0.000000e+00> : vector<2xf32>
    %28 = vector.multi_reduction <add>, %27, %cst_10 [1] : vector<2x2xf32> to vector<2xf32>
    %29 = vector.shape_cast %28 : vector<2xf32> to vector<2x1xf32>
    %30 = tpu.reciprocal %29 : vector<2x1xf32> -> vector<2x1xf32>
    %31 = vector.broadcast %30 : vector<2x1xf32> to vector<2x2xf32>
    %32 = arith.mulf %27, %31 : vector<2x2xf32>
    %c0_11 = arith.constant 0 : index
    %c0_12 = arith.constant 0 : index
    %33 = vector.load %arg4[%c0_11, %c0_12] : memref<2x2xf32, #tpu.memory_space<vmem>>, vector<2x2xf32>
    tpu.vector_store %arg4[%c0_11, %c0_12], %32 {strides = array<i32>} : memref<2x2xf32, #tpu.memory_space<vmem>>, vector<2x2xf32>,
    return
  }
  func.func @transform_0(%arg0: i32) -> (i32, i32) {
    %c0_i32 = arith.constant 0 : i32
    %c0_i32_0 = arith.constant 0 : i32
    %c0_i32_1 = arith.constant 0 : i32
    return %c0_i32, %c0_i32_0 : i32, i32
  }
  func.func @transform_1(%arg0: i32) -> (i32, i32) {
    %c0_i32 = arith.constant 0 : i32
    %c0_i32_0 = arith.constant 0 : i32
    %c0_i32_1 = arith.constant 0 : i32
    return %c0_i32, %c0_i32_0 : i32, i32
  }
  func.func @transform_2(%arg0: i32) -> (i32, i32) {
    %c0_i32 = arith.constant 0 : i32
    %c0_i32_0 = arith.constant 0 : i32
    %c0_i32_1 = arith.constant 0 : i32
    return %c0_i32, %c0_i32_0 : i32, i32
  }
  func.func @transform_3(%arg0: i32) -> (i32, i32) {
    %c0_i32 = arith.constant 0 : i32
    %c0_i32_0 = arith.constant 0 : i32
    %c0_i32_1 = arith.constant 0 : i32
    return %c0_i32, %c0_i32_0 : i32, i32
  }
}

</mosaic_0001>

<llo_original>
// kernel: _lambda_.26
$region0: #{_lambda_.26}
  #allocation0 [shape = 'u32[]', space=smem, size = 0x4, offset = 0x4, fixed_abs, tag = 'smem constant byte address 0x4 - core index']
  #allocation1 [shape = 'u32[144,128]{1,0:T(1,128)}', space=vmem, size = 0x12000, scoped, tag = 'internal scratch']
  %s0 = inlined_call_operand.vmem [shape: bf16[10,32], index: 0, kind: input, shape index: {}]
  %s1 = inlined_call_operand.vmem [shape: f32[1,32], index: 1, kind: input, shape index: {}]
  %s2 = inlined_call_operand.vmem [shape: f32[1,32], index: 2, kind: input, shape index: {}]
  %s3 = inlined_call_operand.vmem [shape: bf16[10,32], index: 3, kind: output, shape index: {}]
  %s4 = sld [smem:[#allocation0]]
  $region22: #{_lambda_.26} parent=0
    _
  %s6 = ssub.s32 1, %s4
  %s7 = scalar_select 0, %s6, %s4
  // Predicated region
  $region2: #{_lambda_.26} parent=0 // pred_check
    _
  $region3: #{_lambda_.26} parent=0 // pred_check_branch
    %9 = sbr.rel (0) target = $region5
  $region4: #{_lambda_.26} parent=0 // pred_region
    _
  $region5: #{_lambda_.26} parent=0 // pred_fallthru
    _
  // Predicated region
  $region6: #{_lambda_.26} parent=0 // pred_check
    _
  $region7: #{_lambda_.26} parent=0 // pred_check_branch
    %11 = sbr.rel (0) target = $region9
  $region8: #{_lambda_.26} parent=0 // pred_region
    _
  $region9: #{_lambda_.26} parent=0 // pred_fallthru
    _
  // Predicated region
  $region10: #{_lambda_.26} parent=0 // pred_check
    _
  $region11: #{_lambda_.26} parent=0 // pred_check_branch
    %13 = sbr.rel (0) target = $region13
  $region12: #{_lambda_.26} parent=0 // pred_region
    _
  $region13: #{_lambda_.26} parent=0 // pred_fallthru
    _
  %v14 = vld [vmem:[%s0] sm:$0xf]
  %v15 = vld [vmem:[%s0 + $0x4] sm:$0xf]
  %v16 = vunpack.c.l.bf16 %v14
  %v17 = vunpack.c.l.bf16 %v15
  %vm18 = vcmask 261120
  %v19 = vsel %vm18, %v16, 0.0
  %20 = vadd.xlane.f32.xlu0 %v19
  %v21 = vpop.xlane.xlu0 %20
  %v22 = vsel %vm18, %v17, 0.0
  %23 = vadd.xlane.f32.xlu0 %v22
  %v24 = vpop.xlane.xlu0 %23
  %v25 = vrcp.pop 32.0
  %v26 = vmul.f32 %v21, %v25
  %v27 = vmul.f32 %v24, %v25
  %v28 = vsub.f32 %v16, %v26
  %v29 = vsub.f32 %v17, %v27
  %v30 = vmul.f32 %v28, %v28
  %v31 = vmul.f32 %v29, %v29
  %v32 = vsel %vm18, %v30, 0.0
  %33 = vadd.xlane.f32.xlu0 %v32
  %v34 = vpop.xlane.xlu0 %33
  %v35 = vsel %vm18, %v31, 0.0
  %36 = vadd.xlane.f32.xlu0 %v35
  %v37 = vpop.xlane.xlu0 %36
  %v38 = vmul.f32 %v34, %v25
  %v39 = vmul.f32 %v37, %v25
  %v40 = vadd.f32 %v38, 1e-05
  %v41 = vadd.f32 %v39, 1e-05
  %v42 = vrsqrt.pop %v40
  %v43 = vrsqrt.pop %v41
  %v44 = vmul.f32 %v28, %v42
  %v45 = vmul.f32 %v29, %v43
  %v46 = vld [vmem:[%s1] sm:$0x1]
  %v48 = vlaneseq
  %v49 = vshrl.u32 %v48, 7
  %v50 = vsub.s32 0, %v49
  %v51 = vrot.slane %v46, %v50
  %v53 = vmul.f32 %v44, %v51
  %v54 = vmul.f32 %v45, %v51
  %v55 = vld [vmem:[%s2] sm:$0x1]
  %v57 = vlaneseq
  %v58 = vshrl.u32 %v57, 7
  %v59 = vsub.s32 0, %v58
  %v60 = vrot.slane %v55, %v59
  %v62 = vadd.f32 %v53, %v60
  %v63 = vadd.f32 %v54, %v60
  %v64 = vpack.c.bf16 %v63, %v62
  %v66 = vunpack.c.l.b16 %v64
  %v67 = vunpack.c.h.b16 %v64
  %v68 = vpack.c.b16 %v66, %v66
  %v69 = vpack.c.b16 %v67, %v67
  %vm72 = vcmask 257024
  %73 = vst.msk [vmem:[%s3] sm:$0xf] %vm72, %v68
  %74 = vst.msk [vmem:[%s3 + $0x4] sm:$0xf] %vm72, %v69
  // Predicated region
  $region14: #{_lambda_.26} parent=0 // pred_check
    _
  $region15: #{_lambda_.26} parent=0 // pred_check_branch
    %76 = sbr.rel (0) target = $region17
  $region16: #{_lambda_.26} parent=0 // pred_region
    _
  $region17: #{_lambda_.26} parent=0 // pred_fallthru
    _
  // Predicated region
  $region18: #{_lambda_.26} parent=0 // pred_check
    _
  $region19: #{_lambda_.26} parent=0 // pred_check_branch
    %78 = sbr.rel (0) target = $region21
  $region20: #{_lambda_.26} parent=0 // pred_region
    _
  $region21: #{_lambda_.26} parent=0 // pred_fallthru
    _

// kernel: _lambda_.27
$region0: #{_lambda_.27}
  #allocation0 [shape = 'u32[]', space=smem, size = 0x4, offset = 0x4, fixed_abs, tag = 'smem constant byte address 0x4 - core index']
  #allocation1 [shape = 'u32[144,128]{1,0:T(1,128)}', space=vmem, size = 0x12000, scoped, tag = 'internal scratch']
  %s0 = inlined_call_operand.vmem [shape: bf16[10,32], index: 0, kind: input, shape index: {}]
  %s1 = inlined_call_operand.vmem [shape: f32[1,32], index: 1, kind: input, shape index: {}]
  %s2 = inlined_call_operand.vmem [shape: f32[1,32], index: 2, kind: input, shape index: {}]
  %s3 = inlined_call_operand.vmem [shape: bf16[32,96], index: 3, kind: input, shape index: {}]
  %s4 = inlined_call_operand.vmem [shape: f32[1,96], index: 4, kind: input, shape index: {}]
  %s5 = inlined_call_operand.vmem [shape: bf16[10,96], index: 5, kind: output, shape index: {}]
  %s6 = sld [smem:[#allocation0]]
  $region30: #{_lambda_.27} parent=0
    _
  %s8 = ssub.s32 1, %s6
  %s9 = scalar_select 0, %s8, %s6
  // Predicated region
  $region2: #{_lambda_.27} parent=0 // pred_check
    _
  $region3: #{_lambda_.27} parent=0 // pred_check_branch
    %11 = sbr.rel (0) target = $region5
  $region4: #{_lambda_.27} parent=0 // pred_region
    _
  $region5: #{_lambda_.27} parent=0 // pred_fallthru
    _
  // Predicated region
  $region6: #{_lambda_.27} parent=0 // pred_check
    _
  $region7: #{_lambda_.27} parent=0 // pred_check_branch
    %13 = sbr.rel (0) target = $region9
  $region8: #{_lambda_.27} parent=0 // pred_region
    _
  $region9: #{_lambda_.27} parent=0 // pred_fallthru
    _
  // Predicated region
  $region10: #{_lambda_.27} parent=0 // pred_check
    _
  $region11: #{_lambda_.27} parent=0 // pred_check_branch
    %15 = sbr.rel (0) target = $region13
  $region12: #{_lambda_.27} parent=0 // pred_region
    _
  $region13: #{_lambda_.27} parent=0 // pred_fallthru
    _
  // Predicated region
  $region14: #{_lambda_.27} parent=0 // pred_check
    _
  $region15: #{_lambda_.27} parent=0 // pred_check_branch
    %17 = sbr.rel (0) target = $region17
  $region16: #{_lambda_.27} parent=0 // pred_region
    _
  $region17: #{_lambda_.27} parent=0 // pred_fallthru
    _
  // Predicated region
  $region18: #{_lambda_.27} parent=0 // pred_check
    _
  $region19: #{_lambda_.27} parent=0 // pred_check_branch
    %19 = sbr.rel (0) target = $region21
  $region20: #{_lambda_.27} parent=0 // pred_region
    _
  $region21: #{_lambda_.27} parent=0 // pred_fallthru
    _
  %v21 = vld [vmem:[%s0] sm:$0xf]
  %v22 = vld [vmem:[%s0 + $0x4] sm:$0xf]
  %v23 = vunpack.c.l.bf16 %v21
  %v24 = vunpack.c.l.bf16 %v22
  %vm25 = vcmask 261120
  %v26 = vsel %vm25, %v23, 0.0
  %27 = vadd.xlane.f32.xlu0 %v26
  %v28 = vpop.xlane.xlu0 %27
  %v29 = vsel %vm25, %v24, 0.0
  %30 = vadd.xlane.f32.xlu0 %v29
  %v31 = vpop.xlane.xlu0 %30
  %v32 = vrcp.pop 32.0
  %v33 = vmul.f32 %v28, %v32
  %v34 = vmul.f32 %v31, %v32
  %v35 = vsub.f32 %v23, %v33
  %v36 = vsub.f32 %v24, %v34
  %v37 = vmul.f32 %v35, %v35
  %v38 = vmul.f32 %v36, %v36
  %v39 = vsel %vm25, %v37, 0.0
  %40 = vadd.xlane.f32.xlu0 %v39
  %v41 = vpop.xlane.xlu0 %40
  %v42 = vsel %vm25, %v38, 0.0
  %43 = vadd.xlane.f32.xlu0 %v42
  %v44 = vpop.xlane.xlu0 %43
  %v45 = vmul.f32 %v41, %v32
  %v46 = vmul.f32 %v44, %v32
  %v47 = vadd.f32 %v45, 1e-05
  %v48 = vadd.f32 %v46, 1e-05
  %v49 = vrsqrt.pop %v47
  %v50 = vrsqrt.pop %v48
  %v51 = vmul.f32 %v35, %v49
  %v52 = vmul.f32 %v36, %v50
  %v53 = vld [vmem:[%s1] sm:$0x1]
  %v55 = vlaneseq
  %v56 = vshrl.u32 %v55, 7
  %v57 = vsub.s32 0, %v56
  %v58 = vrot.slane %v53, %v57
  %v60 = vmul.f32 %v51, %v58
  %v61 = vmul.f32 %v52, %v58
  %v62 = vld [vmem:[%s2] sm:$0x1]
  %v64 = vlaneseq
  %v65 = vshrl.u32 %v64, 7
  %v66 = vsub.s32 0, %v65
  %v67 = vrot.slane %v62, %v66
  %v69 = vadd.f32 %v60, %v67
  %v70 = vadd.f32 %v61, %v67
  %v71 = vpack.c.bf16 %v70, %v69
  %v72 = vld [vmem:[%s3] sm:$0xf]
  %v73 = vld [vmem:[%s3 + $0x4] sm:$0xf]
  %v74 = vld [vmem:[%s3 + $0x8] sm:$0xf]
  %v75 = vld [vmem:[%s3 + $0xc] sm:$0xf]
  %v76 = vld [vmem:[%s4] sm:$0x1]
  %v78 = vlaneseq
  %v79 = vshrl.u32 %v78, 7
  %v80 = vsub.s32 0, %v79
  %v81 = vrot.slane %v76, %v80
  %v87 = vunpack.c.l.b16 %v72
  %v88 = vunpack.c.l.b16 %v73
  %v89 = vunpack.c.l.b16 %v74
  %v90 = vunpack.c.l.b16 %v75
  %v91 = vpack.c.b16 %v88, %v87
  %v92 = vpack.c.b16 %v90, %v89
  %v96 = vsel %vm25, %v71, 0
  %98 = vmatprep.subr.bf16.mxu0 0
  %99 = vmatpush1.bf16.msra.mxu0 0
  %100 = vmatprep.subr.bf16.mxu0 0
  %101 = vmatpush1.bf16.msra.mxu0 0
  %102 = vmatprep.subr.bf16.mxu0 0
  %103 = vmatpush1.bf16.msra.mxu0 0
  %104 = vmatprep.subr.bf16.mxu0 0
  %105 = vmatpush1.bf16.msra.mxu0 0
  %106 = vmatprep.subr.bf16.mxu0 0
  %107 = vmatpush1.bf16.msra.mxu0 0
  %108 = vmatprep.subr.bf16.mxu0 0
  %109 = vmatpush1.bf16.msra.mxu0 0
  %110 = vmatprep.subr.bf16.mxu0 0
  %111 = vmatpush1.bf16.msra.mxu0 %v92
  %112 = vmatprep.subr.bf16.mxu0 0
  %113 = vmatpush1.bf16.msra.mxu0 %v91
  %114 = vmatprep.subr.bf16.mxu0 0
  %115 = vmatpush2.bf16.msra.mxu0 0
  %116 = vmatprep.subr.bf16.mxu0 0
  %117 = vmatpush2.bf16.msra.mxu0 0
  %118 = vmatprep.subr.bf16.mxu0 0
  %119 = vmatpush2.bf16.msra.mxu0 0
  %120 = vmatprep.subr.bf16.mxu0 0
  %121 = vmatpush2.bf16.msra.mxu0 0
  %122 = vmatprep.subr.bf16.mxu0 0
  %123 = vmatpush2.bf16.msra.mxu0 0
  %124 = vmatprep.subr.bf16.mxu0 0
  %125 = vmatpush2.bf16.msra.mxu0 0
  %126 = vmatprep.subr.bf16.mxu0 0
  %127 = vmatpush2.bf16.msra.mxu0 0
  %128 = vmatprep.subr.bf16.mxu0 0
  %129 = vmatpush2.bf16.msra.mxu0 0
  %130 = vmatprep.mubr.bf16.mxu0 0
  %131 = vmatmul.mubr.bf16.gmra.mxu0 %v96
  %v132 = vpop.f32.mrf.mxu0
  %v133 = vadd.f32 %v81, %v132
  %v134 = vpop.f32.mrf.mxu0
  %v135 = vpop.f32.mrf.mxu0
  %v136 = vadd.f32 %v81, %v135
  %v137 = vpop.f32.mrf.mxu0
  %138 = vdwg.mxu0
  %v139 = vpack.c.bf16 %v136, %v133
  %v141 = vunpack.c.l.b16 %v139
  %v142 = vunpack.c.h.b16 %v139
  %v143 = vpack.c.b16 %v141, %v141
  %v144 = vpack.c.b16 %v142, %v142
  %vm147 = vcmask 781312
  %148 = vst.msk [vmem:[%s5] sm:$0xf] %vm147, %v143
  %149 = vst.msk [vmem:[%s5 + $0x4] sm:$0xf] %vm147, %v144
  // Predicated region
  $region22: #{_lambda_.27} parent=0 // pred_check
    _
  $region23: #{_lambda_.27} parent=0 // pred_check_branch
    %151 = sbr.rel (0) target = $region25
  $region24: #{_lambda_.27} parent=0 // pred_region
    _
  $region25: #{_lambda_.27} parent=0 // pred_fallthru
    _
  // Predicated region
  $region26: #{_lambda_.27} parent=0 // pred_check
    _
  $region27: #{_lambda_.27} parent=0 // pred_check_branch
    %153 = sbr.rel (0) target = $region29
  $region28: #{_lambda_.27} parent=0 // pred_region
    _
  $region29: #{_lambda_.27} parent=0 // pred_fallthru
    _

// kernel: _lambda_.25
$region0: #{_lambda_.25}
  #allocation0 [shape = 'u32[]', space=smem, size = 0x4, offset = 0x4, fixed_abs, tag = 'smem constant byte address 0x4 - core index']
  #allocation1 [shape = 'u32[144,128]{1,0:T(1,128)}', space=vmem, size = 0x12000, scoped, tag = 'internal scratch']
  %s0 = inlined_call_operand.vmem [shape: bf16[8,192], index: 0, kind: input, shape index: {}]
  %s1 = inlined_call_operand.vmem [shape: bf16[192,32], index: 1, kind: input, shape index: {}]
  %s2 = inlined_call_operand.vmem [shape: f32[1,32], index: 2, kind: input, shape index: {}]
  %s3 = inlined_call_operand.vmem [shape: bf16[8,32], index: 3, kind: output, shape index: {}]
  %s4 = sld [smem:[#allocation0]]
  $region22: #{_lambda_.25} parent=0
    _
  %s6 = ssub.s32 1, %s4
  %s7 = scalar_select 0, %s6, %s4
  // Predicated region
  $region2: #{_lambda_.25} parent=0 // pred_check
    _
  $region3: #{_lambda_.25} parent=0 // pred_check_branch
    %9 = sbr.rel (0) target = $region5
  $region4: #{_lambda_.25} parent=0 // pred_region
    _
  $region5: #{_lambda_.25} parent=0 // pred_fallthru
    _
  // Predicated region
  $region6: #{_lambda_.25} parent=0 // pred_check
    _
  $region7: #{_lambda_.25} parent=0 // pred_check_branch
    %11 = sbr.rel (0) target = $region9
  $region8: #{_lambda_.25} parent=0 // pred_region
    _
  $region9: #{_lambda_.25} parent=0 // pred_fallthru
    _
  // Predicated region
  $region10: #{_lambda_.25} parent=0 // pred_check
    _
  $region11: #{_lambda_.25} parent=0 // pred_check_branch
    %13 = sbr.rel (0) target = $region13
  $region12: #{_lambda_.25} parent=0 // pred_region
    _
  $region13: #{_lambda_.25} parent=0 // pred_fallthru
    _
  %v15 = vld [vmem:[%s0] sm:$0xff]
  %v16 = vld [vmem:[%s1] sm:$0xf]
  %v17 = vld [vmem:[%s1 + $0x4] sm:$0xf]
  %v18 = vld [vmem:[%s1 + $0x8] sm:$0xf]
  %v19 = vld [vmem:[%s1 + $0xc] sm:$0xf]
  %v20 = vld [vmem:[%s1 + $0x10] sm:$0xf]
  %v21 = vld [vmem:[%s1 + $0x14] sm:$0xf]
  %v22 = vld [vmem:[%s1 + $0x18] sm:$0xf]
  %v23 = vld [vmem:[%s1 + $0x1c] sm:$0xf]
  %v24 = vld [vmem:[%s1 + $0x20] sm:$0xf]
  %v25 = vld [vmem:[%s1 + $0x24] sm:$0xf]
  %v26 = vld [vmem:[%s1 + $0x28] sm:$0xf]
  %v27 = vld [vmem:[%s1 + $0x2c] sm:$0xf]
  %v28 = vld [vmem:[%s1 + $0x30] sm:$0xf]
  %v29 = vld [vmem:[%s1 + $0x34] sm:$0xf]
  %v30 = vld [vmem:[%s1 + $0x38] sm:$0xf]
  %v31 = vld [vmem:[%s1 + $0x3c] sm:$0xf]
  %v32 = vld [vmem:[%s1 + $0x40] sm:$0xf]
  %v33 = vld [vmem:[%s1 + $0x44] sm:$0xf]
  %v34 = vld [vmem:[%s1 + $0x48] sm:$0xf]
  %v35 = vld [vmem:[%s1 + $0x4c] sm:$0xf]
  %v36 = vld [vmem:[%s1 + $0x50] sm:$0xf]
  %v37 = vld [vmem:[%s1 + $0x54] sm:$0xf]
  %v38 = vld [vmem:[%s1 + $0x58] sm:$0xf]
  %v39 = vld [vmem:[%s1 + $0x5c] sm:$0xf]
  %v40 = vld [vmem:[%s2] sm:$0x1]
  %v42 = vlaneseq
  %v43 = vshrl.u32 %v42, 7
  %v44 = vsub.s32 0, %v43
  %v45 = vrot.slane %v40, %v44
  %v48 = vunpack.c.l.b16 %v15
  %v49 = vunpack.c.h.b16 %v15
  %v50 = vpack.c.b16 %v48, %v48
  %v51 = vpack.c.b16 %v49, %v49
  %v77 = vunpack.c.l.b16 %v16
  %v78 = vunpack.c.l.b16 %v17
  %v79 = vunpack.c.l.b16 %v18
  %v80 = vunpack.c.l.b16 %v19
  %v81 = vunpack.c.l.b16 %v20
  %v82 = vunpack.c.l.b16 %v21
  %v83 = vunpack.c.l.b16 %v22
  %v84 = vunpack.c.l.b16 %v23
  %v85 = vunpack.c.l.b16 %v24
  %v86 = vunpack.c.l.b16 %v25
  %v87 = vunpack.c.l.b16 %v26
  %v88 = vunpack.c.l.b16 %v27
  %v89 = vunpack.c.l.b16 %v28
  %v90 = vunpack.c.l.b16 %v29
  %v91 = vunpack.c.l.b16 %v30
  %v92 = vunpack.c.l.b16 %v31
  %v93 = vunpack.c.l.b16 %v32
  %v94 = vunpack.c.l.b16 %v33
  %v95 = vunpack.c.l.b16 %v34
  %v96 = vunpack.c.l.b16 %v35
  %v97 = vunpack.c.l.b16 %v36
  %v98 = vunpack.c.l.b16 %v37
  %v99 = vunpack.c.l.b16 %v38
  %v100 = vunpack.c.l.b16 %v39
  %v101 = vpack.c.b16 %v78, %v77
  %v102 = vpack.c.b16 %v80, %v79
  %v103 = vpack.c.b16 %v82, %v81
  %v104 = vpack.c.b16 %v84, %v83
  %v105 = vpack.c.b16 %v86, %v85
  %v106 = vpack.c.b16 %v88, %v87
  %v107 = vpack.c.b16 %v90, %v89
  %v108 = vpack.c.b16 %v92, %v91
  %v109 = vpack.c.b16 %v94, %v93
  %v110 = vpack.c.b16 %v96, %v95
  %v111 = vpack.c.b16 %v98, %v97
  %v112 = vpack.c.b16 %v100, %v99
  %vm125 = vcmask 523264
  %v127 = vsel %vm125, %v51, 0
  %129 = vmatprep.subr.bf16.mxu0 0
  %130 = vmatpush1.bf16.msra.mxu0 %v108
  %131 = vmatprep.subr.bf16.mxu0 0
  %132 = vmatpush1.bf16.msra.mxu0 %v107
  %133 = vmatprep.subr.bf16.mxu0 0
  %134 = vmatpush1.bf16.msra.mxu0 %v106
  %135 = vmatprep.subr.bf16.mxu0 0
  %136 = vmatpush1.bf16.msra.mxu0 %v105
  %137 = vmatprep.subr.bf16.mxu0 0
  %138 = vmatpush1.bf16.msra.mxu0 %v104
  %139 = vmatprep.subr.bf16.mxu0 0
  %140 = vmatpush1.bf16.msra.mxu0 %v103
  %141 = vmatprep.subr.bf16.mxu0 0
  %142 = vmatpush1.bf16.msra.mxu0 %v102
  %143 = vmatprep.subr.bf16.mxu0 0
  %144 = vmatpush1.bf16.msra.mxu0 %v101
  %145 = vmatprep.subr.bf16.mxu0 0
  %146 = vmatpush2.bf16.msra.mxu0 0
  %147 = vmatprep.subr.bf16.mxu0 0
  %148 = vmatpush2.bf16.msra.mxu0 0
  %149 = vmatprep.subr.bf16.mxu0 0
  %150 = vmatpush2.bf16.msra.mxu0 0
  %151 = vmatprep.subr.bf16.mxu0 0
  %152 = vmatpush2.bf16.msra.mxu0 0
  %153 = vmatprep.subr.bf16.mxu0 0
  %154 = vmatpush2.bf16.msra.mxu0 %v112
  %155 = vmatprep.subr.bf16.mxu0 0
  %156 = vmatpush2.bf16.msra.mxu0 %v111
  %157 = vmatprep.subr.bf16.mxu0 0
  %158 = vmatpush2.bf16.msra.mxu0 %v110
  %159 = vmatprep.subr.bf16.mxu0 0
  %160 = vmatpush2.bf16.msra.mxu0 %v109
  %161 = vmatprep.mubr.bf16.mxu0 %v127
  %162 = vmatmul.mubr.bf16.gmra.mxu0 %v50
  %v163 = vpop.f32.mrf.mxu0
  %v164 = vadd.f32 %v45, %v163
  %v165 = vpop.f32.mrf.mxu0
  %v166 = vpop.f32.mrf.mxu0
  %v167 = vpop.f32.mrf.mxu0
  %168 = vdwg.mxu0
  %v169 = vpack.c.bf16 %v164, %v164
  %vm170 = vcmask 257024
  %171 = vst.msk [vmem:[%s3] sm:$0xf] %vm170, %v169
  // Predicated region
  $region14: #{_lambda_.25} parent=0 // pred_check
    _
  $region15: #{_lambda_.25} parent=0 // pred_check_branch
    %173 = sbr.rel (0) target = $region17
  $region16: #{_lambda_.25} parent=0 // pred_region
    _
  $region17: #{_lambda_.25} parent=0 // pred_fallthru
    _
  // Predicated region
  $region18: #{_lambda_.25} parent=0 // pred_check
    _
  $region19: #{_lambda_.25} parent=0 // pred_check_branch
    %175 = sbr.rel (0) target = $region21
  $region20: #{_lambda_.25} parent=0 // pred_region
    _
  $region21: #{_lambda_.25} parent=0 // pred_fallthru
    _

// kernel: _lambda_.28
$region0: #{_lambda_.28}
  #allocation0 [shape = 'u32[]', space=smem, size = 0x4, offset = 0x4, fixed_abs, tag = 'smem constant byte address 0x4 - core index']
  #allocation1 [shape = 'u32[144,128]{1,0:T(1,128)}', space=vmem, size = 0x12000, scoped, tag = 'internal scratch']
  %s0 = inlined_call_operand.vmem [shape: bf16[2,5,96], index: 0, kind: input, shape index: {}]
  %s1 = inlined_call_operand.vmem [shape: bf16[2,5,32], index: 1, kind: output, shape index: {}]
  %s2 = sld [smem:[#allocation0]]
  $region37: #{_lambda_.28} parent=0
    _
  %s4 = ssub.s32 1, %s2
  %s5 = scalar_select 0, %s4, %s2
  loop: start=0, step=1, limit=4
  $region2: #{_lambda_.28} parent=0 // loop_pre_header
    _
  $region3: #{_lambda_.28} parent=0 // loop_header
    %s7 = sphi 0, %s11
    %p8 = scmp.ge.s32.totalorder %s7, 4
    %s17 = sphi 0, %s19
    %s20 = sphi 0, %s17
    %s21 = sphi 0, %s20
    %s37 = sphi 0, %s21
    %s43 = sphi 0, %s45
    %s46 = sphi 0, %s43
    %s47 = sphi 0, %s46
    %s63 = sphi 0, %s47
  $region4: #{_lambda_.28} parent=0 // loop_header_branch
    %10 = sbr.rel (%p8) target = $region8
  $region5: #{_lambda_.28} parent=0 // loop_body
    %s12 = ssub.s32 %s7, 1
    %s13 = ssub.s32 %s7, 2
    %s14 = sadd.s32 %s7, 1
    %s15 = ssub.s32 %s7, %s14
    %p16 = scmp.eq.s32.totalorder %s15, 0
    %s18 = sadd.s32 %s17, 1
    %s19 = scalar_select %p16, %s17, %s18
    %p22 = pneg %p16
    %p23 = scmp.eq.s32.totalorder %s7, 1
    %p24 = por %p22, %p23
    %p25 = scmp.ne.s32.totalorder %s17, %s20
    %p26 = scmp.eq.s32.totalorder %s7, 0
    %p27 = por %p25, %p26
    %p28 = scmp.ne.s32.totalorder %s17, %s20
    %p29 = scmp.eq.s32.totalorder %s12, 1
    %p30 = por %p28, %p29
    %p31 = scmp.ne.s32.totalorder %s20, %s21
    %p32 = scmp.eq.s32.totalorder %s12, 0
    %p33 = por %p31, %p32
    %p34 = scmp.ne.s32.totalorder %s20, %s21
    %p35 = scmp.eq.s32.totalorder %s13, 1
    %p36 = por %p34, %p35
    %p38 = scmp.ne.s32.totalorder %s21, %s37
    %p39 = scmp.eq.s32.totalorder %s13, 0
    %p40 = por %p38, %p39
    %s41 = ssub.s32 %s7, %s14
    %p42 = scmp.eq.s32.totalorder %s41, 0
    %s44 = sadd.s32 %s43, 1
    %s45 = scalar_select %p42, %s43, %s44
    %p48 = pneg %p42
    %p49 = scmp.eq.s32.totalorder %s7, 1
    %p50 = por %p48, %p49
    %p51 = scmp.ne.s32.totalorder %s43, %s46
    %p52 = scmp.eq.s32.totalorder %s7, 0
    %p53 = por %p51, %p52
    %p54 = scmp.ne.s32.totalorder %s43, %s46
    %p55 = scmp.eq.s32.totalorder %s12, 1
    %p56 = por %p54, %p55
    %p57 = scmp.ne.s32.totalorder %s46, %s47
    %p58 = scmp.eq.s32.totalorder %s12, 0
    %p59 = por %p57, %p58
    %p60 = scmp.ne.s32.totalorder %s46, %s47
    %p61 = scmp.eq.s32.totalorder %s13, 1
    %p62 = por %p60, %p61
    %p64 = scmp.ne.s32.totalorder %s47, %s63
    %p65 = scmp.eq.s32.totalorder %s13, 0
    %p66 = por %p64, %p65
    %p67 = scmp.le.s32.totalorder 1, %s7
    %p68 = scmp.lt.s32.totalorder %s7, 3
    %p69 = pnand %p67, %p68
    %p70 = pneg %p69
    // Predicated region
    $region9: #{_lambda_.28} parent=5 // pred_check
      _
    $region10: #{_lambda_.28} parent=5 // pred_check_branch
      %72 = sbr.rel (%p69) target = $region12
    $region11: #{_lambda_.28} parent=5 // pred_region
      %s73 = ssub.s32 %s7, 1
    $region12: #{_lambda_.28} parent=5 // pred_fallthru
      _
    %p74 = scmp.lt.s32.totalorder %s7, 2
    // Predicated region
    $region13: #{_lambda_.28} parent=5 // pred_check
      %p75 = pneg %p74
    $region14: #{_lambda_.28} parent=5 // pred_check_branch
      %77 = sbr.rel (%p75) target = $region16
    $region15: #{_lambda_.28} parent=5 // pred_region
      // Predicated region
      $region17: #{_lambda_.28} parent=15 // pred_check
        %p78 = pneg %p27
      $region18: #{_lambda_.28} parent=15 // pred_check_branch
        %80 = sbr.rel (%p78) target = $region20
      $region19: #{_lambda_.28} parent=15 // pred_region
        %p81 = scmp.lt.s32.totalorder %s7, 1
        %s82 = scalar_select %p81, %s7, 1
        %s83 = smul.addr %s82, 4
        %s84 = scalar_lea.vmem %s0, %s83
      $region20: #{_lambda_.28} parent=15 // pred_fallthru
        _
    $region16: #{_lambda_.28} parent=5 // pred_fallthru
      _
    %p85 = scmp.le.s32.totalorder 1, %s7
    %p86 = scmp.lt.s32.totalorder %s7, 3
    %p87 = pnand %p85, %p86
    %p88 = pneg %p87
    // Predicated region
    $region21: #{_lambda_.28} parent=5 // pred_check
      _
    $region22: #{_lambda_.28} parent=5 // pred_check_branch
      %90 = sbr.rel (%p87) target = $region24
    $region23: #{_lambda_.28} parent=5 // pred_region
      %s91 = ssub.s32 %s7, 1
      %p92 = scmp.lt.s32.totalorder %s12, 1
      %s93 = scalar_select %p92, %s12, 1
      %s94 = smul.addr %s93, 4
      %s95 = scalar_lea.vmem %s0, %s94
      %p96 = pneg %p33
      %p97 = pneg %p30
      %p98 = pneg %p59
      %p99 = pneg %p56
      %p100 = scmp.lt.s32.totalorder %s12, 1
      %s101 = scalar_select %p100, %s12, 1
      %s102 = smul.addr %s101, 4
      %s103 = scalar_lea.vmem %s1, %s102
      %p104 = scmp.lt.s32.totalorder %s12, 1
      %s105 = scalar_select %p104, %s12, 1
      %s106 = smul.addr %s105, 4
      %s107 = scalar_lea.vmem %s0, %s106
      %p108 = scmp.lt.s32.totalorder %s12, 1
      %s109 = scalar_select %p108, %s12, 1
      %s110 = smul.addr %s109, 4
      %s111 = scalar_lea.vmem %s1, %s110
      %v114 = vld [vmem:[%s107] sm:$0x7]
      %v115 = vmul.bf16 %v114, 1048592000
      %v117 = vunpack.c.l.b16 %v114
      %v118 = vpack.c.b16 %v117, %v117
      %119 = vrot.lane.b32.xlu0 %v118, 96
      %v120 = vpop.permute.xlu0 %119
      %vm121 = vcmask 130048
      %v123 = vsel %vm121, %v115, 0
      %v126 = vsel %vm121, %v120, 0
      %128 = vmatprep.subr.bf16.mxu0 0
      %129 = vmatpush1.bf16.xpose.msra.mxu0 0
      %130 = vmatprep.subr.bf16.mxu0 0
      %131 = vmatpush1.bf16.xpose.msra.mxu0 0
      %132 = vmatprep.subr.bf16.mxu0 0
      %133 = vmatpush1.bf16.xpose.msra.mxu0 0
      %134 = vmatprep.subr.bf16.mxu0 0
      %135 = vmatpush1.bf16.xpose.msra.mxu0 0
      %136 = vmatprep.subr.bf16.mxu0 0
      %137 = vmatpush1.bf16.xpose.msra.mxu0 0
      %138 = vmatprep.subr.bf16.mxu0 0
      %139 = vmatpush1.bf16.xpose.msra.mxu0 0
      %140 = vmatprep.subr.bf16.mxu0 0
      %141 = vmatpush1.bf16.xpose.msra.mxu0 0
      %142 = vmatprep.subr.bf16.mxu0 0
      %143 = vmatpush1.bf16.xpose.msra.mxu0 %v126
      %144 = vmatprep.subr.bf16.mxu0 0
      %145 = vmatpush2.bf16.xpose.msra.mxu0 0
      %146 = vmatprep.subr.bf16.mxu0 0
      %147 = vmatpush2.bf16.xpose.msra.mxu0 0
      %148 = vmatprep.subr.bf16.mxu0 0
      %149 = vmatpush2.bf16.xpose.msra.mxu0 0
      %150 = vmatprep.subr.bf16.mxu0 0
      %151 = vmatpush2.bf16.xpose.msra.mxu0 0
      %152 = vmatprep.subr.bf16.mxu0 0
      %153 = vmatpush2.bf16.xpose.msra.mxu0 0
      %154 = vmatprep.subr.bf16.mxu0 0
      %155 = vmatpush2.bf16.xpose.msra.mxu0 0
      %156 = vmatprep.subr.bf16.mxu0 0
      %157 = vmatpush2.bf16.xpose.msra.mxu0 0
      %158 = vmatprep.subr.bf16.mxu0 0
      %159 = vmatpush2.bf16.xpose.msra.mxu0 0
      %160 = vmatprep.mubr.bf16.mxu0 0
      %161 = vmatmul.mubr.bf16.gmra.mxu0 %v123
      %v162 = vpop.f32.mrf.mxu0
      %v163 = vadd.f32 0.0, %v162
      %v164 = vpop.f32.mrf.mxu0
      %v165 = vpop.f32.mrf.mxu0
      %v166 = vpop.f32.mrf.mxu0
      %167 = vdwg.mxu0
      %vm168 = vcmask 36864
      %v169 = vsel %vm168, %v163, -inf
      %170 = vmax.xlane.f32.xlu0 %v169
      %v171 = vpop.xlane.xlu0 %170
      %v172 = vsub.f32 %v163, %v171
      %v173 = vmul.f32 %v172, 1.442695
      %v174 = vpow.pop %v173
      %v175 = vsel %vm168, %v174, 0.0
      %176 = vadd.xlane.f32.xlu0 %v175
      %v177 = vpop.xlane.xlu0 %176
      %v178 = vrcp.pop %v177
      %v179 = vmul.f32 %v174, %v178
      %v180 = vpack.c.bf16 %v179, %v179
      %181 = vrot.lane.b32.xlu0 %v118, 64
      %v182 = vpop.permute.xlu0 %181
      %vm183 = vcmask 39936
      %v185 = vsel %vm183, %v180, 0
      %vm187 = vcmask 1041408
      %vm188 = vcmask 1042432
      %v189 = vsel %vm187, 4294967295, 65535
      %v190 = vsel %vm188, %v189, 0
      %v192 = vand.u32 %v182, %v190
      %194 = vmatprep.subr.bf16.mxu0 0
      %195 = vmatpush1.bf16.msra.mxu0 0
      %196 = vmatprep.subr.bf16.mxu0 0
      %197 = vmatpush1.bf16.msra.mxu0 0
      %198 = vmatprep.subr.bf16.mxu0 0
      %199 = vmatpush1.bf16.msra.mxu0 0
      %200 = vmatprep.subr.bf16.mxu0 0
      %201 = vmatpush1.bf16.msra.mxu0 0
      %202 = vmatprep.subr.bf16.mxu0 0
      %203 = vmatpush1.bf16.msra.mxu0 0
      %204 = vmatprep.subr.bf16.mxu0 0
      %205 = vmatpush1.bf16.msra.mxu0 0
      %206 = vmatprep.subr.bf16.mxu0 0
      %207 = vmatpush1.bf16.msra.mxu0 0
      %208 = vmatprep.subr.bf16.mxu0 0
      %209 = vmatpush1.bf16.msra.mxu0 %v192
      %210 = vmatprep.subr.bf16.mxu0 0
      %211 = vmatpush2.bf16.msra.mxu0 0
      %212 = vmatprep.subr.bf16.mxu0 0
      %213 = vmatpush2.bf16.msra.mxu0 0
      %214 = vmatprep.subr.bf16.mxu0 0
      %215 = vmatpush2.bf16.msra.mxu0 0
      %216 = vmatprep.subr.bf16.mxu0 0
      %217 = vmatpush2.bf16.msra.mxu0 0
      %218 = vmatprep.subr.bf16.mxu0 0
      %219 = vmatpush2.bf16.msra.mxu0 0
      %220 = vmatprep.subr.bf16.mxu0 0
      %221 = vmatpush2.bf16.msra.mxu0 0
      %222 = vmatprep.subr.bf16.mxu0 0
      %223 = vmatpush2.bf16.msra.mxu0 0
      %224 = vmatprep.subr.bf16.mxu0 0
      %225 = vmatpush2.bf16.msra.mxu0 0
      %226 = vmatprep.mubr.bf16.mxu0 0
      %227 = vmatmul.mubr.bf16.gmra.mxu0 %v185
      %v228 = vpop.f32.mrf.mxu0
      %v229 = vadd.f32 0.0, %v228
      %v230 = vpop.f32.mrf.mxu0
      %v231 = vpop.f32.mrf.mxu0
      %v232 = vpop.f32.mrf.mxu0
      %233 = vdwg.mxu0
      %v235 = vunpack.c.l.b16 %v115
      %v236 = vpack.c.b16 %v235, %v235
      %237 = vrot.lane.b32.xlu0 %v236, 112
      %v238 = vpop.permute.xlu0 %237
      %239 = vrot.lane.b32.xlu0 %v118, 80
      %v240 = vpop.permute.xlu0 %239
      %v242 = vsel %vm121, %v238, 0
      %v245 = vsel %vm121, %v240, 0
      %247 = vmatprep.subr.bf16.mxu0 0
      %248 = vmatpush1.bf16.xpose.msra.mxu0 0
      %249 = vmatprep.subr.bf16.mxu0 0
      %250 = vmatpush1.bf16.xpose.msra.mxu0 0
      %251 = vmatprep.subr.bf16.mxu0 0
      %252 = vmatpush1.bf16.xpose.msra.mxu0 0
      %253 = vmatprep.subr.bf16.mxu0 0
      %254 = vmatpush1.bf16.xpose.msra.mxu0 0
      %255 = vmatprep.subr.bf16.mxu0 0
      %256 = vmatpush1.bf16.xpose.msra.mxu0 0
      %257 = vmatprep.subr.bf16.mxu0 0
      %258 = vmatpush1.bf16.xpose.msra.mxu0 0
      %259 = vmatprep.subr.bf16.mxu0 0
      %260 = vmatpush1.bf16.xpose.msra.mxu0 0
      %261 = vmatprep.subr.bf16.mxu0 0
      %262 = vmatpush1.bf16.xpose.msra.mxu0 %v245
      %263 = vmatprep.subr.bf16.mxu0 0
      %264 = vmatpush2.bf16.xpose.msra.mxu0 0
      %265 = vmatprep.subr.bf16.mxu0 0
      %266 = vmatpush2.bf16.xpose.msra.mxu0 0
      %267 = vmatprep.subr.bf16.mxu0 0
      %268 = vmatpush2.bf16.xpose.msra.mxu0 0
      %269 = vmatprep.subr.bf16.mxu0 0
      %270 = vmatpush2.bf16.xpose.msra.mxu0 0
      %271 = vmatprep.subr.bf16.mxu0 0
      %272 = vmatpush2.bf16.xpose.msra.mxu0 0
      %273 = vmatprep.subr.bf16.mxu0 0
      %274 = vmatpush2.bf16.xpose.msra.mxu0 0
      %275 = vmatprep.subr.bf16.mxu0 0
      %276 = vmatpush2.bf16.xpose.msra.mxu0 0
      %277 = vmatprep.subr.bf16.mxu0 0
      %278 = vmatpush2.bf16.xpose.msra.mxu0 0
      %279 = vmatprep.mubr.bf16.mxu0 0
      %280 = vmatmul.mubr.bf16.gmra.mxu0 %v242
      %v281 = vpop.f32.mrf.mxu0
      %v282 = vadd.f32 0.0, %v281
      %v283 = vpop.f32.mrf.mxu0
      %v284 = vpop.f32.mrf.mxu0
      %v285 = vpop.f32.mrf.mxu0
      %286 = vdwg.mxu0
      %v287 = vsel %vm168, %v282, -inf
      %288 = vmax.xlane.f32.xlu0 %v287
      %v289 = vpop.xlane.xlu0 %288
      %v290 = vsub.f32 %v282, %v289
      %v291 = vmul.f32 %v290, 1.442695
      %v292 = vpow.pop %v291
      %v293 = vsel %vm168, %v292, 0.0
      %294 = vadd.xlane.f32.xlu0 %v293
      %v295 = vpop.xlane.xlu0 %294
      %v296 = vrcp.pop %v295
      %v297 = vmul.f32 %v292, %v296
      %v298 = vpack.c.bf16 %v297, %v297
      %299 = vrot.lane.b32.xlu0 %v118, 48
      %v300 = vpop.permute.xlu0 %299
      %v302 = vsel %vm183, %v298, 0
      %v305 = vand.u32 %v300, %v190
      %307 = vmatprep.subr.bf16.mxu0 0
      %308 = vmatpush1.bf16.msra.mxu0 0
      %309 = vmatprep.subr.bf16.mxu0 0
      %310 = vmatpush1.bf16.msra.mxu0 0
      %311 = vmatprep.subr.bf16.mxu0 0
      %312 = vmatpush1.bf16.msra.mxu0 0
      %313 = vmatprep.subr.bf16.mxu0 0
      %314 = vmatpush1.bf16.msra.mxu0 0
      %315 = vmatprep.subr.bf16.mxu0 0
      %316 = vmatpush1.bf16.msra.mxu0 0
      %317 = vmatprep.subr.bf16.mxu0 0
      %318 = vmatpush1.bf16.msra.mxu0 0
      %319 = vmatprep.subr.bf16.mxu0 0
      %320 = vmatpush1.bf16.msra.mxu0 0
      %321 = vmatprep.subr.bf16.mxu0 0
      %322 = vmatpush1.bf16.msra.mxu0 %v305
      %323 = vmatprep.subr.bf16.mxu0 0
      %324 = vmatpush2.bf16.msra.mxu0 0
      %325 = vmatprep.subr.bf16.mxu0 0
      %326 = vmatpush2.bf16.msra.mxu0 0
      %327 = vmatprep.subr.bf16.mxu0 0
      %328 = vmatpush2.bf16.msra.mxu0 0
      %329 = vmatprep.subr.bf16.mxu0 0
      %330 = vmatpush2.bf16.msra.mxu0 0
      %331 = vmatprep.subr.bf16.mxu0 0
      %332 = vmatpush2.bf16.msra.mxu0 0
      %333 = vmatprep.subr.bf16.mxu0 0
      %334 = vmatpush2.bf16.msra.mxu0 0
      %335 = vmatprep.subr.bf16.mxu0 0
      %336 = vmatpush2.bf16.msra.mxu0 0
      %337 = vmatprep.subr.bf16.mxu0 0
      %338 = vmatpush2.bf16.msra.mxu0 0
      %339 = vmatprep.mubr.bf16.mxu0 0
      %340 = vmatmul.mubr.bf16.gmra.mxu0 %v302
      %v341 = vpop.f32.mrf.mxu0
      %v342 = vadd.f32 0.0, %v341
      %v343 = vpop.f32.mrf.mxu0
      %v344 = vpop.f32.mrf.mxu0
      %v345 = vpop.f32.mrf.mxu0
      %346 = vdwg.mxu0
      %348 = vrot.lane.b32.xlu0 %v342, 16
      %v349 = vpop.permute.xlu0 %348
      %v351 = vsel %vm121, %v229, %v349
      %v352 = vpack.c.bf16 %v351, %v351
      %vm353 = vcmask 256000
      %vm354 = vsmask.f32 2304
      %vm355 = vmand %vm353, %vm354
      %v356 = vld [vmem:[%s111] sm:$0x7]
      %v357 = vsel %vm355, %v352, %v356
      %358 = vst [vmem:[%s111] sm:$0x7] %v357
      %p359 = scmp.lt.s32.totalorder %s12, 1
      %s360 = scalar_select %p359, %s12, 1
      %s361 = smul.addr %s360, 4
      %s362 = scalar_lea.vmem %s1, %s361
      // Predicated region
      $region25: #{_lambda_.28} parent=23 // pred_check
        %p363 = pneg %p56
      $region26: #{_lambda_.28} parent=23 // pred_check_branch
        %365 = sbr.rel (%p363) target = $region28
      $region27: #{_lambda_.28} parent=23 // pred_region
        _
      $region28: #{_lambda_.28} parent=23 // pred_fallthru
        _
    $region24: #{_lambda_.28} parent=5 // pred_fallthru
      _
    %p366 = scmp.le.s32.totalorder 2, %s7
    // Predicated region
    $region29: #{_lambda_.28} parent=5 // pred_check
      %p367 = pneg %p366
    $region30: #{_lambda_.28} parent=5 // pred_check_branch
      %369 = sbr.rel (%p367) target = $region32
    $region31: #{_lambda_.28} parent=5 // pred_region
      %s370 = ssub.s32 %s7, 2
      // Predicated region
      $region33: #{_lambda_.28} parent=31 // pred_check
        %p371 = pneg %p62
      $region34: #{_lambda_.28} parent=31 // pred_check_branch
        %373 = sbr.rel (%p371) target = $region36
      $region35: #{_lambda_.28} parent=31 // pred_region
        %p374 = scmp.lt.s32.totalorder %s13, 1
        %s375 = scalar_select %p374, %s13, 1
        %s376 = smul.addr %s375, 4
        %s377 = scalar_lea.vmem %s1, %s376
      $region36: #{_lambda_.28} parent=31 // pred_fallthru
        _
    $region32: #{_lambda_.28} parent=5 // pred_fallthru
      _
  $region6: #{_lambda_.28} parent=0 // loop_footer
    %s11 = sadd.s32 1, %s7
  $region7: #{_lambda_.28} parent=0 // loop_footer_branch
    %6 = sbr.rel target = $region3
  $region8: #{_lambda_.28} parent=0 // loop_exit
    _

// kernel: _lambda_.29
$region0: #{_lambda_.29}
  #allocation0 [shape = 'u32[]', space=smem, size = 0x4, offset = 0x4, fixed_abs, tag = 'smem constant byte address 0x4 - core index']
  #allocation1 [shape = 'u32[144,128]{1,0:T(1,128)}', space=vmem, size = 0x12000, scoped, tag = 'internal scratch']
  %s0 = inlined_call_operand.vmem [shape: bf16[10,32], index: 0, kind: input, shape index: {}]
  %s1 = inlined_call_operand.vmem [shape: bf16[32,32], index: 1, kind: input, shape index: {}]
  %s2 = inlined_call_operand.vmem [shape: f32[1,32], index: 2, kind: input, shape index: {}]
  %s3 = inlined_call_operand.vmem [shape: bf16[10,32], index: 3, kind: input, shape index: {}]
  %s4 = inlined_call_operand.vmem [shape: bf16[10,32], index: 4, kind: output, shape index: {}]
  %s5 = sld [smem:[#allocation0]]
  $region26: #{_lambda_.29} parent=0
    _
  %s7 = ssub.s32 1, %s5
  %s8 = scalar_select 0, %s7, %s5
  // Predicated region
  $region2: #{_lambda_.29} parent=0 // pred_check
    _
  $region3: #{_lambda_.29} parent=0 // pred_check_branch
    %10 = sbr.rel (0) target = $region5
  $region4: #{_lambda_.29} parent=0 // pred_region
    _
  $region5: #{_lambda_.29} parent=0 // pred_fallthru
    _
  // Predicated region
  $region6: #{_lambda_.29} parent=0 // pred_check
    _
  $region7: #{_lambda_.29} parent=0 // pred_check_branch
    %12 = sbr.rel (0) target = $region9
  $region8: #{_lambda_.29} parent=0 // pred_region
    _
  $region9: #{_lambda_.29} parent=0 // pred_fallthru
    _
  // Predicated region
  $region10: #{_lambda_.29} parent=0 // pred_check
    _
  $region11: #{_lambda_.29} parent=0 // pred_check_branch
    %14 = sbr.rel (0) target = $region13
  $region12: #{_lambda_.29} parent=0 // pred_region
    _
  $region13: #{_lambda_.29} parent=0 // pred_fallthru
    _
  // Predicated region
  $region14: #{_lambda_.29} parent=0 // pred_check
    _
  $region15: #{_lambda_.29} parent=0 // pred_check_branch
    %16 = sbr.rel (0) target = $region17
  $region16: #{_lambda_.29} parent=0 // pred_region
    _
  $region17: #{_lambda_.29} parent=0 // pred_fallthru
    _
  %v18 = vld [vmem:[%s0] sm:$0xf]
  %v19 = vld [vmem:[%s0 + $0x4] sm:$0xf]
  %v20 = vld [vmem:[%s1] sm:$0xf]
  %v21 = vld [vmem:[%s1 + $0x4] sm:$0xf]
  %v22 = vld [vmem:[%s1 + $0x8] sm:$0xf]
  %v23 = vld [vmem:[%s1 + $0xc] sm:$0xf]
  %v24 = vld [vmem:[%s2] sm:$0x1]
  %v26 = vlaneseq
  %v27 = vshrl.u32 %v26, 7
  %v28 = vsub.s32 0, %v27
  %v29 = vrot.slane %v24, %v28
  %v33 = vunpack.c.l.b16 %v18
  %v34 = vunpack.c.l.b16 %v19
  %v35 = vpack.c.b16 %v34, %v33
  %v40 = vunpack.c.l.b16 %v20
  %v41 = vunpack.c.l.b16 %v21
  %v42 = vunpack.c.l.b16 %v22
  %v43 = vunpack.c.l.b16 %v23
  %v44 = vpack.c.b16 %v41, %v40
  %v45 = vpack.c.b16 %v43, %v42
  %vm48 = vcmask 261120
  %v50 = vsel %vm48, %v35, 0
  %52 = vmatprep.subr.bf16.mxu0 0
  %53 = vmatpush1.bf16.msra.mxu0 0
  %54 = vmatprep.subr.bf16.mxu0 0
  %55 = vmatpush1.bf16.msra.mxu0 0
  %56 = vmatprep.subr.bf16.mxu0 0
  %57 = vmatpush1.bf16.msra.mxu0 0
  %58 = vmatprep.subr.bf16.mxu0 0
  %59 = vmatpush1.bf16.msra.mxu0 0
  %60 = vmatprep.subr.bf16.mxu0 0
  %61 = vmatpush1.bf16.msra.mxu0 0
  %62 = vmatprep.subr.bf16.mxu0 0
  %63 = vmatpush1.bf16.msra.mxu0 0
  %64 = vmatprep.subr.bf16.mxu0 0
  %65 = vmatpush1.bf16.msra.mxu0 %v45
  %66 = vmatprep.subr.bf16.mxu0 0
  %67 = vmatpush1.bf16.msra.mxu0 %v44
  %68 = vmatprep.subr.bf16.mxu0 0
  %69 = vmatpush2.bf16.msra.mxu0 0
  %70 = vmatprep.subr.bf16.mxu0 0
  %71 = vmatpush2.bf16.msra.mxu0 0
  %72 = vmatprep.subr.bf16.mxu0 0
  %73 = vmatpush2.bf16.msra.mxu0 0
  %74 = vmatprep.subr.bf16.mxu0 0
  %75 = vmatpush2.bf16.msra.mxu0 0
  %76 = vmatprep.subr.bf16.mxu0 0
  %77 = vmatpush2.bf16.msra.mxu0 0
  %78 = vmatprep.subr.bf16.mxu0 0
  %79 = vmatpush2.bf16.msra.mxu0 0
  %80 = vmatprep.subr.bf16.mxu0 0
  %81 = vmatpush2.bf16.msra.mxu0 0
  %82 = vmatprep.subr.bf16.mxu0 0
  %83 = vmatpush2.bf16.msra.mxu0 0
  %84 = vmatprep.mubr.bf16.mxu0 0
  %85 = vmatmul.mubr.bf16.gmra.mxu0 %v50
  %v86 = vpop.f32.mrf.mxu0
  %v87 = vadd.f32 %v29, %v86
  %v88 = vpop.f32.mrf.mxu0
  %v89 = vpop.f32.mrf.mxu0
  %v90 = vadd.f32 %v29, %v89
  %v91 = vpop.f32.mrf.mxu0
  %92 = vdwg.mxu0
  %v93 = vld [vmem:[%s3] sm:$0xf]
  %v94 = vld [vmem:[%s3 + $0x4] sm:$0xf]
  %v95 = vunpack.c.l.bf16 %v93
  %v96 = vunpack.c.l.bf16 %v94
  %v97 = vadd.f32 %v87, %v95
  %v98 = vadd.f32 %v90, %v96
  %v99 = vpack.c.bf16 %v98, %v97
  %v101 = vunpack.c.l.b16 %v99
  %v102 = vunpack.c.h.b16 %v99
  %v103 = vpack.c.b16 %v101, %v101
  %v104 = vpack.c.b16 %v102, %v102
  %vm107 = vcmask 257024
  %108 = vst.msk [vmem:[%s4] sm:$0xf] %vm107, %v103
  %109 = vst.msk [vmem:[%s4 + $0x4] sm:$0xf] %vm107, %v104
  // Predicated region
  $region18: #{_lambda_.29} parent=0 // pred_check
    _
  $region19: #{_lambda_.29} parent=0 // pred_check_branch
    %111 = sbr.rel (0) target = $region21
  $region20: #{_lambda_.29} parent=0 // pred_region
    _
  $region21: #{_lambda_.29} parent=0 // pred_fallthru
    _
  // Predicated region
  $region22: #{_lambda_.29} parent=0 // pred_check
    _
  $region23: #{_lambda_.29} parent=0 // pred_check_branch
    %113 = sbr.rel (0) target = $region25
  $region24: #{_lambda_.29} parent=0 // pred_region
    _
  $region25: #{_lambda_.29} parent=0 // pred_fallthru
    _

// kernel: _lambda_.30
$region0: #{_lambda_.30}
  #allocation0 [shape = 'u32[]', space=smem, size = 0x4, offset = 0x4, fixed_abs, tag = 'smem constant byte address 0x4 - core index']
  #allocation1 [shape = 'u32[144,128]{1,0:T(1,128)}', space=vmem, size = 0x12000, scoped, tag = 'internal scratch']
  %s0 = inlined_call_operand.vmem [shape: bf16[10,32], index: 0, kind: input, shape index: {}]
  %s1 = inlined_call_operand.vmem [shape: f32[1,32], index: 1, kind: input, shape index: {}]
  %s2 = inlined_call_operand.vmem [shape: f32[1,32], index: 2, kind: input, shape index: {}]
  %s3 = inlined_call_operand.vmem [shape: bf16[32,64], index: 3, kind: input, shape index: {}]
  %s4 = inlined_call_operand.vmem [shape: f32[1,64], index: 4, kind: input, shape index: {}]
  %s5 = inlined_call_operand.vmem [shape: bf16[10,64], index: 5, kind: output, shape index: {}]
  %s6 = sld [smem:[#allocation0]]
  $region30: #{_lambda_.30} parent=0
    _
  %s8 = ssub.s32 1, %s6
  %s9 = scalar_select 0, %s8, %s6
  // Predicated region
  $region2: #{_lambda_.30} parent=0 // pred_check
    _
  $region3: #{_lambda_.30} parent=0 // pred_check_branch
    %11 = sbr.rel (0) target = $region5
  $region4: #{_lambda_.30} parent=0 // pred_region
    _
  $region5: #{_lambda_.30} parent=0 // pred_fallthru
    _
  // Predicated region
  $region6: #{_lambda_.30} parent=0 // pred_check
    _
  $region7: #{_lambda_.30} parent=0 // pred_check_branch
    %13 = sbr.rel (0) target = $region9
  $region8: #{_lambda_.30} parent=0 // pred_region
    _
  $region9: #{_lambda_.30} parent=0 // pred_fallthru
    _
  // Predicated region
  $region10: #{_lambda_.30} parent=0 // pred_check
    _
  $region11: #{_lambda_.30} parent=0 // pred_check_branch
    %15 = sbr.rel (0) target = $region13
  $region12: #{_lambda_.30} parent=0 // pred_region
    _
  $region13: #{_lambda_.30} parent=0 // pred_fallthru
    _
  // Predicated region
  $region14: #{_lambda_.30} parent=0 // pred_check
    _
  $region15: #{_lambda_.30} parent=0 // pred_check_branch
    %17 = sbr.rel (0) target = $region17
  $region16: #{_lambda_.30} parent=0 // pred_region
    _
  $region17: #{_lambda_.30} parent=0 // pred_fallthru
    _
  // Predicated region
  $region18: #{_lambda_.30} parent=0 // pred_check
    _
  $region19: #{_lambda_.30} parent=0 // pred_check_branch
    %19 = sbr.rel (0) target = $region21
  $region20: #{_lambda_.30} parent=0 // pred_region
    _
  $region21: #{_lambda_.30} parent=0 // pred_fallthru
    _
  %v21 = vld [vmem:[%s0] sm:$0xf]
  %v22 = vld [vmem:[%s0 + $0x4] sm:$0xf]
  %v23 = vunpack.c.l.bf16 %v21
  %v24 = vunpack.c.l.bf16 %v22
  %vm25 = vcmask 261120
  %v26 = vsel %vm25, %v23, 0.0
  %27 = vadd.xlane.f32.xlu0 %v26
  %v28 = vpop.xlane.xlu0 %27
  %v29 = vsel %vm25, %v24, 0.0
  %30 = vadd.xlane.f32.xlu0 %v29
  %v31 = vpop.xlane.xlu0 %30
  %v32 = vrcp.pop 32.0
  %v33 = vmul.f32 %v28, %v32
  %v34 = vmul.f32 %v31, %v32
  %v35 = vsub.f32 %v23, %v33
  %v36 = vsub.f32 %v24, %v34
  %v37 = vmul.f32 %v35, %v35
  %v38 = vmul.f32 %v36, %v36
  %v39 = vsel %vm25, %v37, 0.0
  %40 = vadd.xlane.f32.xlu0 %v39
  %v41 = vpop.xlane.xlu0 %40
  %v42 = vsel %vm25, %v38, 0.0
  %43 = vadd.xlane.f32.xlu0 %v42
  %v44 = vpop.xlane.xlu0 %43
  %v45 = vmul.f32 %v41, %v32
  %v46 = vmul.f32 %v44, %v32
  %v47 = vadd.f32 %v45, 1e-05
  %v48 = vadd.f32 %v46, 1e-05
  %v49 = vrsqrt.pop %v47
  %v50 = vrsqrt.pop %v48
  %v51 = vmul.f32 %v35, %v49
  %v52 = vmul.f32 %v36, %v50
  %v53 = vld [vmem:[%s1] sm:$0x1]
  %v55 = vlaneseq
  %v56 = vshrl.u32 %v55, 7
  %v57 = vsub.s32 0, %v56
  %v58 = vrot.slane %v53, %v57
  %v60 = vmul.f32 %v51, %v58
  %v61 = vmul.f32 %v52, %v58
  %v62 = vld [vmem:[%s2] sm:$0x1]
  %v64 = vlaneseq
  %v65 = vshrl.u32 %v64, 7
  %v66 = vsub.s32 0, %v65
  %v67 = vrot.slane %v62, %v66
  %v69 = vadd.f32 %v60, %v67
  %v70 = vadd.f32 %v61, %v67
  %v71 = vpack.c.bf16 %v70, %v69
  %v72 = vld [vmem:[%s3] sm:$0xf]
  %v73 = vld [vmem:[%s3 + $0x4] sm:$0xf]
  %v74 = vld [vmem:[%s3 + $0x8] sm:$0xf]
  %v75 = vld [vmem:[%s3 + $0xc] sm:$0xf]
  %v76 = vld [vmem:[%s4] sm:$0x1]
  %v78 = vlaneseq
  %v79 = vshrl.u32 %v78, 7
  %v80 = vsub.s32 0, %v79
  %v81 = vrot.slane %v76, %v80
  %v87 = vunpack.c.l.b16 %v72
  %v88 = vunpack.c.l.b16 %v73
  %v89 = vunpack.c.l.b16 %v74
  %v90 = vunpack.c.l.b16 %v75
  %v91 = vpack.c.b16 %v88, %v87
  %v92 = vpack.c.b16 %v90, %v89
  %v96 = vsel %vm25, %v71, 0
  %98 = vmatprep.subr.bf16.mxu0 0
  %99 = vmatpush1.bf16.msra.mxu0 0
  %100 = vmatprep.subr.bf16.mxu0 0
  %101 = vmatpush1.bf16.msra.mxu0 0
  %102 = vmatprep.subr.bf16.mxu0 0
  %103 = vmatpush1.bf16.msra.mxu0 0
  %104 = vmatprep.subr.bf16.mxu0 0
  %105 = vmatpush1.bf16.msra.mxu0 0
  %106 = vmatprep.subr.bf16.mxu0 0
  %107 = vmatpush1.bf16.msra.mxu0 0
  %108 = vmatprep.subr.bf16.mxu0 0
  %109 = vmatpush1.bf16.msra.mxu0 0
  %110 = vmatprep.subr.bf16.mxu0 0
  %111 = vmatpush1.bf16.msra.mxu0 %v92
  %112 = vmatprep.subr.bf16.mxu0 0
  %113 = vmatpush1.bf16.msra.mxu0 %v91
  %114 = vmatprep.subr.bf16.mxu0 0
  %115 = vmatpush2.bf16.msra.mxu0 0
  %116 = vmatprep.subr.bf16.mxu0 0
  %117 = vmatpush2.bf16.msra.mxu0 0
  %118 = vmatprep.subr.bf16.mxu0 0
  %119 = vmatpush2.bf16.msra.mxu0 0
  %120 = vmatprep.subr.bf16.mxu0 0
  %121 = vmatpush2.bf16.msra.mxu0 0
  %122 = vmatprep.subr.bf16.mxu0 0
  %123 = vmatpush2.bf16.msra.mxu0 0
  %124 = vmatprep.subr.bf16.mxu0 0
  %125 = vmatpush2.bf16.msra.mxu0 0
  %126 = vmatprep.subr.bf16.mxu0 0
  %127 = vmatpush2.bf16.msra.mxu0 0
  %128 = vmatprep.subr.bf16.mxu0 0
  %129 = vmatpush2.bf16.msra.mxu0 0
  %130 = vmatprep.mubr.bf16.mxu0 0
  %131 = vmatmul.mubr.bf16.gmra.mxu0 %v96
  %v132 = vpop.f32.mrf.mxu0
  %v133 = vadd.f32 %v81, %v132
  %v134 = vpop.f32.mrf.mxu0
  %v135 = vpop.f32.mrf.mxu0
  %v136 = vadd.f32 %v81, %v135
  %v137 = vpop.f32.mrf.mxu0
  %138 = vdwg.mxu0
  %v139 = vmul.f32 %v133, 1.702
  %v140 = vmul.f32 %v136, 1.702
  %v141 = vxor.u32 %v139, 2147483648
  %v142 = vxor.u32 %v140, 2147483648
  %v143 = vmul.f32 %v141, 1.442695
  %v144 = vpow.pop %v143
  %v145 = vmul.f32 %v142, 1.442695
  %v146 = vpow.pop %v145
  %v147 = vadd.f32 %v144, 1.0
  %v148 = vadd.f32 %v146, 1.0
  %v149 = vrcp.pop %v147
  %v150 = vmul.f32 1.0, %v149
  %v151 = vrcp.pop %v148
  %v152 = vmul.f32 1.0, %v151
  %v153 = vmul.f32 %v133, %v150
  %v154 = vmul.f32 %v136, %v152
  %v155 = vpack.c.bf16 %v154, %v153
  %v157 = vunpack.c.l.b16 %v155
  %v158 = vunpack.c.h.b16 %v155
  %v159 = vpack.c.b16 %v157, %v157
  %v160 = vpack.c.b16 %v158, %v158
  %vm163 = vcmask 519168
  %164 = vst.msk [vmem:[%s5] sm:$0xf] %vm163, %v159
  %165 = vst.msk [vmem:[%s5 + $0x4] sm:$0xf] %vm163, %v160
  // Predicated region
  $region22: #{_lambda_.30} parent=0 // pred_check
    _
  $region23: #{_lambda_.30} parent=0 // pred_check_branch
    %167 = sbr.rel (0) target = $region25
  $region24: #{_lambda_.30} parent=0 // pred_region
    _
  $region25: #{_lambda_.30} parent=0 // pred_fallthru
    _
  // Predicated region
  $region26: #{_lambda_.30} parent=0 // pred_check
    _
  $region27: #{_lambda_.30} parent=0 // pred_check_branch
    %169 = sbr.rel (0) target = $region29
  $region28: #{_lambda_.30} parent=0 // pred_region
    _
  $region29: #{_lambda_.30} parent=0 // pred_fallthru
    _

// kernel: _lambda_.31
$region0: #{_lambda_.31}
  #allocation0 [shape = 'u32[]', space=smem, size = 0x4, offset = 0x4, fixed_abs, tag = 'smem constant byte address 0x4 - core index']
  #allocation1 [shape = 'u32[144,128]{1,0:T(1,128)}', space=vmem, size = 0x12000, scoped, tag = 'internal scratch']
  %s0 = inlined_call_operand.vmem [shape: bf16[10,64], index: 0, kind: input, shape index: {}]
  %s1 = inlined_call_operand.vmem [shape: bf16[64,32], index: 1, kind: input, shape index: {}]
  %s2 = inlined_call_operand.vmem [shape: f32[1,32], index: 2, kind: input, shape index: {}]
  %s3 = inlined_call_operand.vmem [shape: bf16[10,32], index: 3, kind: input, shape index: {}]
  %s4 = inlined_call_operand.vmem [shape: bf16[10,32], index: 4, kind: output, shape index: {}]
  %s5 = sld [smem:[#allocation0]]
  $region26: #{_lambda_.31} parent=0
    _
  %s7 = ssub.s32 1, %s5
  %s8 = scalar_select 0, %s7, %s5
  // Predicated region
  $region2: #{_lambda_.31} parent=0 // pred_check
    _
  $region3: #{_lambda_.31} parent=0 // pred_check_branch
    %10 = sbr.rel (0) target = $region5
  $region4: #{_lambda_.31} parent=0 // pred_region
    _
  $region5: #{_lambda_.31} parent=0 // pred_fallthru
    _
  // Predicated region
  $region6: #{_lambda_.31} parent=0 // pred_check
    _
  $region7: #{_lambda_.31} parent=0 // pred_check_branch
    %12 = sbr.rel (0) target = $region9
  $region8: #{_lambda_.31} parent=0 // pred_region
    _
  $region9: #{_lambda_.31} parent=0 // pred_fallthru
    _
  // Predicated region
  $region10: #{_lambda_.31} parent=0 // pred_check
    _
  $region11: #{_lambda_.31} parent=0 // pred_check_branch
    %14 = sbr.rel (0) target = $region13
  $region12: #{_lambda_.31} parent=0 // pred_region
    _
  $region13: #{_lambda_.31} parent=0 // pred_fallthru
    _
  // Predicated region
  $region14: #{_lambda_.31} parent=0 // pred_check
    _
  $region15: #{_lambda_.31} parent=0 // pred_check_branch
    %16 = sbr.rel (0) target = $region17
  $region16: #{_lambda_.31} parent=0 // pred_region
    _
  $region17: #{_lambda_.31} parent=0 // pred_fallthru
    _
  %v18 = vld [vmem:[%s0] sm:$0xf]
  %v19 = vld [vmem:[%s0 + $0x4] sm:$0xf]
  %v20 = vld [vmem:[%s1] sm:$0xf]
  %v21 = vld [vmem:[%s1 + $0x4] sm:$0xf]
  %v22 = vld [vmem:[%s1 + $0x8] sm:$0xf]
  %v23 = vld [vmem:[%s1 + $0xc] sm:$0xf]
  %v24 = vld [vmem:[%s1 + $0x10] sm:$0xf]
  %v25 = vld [vmem:[%s1 + $0x14] sm:$0xf]
  %v26 = vld [vmem:[%s1 + $0x18] sm:$0xf]
  %v27 = vld [vmem:[%s1 + $0x1c] sm:$0xf]
  %v28 = vld [vmem:[%s2] sm:$0x1]
  %v30 = vlaneseq
  %v31 = vshrl.u32 %v30, 7
  %v32 = vsub.s32 0, %v31
  %v33 = vrot.slane %v28, %v32
  %v37 = vunpack.c.l.b16 %v18
  %v38 = vunpack.c.l.b16 %v19
  %v39 = vpack.c.b16 %v38, %v37
  %v48 = vunpack.c.l.b16 %v20
  %v49 = vunpack.c.l.b16 %v21
  %v50 = vunpack.c.l.b16 %v22
  %v51 = vunpack.c.l.b16 %v23
  %v52 = vunpack.c.l.b16 %v24
  %v53 = vunpack.c.l.b16 %v25
  %v54 = vunpack.c.l.b16 %v26
  %v55 = vunpack.c.l.b16 %v27
  %v56 = vpack.c.b16 %v49, %v48
  %v57 = vpack.c.b16 %v51, %v50
  %v58 = vpack.c.b16 %v53, %v52
  %v59 = vpack.c.b16 %v55, %v54
  %vm64 = vcmask 523264
  %v66 = vsel %vm64, %v39, 0
  %68 = vmatprep.subr.bf16.mxu0 0
  %69 = vmatpush1.bf16.msra.mxu0 0
  %70 = vmatprep.subr.bf16.mxu0 0
  %71 = vmatpush1.bf16.msra.mxu0 0
  %72 = vmatprep.subr.bf16.mxu0 0
  %73 = vmatpush1.bf16.msra.mxu0 0
  %74 = vmatprep.subr.bf16.mxu0 0
  %75 = vmatpush1.bf16.msra.mxu0 0
  %76 = vmatprep.subr.bf16.mxu0 0
  %77 = vmatpush1.bf16.msra.mxu0 %v59
  %78 = vmatprep.subr.bf16.mxu0 0
  %79 = vmatpush1.bf16.msra.mxu0 %v58
  %80 = vmatprep.subr.bf16.mxu0 0
  %81 = vmatpush1.bf16.msra.mxu0 %v57
  %82 = vmatprep.subr.bf16.mxu0 0
  %83 = vmatpush1.bf16.msra.mxu0 %v56
  %84 = vmatprep.subr.bf16.mxu0 0
  %85 = vmatpush2.bf16.msra.mxu0 0
  %86 = vmatprep.subr.bf16.mxu0 0
  %87 = vmatpush2.bf16.msra.mxu0 0
  %88 = vmatprep.subr.bf16.mxu0 0
  %89 = vmatpush2.bf16.msra.mxu0 0
  %90 = vmatprep.subr.bf16.mxu0 0
  %91 = vmatpush2.bf16.msra.mxu0 0
  %92 = vmatprep.subr.bf16.mxu0 0
  %93 = vmatpush2.bf16.msra.mxu0 0
  %94 = vmatprep.subr.bf16.mxu0 0
  %95 = vmatpush2.bf16.msra.mxu0 0
  %96 = vmatprep.subr.bf16.mxu0 0
  %97 = vmatpush2.bf16.msra.mxu0 0
  %98 = vmatprep.subr.bf16.mxu0 0
  %99 = vmatpush2.bf16.msra.mxu0 0
  %100 = vmatprep.mubr.bf16.mxu0 0
  %101 = vmatmul.mubr.bf16.gmra.mxu0 %v66
  %v102 = vpop.f32.mrf.mxu0
  %v103 = vadd.f32 %v33, %v102
  %v104 = vpop.f32.mrf.mxu0
  %v105 = vpop.f32.mrf.mxu0
  %v106 = vadd.f32 %v33, %v105
  %v107 = vpop.f32.mrf.mxu0
  %108 = vdwg.mxu0
  %v109 = vld [vmem:[%s3] sm:$0xf]
  %v110 = vld [vmem:[%s3 + $0x4] sm:$0xf]
  %v111 = vunpack.c.l.bf16 %v109
  %v112 = vunpack.c.l.bf16 %v110
  %v113 = vadd.f32 %v103, %v111
  %v114 = vadd.f32 %v106, %v112
  %v115 = vpack.c.bf16 %v114, %v113
  %v117 = vunpack.c.l.b16 %v115
  %v118 = vunpack.c.h.b16 %v115
  %v119 = vpack.c.b16 %v117, %v117
  %v120 = vpack.c.b16 %v118, %v118
  %vm123 = vcmask 257024
  %124 = vst.msk [vmem:[%s4] sm:$0xf] %vm123, %v119
  %125 = vst.msk [vmem:[%s4 + $0x4] sm:$0xf] %vm123, %v120
  // Predicated region
  $region18: #{_lambda_.31} parent=0 // pred_check
    _
  $region19: #{_lambda_.31} parent=0 // pred_check_branch
    %127 = sbr.rel (0) target = $region21
  $region20: #{_lambda_.31} parent=0 // pred_region
    _
  $region21: #{_lambda_.31} parent=0 // pred_fallthru
    _
  // Predicated region
  $region22: #{_lambda_.31} parent=0 // pred_check
    _
  $region23: #{_lambda_.31} parent=0 // pred_check_branch
    %129 = sbr.rel (0) target = $region25
  $region24: #{_lambda_.31} parent=0 // pred_region
    _
  $region25: #{_lambda_.31} parent=0 // pred_fallthru
    _

// kernel: _lambda_.37
$region0: #{_lambda_.37}
  #allocation0 [shape = 'u32[]', space=smem, size = 0x4, offset = 0x4, fixed_abs, tag = 'smem constant byte address 0x4 - core index']
  #allocation1 [shape = 'u32[144,128]{1,0:T(1,128)}', space=vmem, size = 0x12000, scoped, tag = 'internal scratch']
  %s0 = inlined_call_operand.vmem [shape: bf16[2,32], index: 0, kind: input, shape index: {}]
  %s1 = inlined_call_operand.vmem [shape: f32[1,32], index: 1, kind: input, shape index: {}]
  %s2 = inlined_call_operand.vmem [shape: f32[1,32], index: 2, kind: input, shape index: {}]
  %s3 = inlined_call_operand.vmem [shape: bf16[32,16], index: 3, kind: input, shape index: {}]
  %s4 = inlined_call_operand.vmem [shape: f32[1,16], index: 4, kind: input, shape index: {}]
  %s5 = inlined_call_operand.vmem [shape: f32[2,16], index: 5, kind: output, shape index: {}]
  %s6 = sld [smem:[#allocation0]]
  $region60: #{_lambda_.37} parent=0
    _
  %s8 = ssub.s32 1, %s6
  %s9 = scalar_select 0, %s8, %s6
  $region1: #{_lambda_.37} parent=0
    #allocation2 [shape = 'u8[4096]{0}', space=vmem, size = 0x1000, scoped, tag = 'output window, operand 0, single buffered']
    // Predicated region
    $region2: #{_lambda_.37} parent=1 // pred_check
      _
    $region3: #{_lambda_.37} parent=1 // pred_check_branch
      %11 = sbr.rel (0) target = $region5
    $region4: #{_lambda_.37} parent=1 // pred_region
      _
    $region5: #{_lambda_.37} parent=1 // pred_fallthru
      _
    // Predicated region
    $region6: #{_lambda_.37} parent=1 // pred_check
      _
    $region7: #{_lambda_.37} parent=1 // pred_check_branch
      %13 = sbr.rel (0) target = $region9
    $region8: #{_lambda_.37} parent=1 // pred_region
      _
    $region9: #{_lambda_.37} parent=1 // pred_fallthru
      _
    // Predicated region
    $region10: #{_lambda_.37} parent=1 // pred_check
      _
    $region11: #{_lambda_.37} parent=1 // pred_check_branch
      %15 = sbr.rel (0) target = $region13
    $region12: #{_lambda_.37} parent=1 // pred_region
      _
    $region13: #{_lambda_.37} parent=1 // pred_fallthru
      _
    // Predicated region
    $region14: #{_lambda_.37} parent=1 // pred_check
      _
    $region15: #{_lambda_.37} parent=1 // pred_check_branch
      %17 = sbr.rel (0) target = $region17
    $region16: #{_lambda_.37} parent=1 // pred_region
      _
    $region17: #{_lambda_.37} parent=1 // pred_fallthru
      _
    // Predicated region
    $region18: #{_lambda_.37} parent=1 // pred_check
      _
    $region19: #{_lambda_.37} parent=1 // pred_check_branch
      %19 = sbr.rel (0) target = $region21
    $region20: #{_lambda_.37} parent=1 // pred_region
      _
    $region21: #{_lambda_.37} parent=1 // pred_fallthru
      _
    %v21 = vld [vmem:[%s0] sm:$0x1]
    %v22 = vld [vmem:[%s0 + $0x1] sm:$0x1]
    %v23 = vld [vmem:[%s0 + $0x2] sm:$0x1]
    %v24 = vld [vmem:[%s0 + $0x3] sm:$0x1]
    %v25 = vunpack.c.l.bf16 %v21
    %v26 = vunpack.c.l.bf16 %v22
    %v27 = vunpack.c.l.bf16 %v23
    %v28 = vunpack.c.l.bf16 %v24
    %v33 = vcombine.low %v25, %v26
    %v34 = vcombine.low %v27, %v28
    %v36 = vunpack.c.l.s4 1983009808
    %v37 = vunpack.c.0.s8 %v36
    %v38 = vlaneseq
    %v39 = vshrl.u32 %v38, 7
    %v40 = vsub.s32 %v37, %v39
    %v41 = vrot.slane %v33, %v40
    %v43 = vunpack.c.l.s4 1983009808
    %v44 = vunpack.c.0.s8 %v43
    %v45 = vlaneseq
    %v46 = vshrl.u32 %v45, 7
    %v47 = vsub.s32 %v44, %v46
    %v48 = vrot.slane %v34, %v47
    %v49 = vcombine.low %v41, %v48
    %vm51 = vcmask 261120
    %v52 = vsel %vm51, %v49, 0.0
    %53 = vadd.xlane.f32.xlu0 %v52
    %v54 = vpop.xlane.xlu0 %53
    %v55 = vrcp.pop 32.0
    %v56 = vmul.f32 %v54, %v55
    %v59 = vunpack.c.l.s4 269488144
    %v60 = vunpack.c.0.s8 %v59
    %v61 = vlaneseq
    %v62 = vshrl.u32 %v61, 7
    %v63 = vsub.s32 %v60, %v62
    %v64 = vrot.slane %v56, %v63
    %v66 = vunpack.c.l.s4 842150450
    %v67 = vunpack.c.0.s8 %v66
    %v68 = vlaneseq
    %v69 = vshrl.u32 %v68, 7
    %v70 = vsub.s32 %v67, %v69
    %v71 = vrot.slane %v56, %v70
    %v73 = vunpack.c.l.s4 1414812756
    %v74 = vunpack.c.0.s8 %v73
    %v75 = vlaneseq
    %v76 = vshrl.u32 %v75, 7
    %v77 = vsub.s32 %v74, %v76
    %v78 = vrot.slane %v56, %v77
    %v80 = vunpack.c.l.s4 1987475062
    %v81 = vunpack.c.0.s8 %v80
    %v82 = vlaneseq
    %v83 = vshrl.u32 %v82, 7
    %v84 = vsub.s32 %v81, %v83
    %v85 = vrot.slane %v56, %v84
    %v90 = vsub.f32 %v25, %v64
    %v91 = vsub.f32 %v26, %v71
    %v92 = vsub.f32 %v27, %v78
    %v93 = vsub.f32 %v28, %v85
    %v94 = vmul.f32 %v90, %v90
    %v95 = vmul.f32 %v91, %v91
    %v96 = vmul.f32 %v92, %v92
    %v97 = vmul.f32 %v93, %v93
    %v102 = vcombine.low %v94, %v95
    %v103 = vcombine.low %v96, %v97
    %v105 = vunpack.c.l.s4 1983009808
    %v106 = vunpack.c.0.s8 %v105
    %v107 = vlaneseq
    %v108 = vshrl.u32 %v107, 7
    %v109 = vsub.s32 %v106, %v108
    %v110 = vrot.slane %v102, %v109
    %v112 = vunpack.c.l.s4 1983009808
    %v113 = vunpack.c.0.s8 %v112
    %v114 = vlaneseq
    %v115 = vshrl.u32 %v114, 7
    %v116 = vsub.s32 %v113, %v115
    %v117 = vrot.slane %v103, %v116
    %v118 = vcombine.low %v110, %v117
    %v120 = vsel %vm51, %v118, 0.0
    %121 = vadd.xlane.f32.xlu0 %v120
    %v122 = vpop.xlane.xlu0 %121
    %v123 = vmul.f32 %v122, %v55
    %v124 = vadd.f32 %v123, 1e-05
    %v125 = vrsqrt.pop %v124
    %v128 = vunpack.c.l.s4 269488144
    %v129 = vunpack.c.0.s8 %v128
    %v130 = vlaneseq
    %v131 = vshrl.u32 %v130, 7
    %v132 = vsub.s32 %v129, %v131
    %v133 = vrot.slane %v125, %v132
    %v135 = vunpack.c.l.s4 842150450
    %v136 = vunpack.c.0.s8 %v135
    %v137 = vlaneseq
    %v138 = vshrl.u32 %v137, 7
    %v139 = vsub.s32 %v136, %v138
    %v140 = vrot.slane %v125, %v139
    %v142 = vunpack.c.l.s4 1414812756
    %v143 = vunpack.c.0.s8 %v142
    %v144 = vlaneseq
    %v145 = vshrl.u32 %v144, 7
    %v146 = vsub.s32 %v143, %v145
    %v147 = vrot.slane %v125, %v146
    %v149 = vunpack.c.l.s4 1987475062
    %v150 = vunpack.c.0.s8 %v149
    %v151 = vlaneseq
    %v152 = vshrl.u32 %v151, 7
    %v153 = vsub.s32 %v150, %v152
    %v154 = vrot.slane %v125, %v153
    %v159 = vmul.f32 %v90, %v133
    %v160 = vmul.f32 %v91, %v140
    %v161 = vmul.f32 %v92, %v147
    %v162 = vmul.f32 %v93, %v154
    %v163 = vld [vmem:[%s1] sm:$0x1]
    %v165 = vlaneseq
    %v166 = vshrl.u32 %v165, 7
    %v167 = vsub.s32 0, %v166
    %v168 = vrot.slane %v163, %v167
    %v169 = vcombine.high %v168, %v168
    %v171 = vunpack.c.l.s4 1983009808
    %v172 = vunpack.c.0.s8 %v171
    %v173 = vlaneseq
    %v174 = vshrl.u32 %v173, 7
    %v175 = vsub.s32 %v172, %v174
    %v176 = vrot.slane %v168, %v175
    %v178 = vunpack.c.l.s4 1983009808
    %v179 = vunpack.c.0.s8 %v178
    %v180 = vlaneseq
    %v181 = vshrl.u32 %v180, 7
    %v182 = vsub.s32 %v179, %v181
    %v183 = vrot.slane %v169, %v182
    %v184 = vcombine.high %v176, %v176
    %v185 = vcombine.high %v183, %v183
    %v190 = vmul.f32 %v159, %v176
    %v191 = vmul.f32 %v160, %v184
    %v192 = vmul.f32 %v161, %v183
    %v193 = vmul.f32 %v162, %v185
    %v194 = vld [vmem:[%s2] sm:$0x1]
    %v196 = vlaneseq
    %v197 = vshrl.u32 %v196, 7
    %v198 = vsub.s32 0, %v197
    %v199 = vrot.slane %v194, %v198
    %v200 = vcombine.high %v199, %v199
    %v202 = vunpack.c.l.s4 1983009808
    %v203 = vunpack.c.0.s8 %v202
    %v204 = vlaneseq
    %v205 = vshrl.u32 %v204, 7
    %v206 = vsub.s32 %v203, %v205
    %v207 = vrot.slane %v199, %v206
    %v209 = vunpack.c.l.s4 1983009808
    %v210 = vunpack.c.0.s8 %v209
    %v211 = vlaneseq
    %v212 = vshrl.u32 %v211, 7
    %v213 = vsub.s32 %v210, %v212
    %v214 = vrot.slane %v200, %v213
    %v215 = vcombine.high %v207, %v207
    %v216 = vcombine.high %v214, %v214
    %v221 = vadd.f32 %v190, %v207
    %v222 = vadd.f32 %v191, %v215
    %v223 = vadd.f32 %v192, %v214
    %v224 = vadd.f32 %v193, %v216
    %v229 = vcombine.low %v221, %v222
    %v230 = vcombine.low %v223, %v224
    %v232 = vunpack.c.l.s4 1983009808
    %v233 = vunpack.c.0.s8 %v232
    %v234 = vlaneseq
    %v235 = vshrl.u32 %v234, 7
    %v236 = vsub.s32 %v233, %v235
    %v237 = vrot.slane %v229, %v236
    %v239 = vunpack.c.l.s4 1983009808
    %v240 = vunpack.c.0.s8 %v239
    %v241 = vlaneseq
    %v242 = vshrl.u32 %v241, 7
    %v243 = vsub.s32 %v240, %v242
    %v244 = vrot.slane %v230, %v243
    %v245 = vcombine.low %v237, %v244
    %v247 = vpack.c.bf16 %v245, %v245
    %v248 = vld [vmem:[%s3] sm:$0xf]
    %v249 = vld [vmem:[%s3 + $0x4] sm:$0xf]
    %v250 = vld [vmem:[%s3 + $0x8] sm:$0xf]
    %v251 = vld [vmem:[%s3 + $0xc] sm:$0xf]
    %v252 = vld [vmem:[%s4] sm:$0x1]
    %v254 = vlaneseq
    %v255 = vshrl.u32 %v254, 7
    %v256 = vsub.s32 0, %v255
    %v257 = vrot.slane %v252, %v256
    %v263 = vunpack.c.l.b16 %v248
    %v264 = vunpack.c.l.b16 %v249
    %v265 = vunpack.c.l.b16 %v250
    %v266 = vunpack.c.l.b16 %v251
    %v267 = vpack.c.b16 %v264, %v263
    %v268 = vpack.c.b16 %v266, %v265
    %v272 = vsel %vm51, %v247, 0
    %274 = vmatprep.subr.bf16.mxu0 0
    %275 = vmatpush1.bf16.msra.mxu0 0
    %276 = vmatprep.subr.bf16.mxu0 0
    %277 = vmatpush1.bf16.msra.mxu0 0
    %278 = vmatprep.subr.bf16.mxu0 0
    %279 = vmatpush1.bf16.msra.mxu0 0
    %280 = vmatprep.subr.bf16.mxu0 0
    %281 = vmatpush1.bf16.msra.mxu0 0
    %282 = vmatprep.subr.bf16.mxu0 0
    %283 = vmatpush1.bf16.msra.mxu0 0
    %284 = vmatprep.subr.bf16.mxu0 0
    %285 = vmatpush1.bf16.msra.mxu0 0
    %286 = vmatprep.subr.bf16.mxu0 0
    %287 = vmatpush1.bf16.msra.mxu0 %v268
    %288 = vmatprep.subr.bf16.mxu0 0
    %289 = vmatpush1.bf16.msra.mxu0 %v267
    %290 = vmatprep.subr.bf16.mxu0 0
    %291 = vmatpush2.bf16.msra.mxu0 0
    %292 = vmatprep.subr.bf16.mxu0 0
    %293 = vmatpush2.bf16.msra.mxu0 0
    %294 = vmatprep.subr.bf16.mxu0 0
    %295 = vmatpush2.bf16.msra.mxu0 0
    %296 = vmatprep.subr.bf16.mxu0 0
    %297 = vmatpush2.bf16.msra.mxu0 0
    %298 = vmatprep.subr.bf16.mxu0 0
    %299 = vmatpush2.bf16.msra.mxu0 0
    %300 = vmatprep.subr.bf16.mxu0 0
    %301 = vmatpush2.bf16.msra.mxu0 0
    %302 = vmatprep.subr.bf16.mxu0 0
    %303 = vmatpush2.bf16.msra.mxu0 0
    %304 = vmatprep.subr.bf16.mxu0 0
    %305 = vmatpush2.bf16.msra.mxu0 0
    %306 = vmatprep.mubr.bf16.mxu0 0
    %307 = vmatmul.mubr.bf16.gmra.mxu0 %v272
    %v308 = vpop.f32.mrf.mxu0
    %v309 = vadd.f32 %v257, %v308
    %v310 = vpop.f32.mrf.mxu0
    %v311 = vpop.f32.mrf.mxu0
    %v312 = vpop.f32.mrf.mxu0
    %313 = vdwg.mxu0
    %vm314 = vcmask 130048
    %315 = vst.msk [vmem:[#allocation2] sm:$0xff] %vm314, %v309
    // Predicated region
    $region22: #{_lambda_.37} parent=1 // pred_check
      _
    $region23: #{_lambda_.37} parent=1 // pred_check_branch
      %317 = sbr.rel (0) target = $region25
    $region24: #{_lambda_.37} parent=1 // pred_region
      // Predicated region
      $region26: #{_lambda_.37} parent=24 // pred_check
        _
      $region27: #{_lambda_.37} parent=24 // pred_check_branch
        %319 = sbr.rel (0) target = $region29
      $region28: #{_lambda_.37} parent=24 // pred_region
        // Predicated region
        $region30: #{_lambda_.37} parent=28 // pred_check
          _
        $region31: #{_lambda_.37} parent=28 // pred_check_branch
          %321 = sbr.rel target = $region33
        $region32: #{_lambda_.37} parent=28 // pred_region
          // Predicated region
          $region45: #{_lambda_.37} parent=32 // pred_check
            _
          $region46: #{_lambda_.37} parent=32 // pred_check_branch
            %337 = sbr.rel (0) target = $region48
          $region47: #{_lambda_.37} parent=32 // pred_region
            %s339 = ssub.s32 4, 1
            loop: start=0, step=1, limit=1
            $region49: #{_lambda_.37} parent=47 // loop_pre_header
              _
            $region50: #{_lambda_.37} parent=47 // loop_header
              %s341 = sphi 0, %s345
              %p342 = scmp.ge.s32.totalorder %s341, 1
              %s346 = sphi [#allocation2], [#allocation2]
              %s347 = sphi %s5, %s5
            $region51: #{_lambda_.37} parent=47 // loop_header_branch
              %344 = sbr.rel (%p342) target = $region55
            $region52: #{_lambda_.37} parent=47 // loop_body
              %v348 = vld [vmem:[%s346] sm:%s339]
              %349 = vst [vmem:[%s347] sm:%s339] %v348
            $region53: #{_lambda_.37} parent=47 // loop_footer
              %s345 = sadd.s32 1, %s341
            $region54: #{_lambda_.37} parent=47 // loop_footer_branch
              %340 = sbr.rel target = $region50
            $region55: #{_lambda_.37} parent=47 // loop_exit
              _
          $region48: #{_lambda_.37} parent=32 // pred_fallthru
            _
        $region33: #{_lambda_.37} parent=28 // pred_fallthru
          _
        // Predicated region
        $region34: #{_lambda_.37} parent=28 // pred_check
          _
        $region35: #{_lambda_.37} parent=28 // pred_check_branch
          %323 = sbr.rel (0) target = $region37
        $region36: #{_lambda_.37} parent=28 // pred_region
          %s325 = ssub.s32 4, 1
          loop: start=0, step=1, limit=1
          $region38: #{_lambda_.37} parent=36 // loop_pre_header
            _
          $region39: #{_lambda_.37} parent=36 // loop_header
            %s327 = sphi 0, %s331
            %p328 = scmp.ge.s32.totalorder %s327, 1
            %s332 = sphi [#allocation2], [#allocation2]
            %s333 = sphi %s5, %s5
          $region40: #{_lambda_.37} parent=36 // loop_header_branch
            %330 = sbr.rel (%p328) target = $region44
          $region41: #{_lambda_.37} parent=36 // loop_body
            %v334 = vld [vmem:[%s332] sm:%s325]
            %335 = vst [vmem:[%s333] sm:%s325] %v334
          $region42: #{_lambda_.37} parent=36 // loop_footer
            %s331 = sadd.s32 1, %s327
          $region43: #{_lambda_.37} parent=36 // loop_footer_branch
            %326 = sbr.rel target = $region39
          $region44: #{_lambda_.37} parent=36 // loop_exit
            _
        $region37: #{_lambda_.37} parent=28 // pred_fallthru
          _
      $region29: #{_lambda_.37} parent=24 // pred_fallthru
        _
      %350 = vnop
    $region25: #{_lambda_.37} parent=1 // pred_fallthru
      _
    // Predicated region
    $region56: #{_lambda_.37} parent=1 // pred_check
      _
    $region57: #{_lambda_.37} parent=1 // pred_check_branch
      %352 = sbr.rel (0) target = $region59
    $region58: #{_lambda_.37} parent=1 // pred_region
      _
    $region59: #{_lambda_.37} parent=1 // pred_fallthru
      _

// kernel: _lambda_.38
$region0: #{_lambda_.38}
  #allocation0 [shape = 'u32[]', space=smem, size = 0x4, offset = 0x4, fixed_abs, tag = 'smem constant byte address 0x4 - core index']
  #allocation1 [shape = 'u32[144,128]{1,0:T(1,128)}', space=vmem, size = 0x12000, scoped, tag = 'internal scratch']
  %s0 = inlined_call_operand.vmem [shape: bf16[16,32], index: 0, kind: input, shape index: {}]
  %s1 = inlined_call_operand.vmem [shape: f32[1,32], index: 1, kind: input, shape index: {}]
  %s2 = inlined_call_operand.vmem [shape: f32[1,32], index: 2, kind: input, shape index: {}]
  %s3 = inlined_call_operand.vmem [shape: bf16[32,96], index: 3, kind: input, shape index: {}]
  %s4 = inlined_call_operand.vmem [shape: f32[1,96], index: 4, kind: input, shape index: {}]
  %s5 = inlined_call_operand.vmem [shape: bf16[16,96], index: 5, kind: output, shape index: {}]
  %s6 = sld [smem:[#allocation0]]
  $region30: #{_lambda_.38} parent=0
    _
  %s8 = ssub.s32 1, %s6
  %s9 = scalar_select 0, %s8, %s6
  // Predicated region
  $region2: #{_lambda_.38} parent=0 // pred_check
    _
  $region3: #{_lambda_.38} parent=0 // pred_check_branch
    %11 = sbr.rel (0) target = $region5
  $region4: #{_lambda_.38} parent=0 // pred_region
    _
  $region5: #{_lambda_.38} parent=0 // pred_fallthru
    _
  // Predicated region
  $region6: #{_lambda_.38} parent=0 // pred_check
    _
  $region7: #{_lambda_.38} parent=0 // pred_check_branch
    %13 = sbr.rel (0) target = $region9
  $region8: #{_lambda_.38} parent=0 // pred_region
    _
  $region9: #{_lambda_.38} parent=0 // pred_fallthru
    _
  // Predicated region
  $region10: #{_lambda_.38} parent=0 // pred_check
    _
  $region11: #{_lambda_.38} parent=0 // pred_check_branch
    %15 = sbr.rel (0) target = $region13
  $region12: #{_lambda_.38} parent=0 // pred_region
    _
  $region13: #{_lambda_.38} parent=0 // pred_fallthru
    _
  // Predicated region
  $region14: #{_lambda_.38} parent=0 // pred_check
    _
  $region15: #{_lambda_.38} parent=0 // pred_check_branch
    %17 = sbr.rel (0) target = $region17
  $region16: #{_lambda_.38} parent=0 // pred_region
    _
  $region17: #{_lambda_.38} parent=0 // pred_fallthru
    _
  // Predicated region
  $region18: #{_lambda_.38} parent=0 // pred_check
    _
  $region19: #{_lambda_.38} parent=0 // pred_check_branch
    %19 = sbr.rel (0) target = $region21
  $region20: #{_lambda_.38} parent=0 // pred_region
    _
  $region21: #{_lambda_.38} parent=0 // pred_fallthru
    _
  %v21 = vld [vmem:[%s0] sm:$0xf]
  %v22 = vld [vmem:[%s0 + $0x4] sm:$0xf]
  %v23 = vunpack.c.l.bf16 %v21
  %v24 = vunpack.c.l.bf16 %v22
  %vm25 = vcmask 261120
  %v26 = vsel %vm25, %v23, 0.0
  %27 = vadd.xlane.f32.xlu0 %v26
  %v28 = vpop.xlane.xlu0 %27
  %v29 = vsel %vm25, %v24, 0.0
  %30 = vadd.xlane.f32.xlu0 %v29
  %v31 = vpop.xlane.xlu0 %30
  %v32 = vrcp.pop 32.0
  %v33 = vmul.f32 %v28, %v32
  %v34 = vmul.f32 %v31, %v32
  %v35 = vsub.f32 %v23, %v33
  %v36 = vsub.f32 %v24, %v34
  %v37 = vmul.f32 %v35, %v35
  %v38 = vmul.f32 %v36, %v36
  %v39 = vsel %vm25, %v37, 0.0
  %40 = vadd.xlane.f32.xlu0 %v39
  %v41 = vpop.xlane.xlu0 %40
  %v42 = vsel %vm25, %v38, 0.0
  %43 = vadd.xlane.f32.xlu0 %v42
  %v44 = vpop.xlane.xlu0 %43
  %v45 = vmul.f32 %v41, %v32
  %v46 = vmul.f32 %v44, %v32
  %v47 = vadd.f32 %v45, 1e-05
  %v48 = vadd.f32 %v46, 1e-05
  %v49 = vrsqrt.pop %v47
  %v50 = vrsqrt.pop %v48
  %v51 = vmul.f32 %v35, %v49
  %v52 = vmul.f32 %v36, %v50
  %v53 = vld [vmem:[%s1] sm:$0x1]
  %v55 = vlaneseq
  %v56 = vshrl.u32 %v55, 7
  %v57 = vsub.s32 0, %v56
  %v58 = vrot.slane %v53, %v57
  %v60 = vmul.f32 %v51, %v58
  %v61 = vmul.f32 %v52, %v58
  %v62 = vld [vmem:[%s2] sm:$0x1]
  %v64 = vlaneseq
  %v65 = vshrl.u32 %v64, 7
  %v66 = vsub.s32 0, %v65
  %v67 = vrot.slane %v62, %v66
  %v69 = vadd.f32 %v60, %v67
  %v70 = vadd.f32 %v61, %v67
  %v71 = vpack.c.bf16 %v70, %v69
  %v72 = vld [vmem:[%s3] sm:$0xf]
  %v73 = vld [vmem:[%s3 + $0x4] sm:$0xf]
  %v74 = vld [vmem:[%s3 + $0x8] sm:$0xf]
  %v75 = vld [vmem:[%s3 + $0xc] sm:$0xf]
  %v76 = vld [vmem:[%s4] sm:$0x1]
  %v78 = vlaneseq
  %v79 = vshrl.u32 %v78, 7
  %v80 = vsub.s32 0, %v79
  %v81 = vrot.slane %v76, %v80
  %v87 = vunpack.c.l.b16 %v72
  %v88 = vunpack.c.l.b16 %v73
  %v89 = vunpack.c.l.b16 %v74
  %v90 = vunpack.c.l.b16 %v75
  %v91 = vpack.c.b16 %v88, %v87
  %v92 = vpack.c.b16 %v90, %v89
  %v96 = vsel %vm25, %v71, 0
  %98 = vmatprep.subr.bf16.mxu0 0
  %99 = vmatpush1.bf16.msra.mxu0 0
  %100 = vmatprep.subr.bf16.mxu0 0
  %101 = vmatpush1.bf16.msra.mxu0 0
  %102 = vmatprep.subr.bf16.mxu0 0
  %103 = vmatpush1.bf16.msra.mxu0 0
  %104 = vmatprep.subr.bf16.mxu0 0
  %105 = vmatpush1.bf16.msra.mxu0 0
  %106 = vmatprep.subr.bf16.mxu0 0
  %107 = vmatpush1.bf16.msra.mxu0 0
  %108 = vmatprep.subr.bf16.mxu0 0
  %109 = vmatpush1.bf16.msra.mxu0 0
  %110 = vmatprep.subr.bf16.mxu0 0
  %111 = vmatpush1.bf16.msra.mxu0 %v92
  %112 = vmatprep.subr.bf16.mxu0 0
  %113 = vmatpush1.bf16.msra.mxu0 %v91
  %114 = vmatprep.subr.bf16.mxu0 0
  %115 = vmatpush2.bf16.msra.mxu0 0
  %116 = vmatprep.subr.bf16.mxu0 0
  %117 = vmatpush2.bf16.msra.mxu0 0
  %118 = vmatprep.subr.bf16.mxu0 0
  %119 = vmatpush2.bf16.msra.mxu0 0
  %120 = vmatprep.subr.bf16.mxu0 0
  %121 = vmatpush2.bf16.msra.mxu0 0
  %122 = vmatprep.subr.bf16.mxu0 0
  %123 = vmatpush2.bf16.msra.mxu0 0
  %124 = vmatprep.subr.bf16.mxu0 0
  %125 = vmatpush2.bf16.msra.mxu0 0
  %126 = vmatprep.subr.bf16.mxu0 0
  %127 = vmatpush2.bf16.msra.mxu0 0
  %128 = vmatprep.subr.bf16.mxu0 0
  %129 = vmatpush2.bf16.msra.mxu0 0
  %130 = vmatprep.mubr.bf16.mxu0 0
  %131 = vmatmul.mubr.bf16.gmra.mxu0 %v96
  %v132 = vpop.f32.mrf.mxu0
  %v133 = vadd.f32 %v81, %v132
  %v134 = vpop.f32.mrf.mxu0
  %v135 = vpop.f32.mrf.mxu0
  %v136 = vadd.f32 %v81, %v135
  %v137 = vpop.f32.mrf.mxu0
  %138 = vdwg.mxu0
  %v139 = vpack.c.bf16 %v136, %v133
  %v141 = vunpack.c.l.b16 %v139
  %v142 = vunpack.c.h.b16 %v139
  %v143 = vpack.c.b16 %v141, %v141
  %v144 = vpack.c.b16 %v142, %v142
  %vm147 = vcmask 781312
  %148 = vst.msk [vmem:[%s5] sm:$0xf] %vm147, %v143
  %149 = vst.msk [vmem:[%s5 + $0x4] sm:$0xf] %vm147, %v144
  // Predicated region
  $region22: #{_lambda_.38} parent=0 // pred_check
    _
  $region23: #{_lambda_.38} parent=0 // pred_check_branch
    %151 = sbr.rel (0) target = $region25
  $region24: #{_lambda_.38} parent=0 // pred_region
    _
  $region25: #{_lambda_.38} parent=0 // pred_fallthru
    _
  // Predicated region
  $region26: #{_lambda_.38} parent=0 // pred_check
    _
  $region27: #{_lambda_.38} parent=0 // pred_check_branch
    %153 = sbr.rel (0) target = $region29
  $region28: #{_lambda_.38} parent=0 // pred_region
    _
  $region29: #{_lambda_.38} parent=0 // pred_fallthru
    _

// kernel: _lambda_.39
$region0: #{_lambda_.39}
  #allocation0 [shape = 'u32[]', space=smem, size = 0x4, offset = 0x4, fixed_abs, tag = 'smem constant byte address 0x4 - core index']
  #allocation1 [shape = 'u32[144,128]{1,0:T(1,128)}', space=vmem, size = 0x12000, scoped, tag = 'internal scratch']
  %s0 = inlined_call_operand.vmem [shape: bf16[2,8,96], index: 0, kind: input, shape index: {}]
  %s1 = inlined_call_operand.vmem [shape: f32[2,1,8], index: 1, kind: input, shape index: {}]
  %s2 = inlined_call_operand.vmem [shape: bf16[2,8,32], index: 2, kind: output, shape index: {}]
  %s3 = sld [smem:[#allocation0]]
  $region41: #{_lambda_.39} parent=0
    _
  %s5 = ssub.s32 1, %s3
  %s6 = scalar_select 0, %s5, %s3
  loop: start=0, step=1, limit=4
  $region2: #{_lambda_.39} parent=0 // loop_pre_header
    _
  $region3: #{_lambda_.39} parent=0 // loop_header
    %s8 = sphi 0, %s12
    %p9 = scmp.ge.s32.totalorder %s8, 4
    %s18 = sphi 0, %s20
    %s21 = sphi 0, %s18
    %s22 = sphi 0, %s21
    %s38 = sphi 0, %s22
    %s44 = sphi 0, %s46
    %s47 = sphi 0, %s44
    %s48 = sphi 0, %s47
    %s64 = sphi 0, %s48
    %s70 = sphi 0, %s72
    %s73 = sphi 0, %s70
    %s74 = sphi 0, %s73
    %s90 = sphi 0, %s74
  $region4: #{_lambda_.39} parent=0 // loop_header_branch
    %11 = sbr.rel (%p9) target = $region8
  $region5: #{_lambda_.39} parent=0 // loop_body
    %s13 = ssub.s32 %s8, 1
    %s14 = ssub.s32 %s8, 2
    %s15 = sadd.s32 %s8, 1
    %s16 = ssub.s32 %s8, %s15
    %p17 = scmp.eq.s32.totalorder %s16, 0
    %s19 = sadd.s32 %s18, 1
    %s20 = scalar_select %p17, %s18, %s19
    %p23 = pneg %p17
    %p24 = scmp.eq.s32.totalorder %s8, 1
    %p25 = por %p23, %p24
    %p26 = scmp.ne.s32.totalorder %s18, %s21
    %p27 = scmp.eq.s32.totalorder %s8, 0
    %p28 = por %p26, %p27
    %p29 = scmp.ne.s32.totalorder %s18, %s21
    %p30 = scmp.eq.s32.totalorder %s13, 1
    %p31 = por %p29, %p30
    %p32 = scmp.ne.s32.totalorder %s21, %s22
    %p33 = scmp.eq.s32.totalorder %s13, 0
    %p34 = por %p32, %p33
    %p35 = scmp.ne.s32.totalorder %s21, %s22
    %p36 = scmp.eq.s32.totalorder %s14, 1
    %p37 = por %p35, %p36
    %p39 = scmp.ne.s32.totalorder %s22, %s38
    %p40 = scmp.eq.s32.totalorder %s14, 0
    %p41 = por %p39, %p40
    %s42 = ssub.s32 %s8, %s15
    %p43 = scmp.eq.s32.totalorder %s42, 0
    %s45 = sadd.s32 %s44, 1
    %s46 = scalar_select %p43, %s44, %s45
    %p49 = pneg %p43
    %p50 = scmp.eq.s32.totalorder %s8, 1
    %p51 = por %p49, %p50
    %p52 = scmp.ne.s32.totalorder %s44, %s47
    %p53 = scmp.eq.s32.totalorder %s8, 0
    %p54 = por %p52, %p53
    %p55 = scmp.ne.s32.totalorder %s44, %s47
    %p56 = scmp.eq.s32.totalorder %s13, 1
    %p57 = por %p55, %p56
    %p58 = scmp.ne.s32.totalorder %s47, %s48
    %p59 = scmp.eq.s32.totalorder %s13, 0
    %p60 = por %p58, %p59
    %p61 = scmp.ne.s32.totalorder %s47, %s48
    %p62 = scmp.eq.s32.totalorder %s14, 1
    %p63 = por %p61, %p62
    %p65 = scmp.ne.s32.totalorder %s48, %s64
    %p66 = scmp.eq.s32.totalorder %s14, 0
    %p67 = por %p65, %p66
    %s68 = ssub.s32 %s8, %s15
    %p69 = scmp.eq.s32.totalorder %s68, 0
    %s71 = sadd.s32 %s70, 1
    %s72 = scalar_select %p69, %s70, %s71
    %p75 = pneg %p69
    %p76 = scmp.eq.s32.totalorder %s8, 1
    %p77 = por %p75, %p76
    %p78 = scmp.ne.s32.totalorder %s70, %s73
    %p79 = scmp.eq.s32.totalorder %s8, 0
    %p80 = por %p78, %p79
    %p81 = scmp.ne.s32.totalorder %s70, %s73
    %p82 = scmp.eq.s32.totalorder %s13, 1
    %p83 = por %p81, %p82
    %p84 = scmp.ne.s32.totalorder %s73, %s74
    %p85 = scmp.eq.s32.totalorder %s13, 0
    %p86 = por %p84, %p85
    %p87 = scmp.ne.s32.totalorder %s73, %s74
    %p88 = scmp.eq.s32.totalorder %s14, 1
    %p89 = por %p87, %p88
    %p91 = scmp.ne.s32.totalorder %s74, %s90
    %p92 = scmp.eq.s32.totalorder %s14, 0
    %p93 = por %p91, %p92
    %p94 = scmp.le.s32.totalorder 1, %s8
    %p95 = scmp.lt.s32.totalorder %s8, 3
    %p96 = pnand %p94, %p95
    %p97 = pneg %p96
    // Predicated region
    $region9: #{_lambda_.39} parent=5 // pred_check
      _
    $region10: #{_lambda_.39} parent=5 // pred_check_branch
      %99 = sbr.rel (%p96) target = $region12
    $region11: #{_lambda_.39} parent=5 // pred_region
      %s100 = ssub.s32 %s8, 1
    $region12: #{_lambda_.39} parent=5 // pred_fallthru
      _
    %p101 = scmp.lt.s32.totalorder %s8, 2
    // Predicated region
    $region13: #{_lambda_.39} parent=5 // pred_check
      %p102 = pneg %p101
    $region14: #{_lambda_.39} parent=5 // pred_check_branch
      %104 = sbr.rel (%p102) target = $region16
    $region15: #{_lambda_.39} parent=5 // pred_region
      // Predicated region
      $region17: #{_lambda_.39} parent=15 // pred_check
        %p105 = pneg %p28
      $region18: #{_lambda_.39} parent=15 // pred_check_branch
        %107 = sbr.rel (%p105) target = $region20
      $region19: #{_lambda_.39} parent=15 // pred_region
        %p108 = scmp.lt.s32.totalorder %s8, 1
        %s109 = scalar_select %p108, %s8, 1
        %s110 = smul.addr %s109, 4
        %s111 = scalar_lea.vmem %s0, %s110
      $region20: #{_lambda_.39} parent=15 // pred_fallthru
        _
      // Predicated region
      $region21: #{_lambda_.39} parent=15 // pred_check
        %p112 = pneg %p54
      $region22: #{_lambda_.39} parent=15 // pred_check_branch
        %114 = sbr.rel (%p112) target = $region24
      $region23: #{_lambda_.39} parent=15 // pred_region
        %p115 = scmp.lt.s32.totalorder %s8, 1
        %s116 = scalar_select %p115, %s8, 1
        %s117 = scalar_lea.vmem %s1, %s116
      $region24: #{_lambda_.39} parent=15 // pred_fallthru
        _
    $region16: #{_lambda_.39} parent=5 // pred_fallthru
      _
    %p118 = scmp.le.s32.totalorder 1, %s8
    %p119 = scmp.lt.s32.totalorder %s8, 3
    %p120 = pnand %p118, %p119
    %p121 = pneg %p120
    // Predicated region
    $region25: #{_lambda_.39} parent=5 // pred_check
      _
    $region26: #{_lambda_.39} parent=5 // pred_check_branch
      %123 = sbr.rel (%p120) target = $region28
    $region27: #{_lambda_.39} parent=5 // pred_region
      %s124 = ssub.s32 %s8, 1
      %p125 = scmp.lt.s32.totalorder %s13, 1
      %s126 = scalar_select %p125, %s13, 1
      %s127 = smul.addr %s126, 4
      %s128 = scalar_lea.vmem %s0, %s127
      %p129 = pneg %p34
      %p130 = pneg %p31
      %p131 = scmp.lt.s32.totalorder %s13, 1
      %s132 = scalar_select %p131, %s13, 1
      %s133 = scalar_lea.vmem %s1, %s132
      %p134 = pneg %p60
      %p135 = pneg %p57
      %p136 = pneg %p86
      %p137 = pneg %p83
      %p138 = scmp.lt.s32.totalorder %s13, 1
      %s139 = scalar_select %p138, %s13, 1
      %s140 = smul.addr %s139, 4
      %s141 = scalar_lea.vmem %s2, %s140
      %p142 = scmp.lt.s32.totalorder %s13, 1
      %s143 = scalar_select %p142, %s13, 1
      %s144 = smul.addr %s143, 4
      %s145 = scalar_lea.vmem %s0, %s144
      %p146 = scmp.lt.s32.totalorder %s13, 1
      %s147 = scalar_select %p146, %s13, 1
      %s148 = scalar_lea.vmem %s1, %s147
      %p149 = scmp.lt.s32.totalorder %s13, 1
      %s150 = scalar_select %p149, %s13, 1
      %s151 = smul.addr %s150, 4
      %s152 = scalar_lea.vmem %s2, %s151
      %v155 = vlaneseq
      %v156 = vshrl.u32 %v155, 7
      %v157 = vlaneseq
      %v158 = vand.u32 %v157, 127
      %vm159 = vcmp.gt.s32.totalorder %v158, %v156
      %v160 = vsel %vm159, -1e+09, 0.0
      %v161 = vld [vmem:[%s148] sm:$0x1]
      %v162 = vsub.f32 1.0, %v161
      %v163 = vmul.f32 %v162, -1e+09
      %v165 = vlaneseq
      %v166 = vshrl.u32 %v165, 7
      %v167 = vsub.s32 0, %v166
      %v168 = vrot.slane %v163, %v167
      %v170 = vadd.f32 %v160, %v168
      %v171 = vld [vmem:[%s145] sm:$0xf]
      %v172 = vmul.bf16 %v171, 1048592000
      %v174 = vunpack.c.l.b16 %v171
      %v175 = vpack.c.b16 %v174, %v174
      %176 = vrot.lane.b32.xlu0 %v175, 96
      %v177 = vpop.permute.xlu0 %176
      %vm178 = vcmask 130048
      %v180 = vsel %vm178, %v172, 0
      %v183 = vsel %vm178, %v177, 0
      %185 = vmatprep.subr.bf16.mxu0 0
      %186 = vmatpush1.bf16.xpose.msra.mxu0 0
      %187 = vmatprep.subr.bf16.mxu0 0
      %188 = vmatpush1.bf16.xpose.msra.mxu0 0
      %189 = vmatprep.subr.bf16.mxu0 0
      %190 = vmatpush1.bf16.xpose.msra.mxu0 0
      %191 = vmatprep.subr.bf16.mxu0 0
      %192 = vmatpush1.bf16.xpose.msra.mxu0 0
      %193 = vmatprep.subr.bf16.mxu0 0
      %194 = vmatpush1.bf16.xpose.msra.mxu0 0
      %195 = vmatprep.subr.bf16.mxu0 0
      %196 = vmatpush1.bf16.xpose.msra.mxu0 0
      %197 = vmatprep.subr.bf16.mxu0 0
      %198 = vmatpush1.bf16.xpose.msra.mxu0 0
      %199 = vmatprep.subr.bf16.mxu0 0
      %200 = vmatpush1.bf16.xpose.msra.mxu0 %v183
      %201 = vmatprep.subr.bf16.mxu0 0
      %202 = vmatpush2.bf16.xpose.msra.mxu0 0
      %203 = vmatprep.subr.bf16.mxu0 0
      %204 = vmatpush2.bf16.xpose.msra.mxu0 0
      %205 = vmatprep.subr.bf16.mxu0 0
      %206 = vmatpush2.bf16.xpose.msra.mxu0 0
      %207 = vmatprep.subr.bf16.mxu0 0
      %208 = vmatpush2.bf16.xpose.msra.mxu0 0
      %209 = vmatprep.subr.bf16.mxu0 0
      %210 = vmatpush2.bf16.xpose.msra.mxu0 0
      %211 = vmatprep.subr.bf16.mxu0 0
      %212 = vmatpush2.bf16.xpose.msra.mxu0 0
      %213 = vmatprep.subr.bf16.mxu0 0
      %214 = vmatpush2.bf16.xpose.msra.mxu0 0
      %215 = vmatprep.subr.bf16.mxu0 0
      %216 = vmatpush2.bf16.xpose.msra.mxu0 0
      %217 = vmatprep.mubr.bf16.mxu0 0
      %218 = vmatmul.mubr.bf16.gmra.mxu0 %v180
      %v219 = vpop.f32.mrf.mxu0
      %v220 = vadd.f32 %v170, %v219
      %v221 = vpop.f32.mrf.mxu0
      %v222 = vpop.f32.mrf.mxu0
      %v223 = vpop.f32.mrf.mxu0
      %224 = vdwg.mxu0
      %vm225 = vcmask 64512
      %v226 = vsel %vm225, %v220, -inf
      %227 = vmax.xlane.f32.xlu0 %v226
      %v228 = vpop.xlane.xlu0 %227
      %v229 = vsub.f32 %v220, %v228
      %v230 = vmul.f32 %v229, 1.442695
      %v231 = vpow.pop %v230
      %v232 = vsel %vm225, %v231, 0.0
      %233 = vadd.xlane.f32.xlu0 %v232
      %v234 = vpop.xlane.xlu0 %233
      %v235 = vrcp.pop %v234
      %v236 = vmul.f32 %v231, %v235
      %v237 = vpack.c.bf16 %v236, %v236
      %238 = vrot.lane.b32.xlu0 %v175, 64
      %v239 = vpop.permute.xlu0 %238
      %v241 = vsel %vm225, %v237, 0
      %vm243 = vcmask 1043456
      %v245 = vsel %vm243, %v239, 0
      %247 = vmatprep.subr.bf16.mxu0 0
      %248 = vmatpush1.bf16.msra.mxu0 0
      %249 = vmatprep.subr.bf16.mxu0 0
      %250 = vmatpush1.bf16.msra.mxu0 0
      %251 = vmatprep.subr.bf16.mxu0 0
      %252 = vmatpush1.bf16.msra.mxu0 0
      %253 = vmatprep.subr.bf16.mxu0 0
      %254 = vmatpush1.bf16.msra.mxu0 0
      %255 = vmatprep.subr.bf16.mxu0 0
      %256 = vmatpush1.bf16.msra.mxu0 0
      %257 = vmatprep.subr.bf16.mxu0 0
      %258 = vmatpush1.bf16.msra.mxu0 0
      %259 = vmatprep.subr.bf16.mxu0 0
      %260 = vmatpush1.bf16.msra.mxu0 0
      %261 = vmatprep.subr.bf16.mxu0 0
      %262 = vmatpush1.bf16.msra.mxu0 %v245
      %263 = vmatprep.subr.bf16.mxu0 0
      %264 = vmatpush2.bf16.msra.mxu0 0
      %265 = vmatprep.subr.bf16.mxu0 0
      %266 = vmatpush2.bf16.msra.mxu0 0
      %267 = vmatprep.subr.bf16.mxu0 0
      %268 = vmatpush2.bf16.msra.mxu0 0
      %269 = vmatprep.subr.bf16.mxu0 0
      %270 = vmatpush2.bf16.msra.mxu0 0
      %271 = vmatprep.subr.bf16.mxu0 0
      %272 = vmatpush2.bf16.msra.mxu0 0
      %273 = vmatprep.subr.bf16.mxu0 0
      %274 = vmatpush2.bf16.msra.mxu0 0
      %275 = vmatprep.subr.bf16.mxu0 0
      %276 = vmatpush2.bf16.msra.mxu0 0
      %277 = vmatprep.subr.bf16.mxu0 0
      %278 = vmatpush2.bf16.msra.mxu0 0
      %279 = vmatprep.mubr.bf16.mxu0 0
      %280 = vmatmul.mubr.bf16.gmra.mxu0 %v241
      %v281 = vpop.f32.mrf.mxu0
      %v282 = vadd.f32 0.0, %v281
      %v283 = vpop.f32.mrf.mxu0
      %v284 = vpop.f32.mrf.mxu0
      %v285 = vpop.f32.mrf.mxu0
      %286 = vdwg.mxu0
      %v288 = vunpack.c.l.b16 %v172
      %v289 = vpack.c.b16 %v288, %v288
      %290 = vrot.lane.b32.xlu0 %v289, 112
      %v291 = vpop.permute.xlu0 %290
      %292 = vrot.lane.b32.xlu0 %v175, 80
      %v293 = vpop.permute.xlu0 %292
      %v295 = vsel %vm178, %v291, 0
      %v298 = vsel %vm178, %v293, 0
      %300 = vmatprep.subr.bf16.mxu0 0
      %301 = vmatpush1.bf16.xpose.msra.mxu0 0
      %302 = vmatprep.subr.bf16.mxu0 0
      %303 = vmatpush1.bf16.xpose.msra.mxu0 0
      %304 = vmatprep.subr.bf16.mxu0 0
      %305 = vmatpush1.bf16.xpose.msra.mxu0 0
      %306 = vmatprep.subr.bf16.mxu0 0
      %307 = vmatpush1.bf16.xpose.msra.mxu0 0
      %308 = vmatprep.subr.bf16.mxu0 0
      %309 = vmatpush1.bf16.xpose.msra.mxu0 0
      %310 = vmatprep.subr.bf16.mxu0 0
      %311 = vmatpush1.bf16.xpose.msra.mxu0 0
      %312 = vmatprep.subr.bf16.mxu0 0
      %313 = vmatpush1.bf16.xpose.msra.mxu0 0
      %314 = vmatprep.subr.bf16.mxu0 0
      %315 = vmatpush1.bf16.xpose.msra.mxu0 %v298
      %316 = vmatprep.subr.bf16.mxu0 0
      %317 = vmatpush2.bf16.xpose.msra.mxu0 0
      %318 = vmatprep.subr.bf16.mxu0 0
      %319 = vmatpush2.bf16.xpose.msra.mxu0 0
      %320 = vmatprep.subr.bf16.mxu0 0
      %321 = vmatpush2.bf16.xpose.msra.mxu0 0
      %322 = vmatprep.subr.bf16.mxu0 0
      %323 = vmatpush2.bf16.xpose.msra.mxu0 0
      %324 = vmatprep.subr.bf16.mxu0 0
      %325 = vmatpush2.bf16.xpose.msra.mxu0 0
      %326 = vmatprep.subr.bf16.mxu0 0
      %327 = vmatpush2.bf16.xpose.msra.mxu0 0
      %328 = vmatprep.subr.bf16.mxu0 0
      %329 = vmatpush2.bf16.xpose.msra.mxu0 0
      %330 = vmatprep.subr.bf16.mxu0 0
      %331 = vmatpush2.bf16.xpose.msra.mxu0 0
      %332 = vmatprep.mubr.bf16.mxu0 0
      %333 = vmatmul.mubr.bf16.gmra.mxu0 %v295
      %v334 = vpop.f32.mrf.mxu0
      %v335 = vadd.f32 %v170, %v334
      %v336 = vpop.f32.mrf.mxu0
      %v337 = vpop.f32.mrf.mxu0
      %v338 = vpop.f32.mrf.mxu0
      %339 = vdwg.mxu0
      %v340 = vsel %vm225, %v335, -inf
      %341 = vmax.xlane.f32.xlu0 %v340
      %v342 = vpop.xlane.xlu0 %341
      %v343 = vsub.f32 %v335, %v342
      %v344 = vmul.f32 %v343, 1.442695
      %v345 = vpow.pop %v344
      %v346 = vsel %vm225, %v345, 0.0
      %347 = vadd.xlane.f32.xlu0 %v346
      %v348 = vpop.xlane.xlu0 %347
      %v349 = vrcp.pop %v348
      %v350 = vmul.f32 %v345, %v349
      %v351 = vpack.c.bf16 %v350, %v350
      %352 = vrot.lane.b32.xlu0 %v175, 48
      %v353 = vpop.permute.xlu0 %352
      %v355 = vsel %vm225, %v351, 0
      %v358 = vsel %vm243, %v353, 0
      %360 = vmatprep.subr.bf16.mxu0 0
      %361 = vmatpush1.bf16.msra.mxu0 0
      %362 = vmatprep.subr.bf16.mxu0 0
      %363 = vmatpush1.bf16.msra.mxu0 0
      %364 = vmatprep.subr.bf16.mxu0 0
      %365 = vmatpush1.bf16.msra.mxu0 0
      %366 = vmatprep.subr.bf16.mxu0 0
      %367 = vmatpush1.bf16.msra.mxu0 0
      %368 = vmatprep.subr.bf16.mxu0 0
      %369 = vmatpush1.bf16.msra.mxu0 0
      %370 = vmatprep.subr.bf16.mxu0 0
      %371 = vmatpush1.bf16.msra.mxu0 0
      %372 = vmatprep.subr.bf16.mxu0 0
      %373 = vmatpush1.bf16.msra.mxu0 0
      %374 = vmatprep.subr.bf16.mxu0 0
      %375 = vmatpush1.bf16.msra.mxu0 %v358
      %376 = vmatprep.subr.bf16.mxu0 0
      %377 = vmatpush2.bf16.msra.mxu0 0
      %378 = vmatprep.subr.bf16.mxu0 0
      %379 = vmatpush2.bf16.msra.mxu0 0
      %380 = vmatprep.subr.bf16.mxu0 0
      %381 = vmatpush2.bf16.msra.mxu0 0
      %382 = vmatprep.subr.bf16.mxu0 0
      %383 = vmatpush2.bf16.msra.mxu0 0
      %384 = vmatprep.subr.bf16.mxu0 0
      %385 = vmatpush2.bf16.msra.mxu0 0
      %386 = vmatprep.subr.bf16.mxu0 0
      %387 = vmatpush2.bf16.msra.mxu0 0
      %388 = vmatprep.subr.bf16.mxu0 0
      %389 = vmatpush2.bf16.msra.mxu0 0
      %390 = vmatprep.subr.bf16.mxu0 0
      %391 = vmatpush2.bf16.msra.mxu0 0
      %392 = vmatprep.mubr.bf16.mxu0 0
      %393 = vmatmul.mubr.bf16.gmra.mxu0 %v355
      %v394 = vpop.f32.mrf.mxu0
      %v395 = vadd.f32 0.0, %v394
      %v396 = vpop.f32.mrf.mxu0
      %v397 = vpop.f32.mrf.mxu0
      %v398 = vpop.f32.mrf.mxu0
      %399 = vdwg.mxu0
      %401 = vrot.lane.b32.xlu0 %v395, 16
      %v402 = vpop.permute.xlu0 %401
      %v404 = vsel %vm178, %v282, %v402
      %v405 = vpack.c.bf16 %v404, %v404
      %vm406 = vcmask 257024
      %407 = vst.msk [vmem:[%s152] sm:$0xf] %vm406, %v405
      %p408 = scmp.lt.s32.totalorder %s13, 1
      %s409 = scalar_select %p408, %s13, 1
      %s410 = smul.addr %s409, 4
      %s411 = scalar_lea.vmem %s2, %s410
      // Predicated region
      $region29: #{_lambda_.39} parent=27 // pred_check
        %p412 = pneg %p83
      $region30: #{_lambda_.39} parent=27 // pred_check_branch
        %414 = sbr.rel (%p412) target = $region32
      $region31: #{_lambda_.39} parent=27 // pred_region
        _
      $region32: #{_lambda_.39} parent=27 // pred_fallthru
        _
    $region28: #{_lambda_.39} parent=5 // pred_fallthru
      _
    %p415 = scmp.le.s32.totalorder 2, %s8
    // Predicated region
    $region33: #{_lambda_.39} parent=5 // pred_check
      %p416 = pneg %p415
    $region34: #{_lambda_.39} parent=5 // pred_check_branch
      %418 = sbr.rel (%p416) target = $region36
    $region35: #{_lambda_.39} parent=5 // pred_region
      %s419 = ssub.s32 %s8, 2
      // Predicated region
      $region37: #{_lambda_.39} parent=35 // pred_check
        %p420 = pneg %p89
      $region38: #{_lambda_.39} parent=35 // pred_check_branch
        %422 = sbr.rel (%p420) target = $region40
      $region39: #{_lambda_.39} parent=35 // pred_region
        %p423 = scmp.lt.s32.totalorder %s14, 1
        %s424 = scalar_select %p423, %s14, 1
        %s425 = smul.addr %s424, 4
        %s426 = scalar_lea.vmem %s2, %s425
      $region40: #{_lambda_.39} parent=35 // pred_fallthru
        _
    $region36: #{_lambda_.39} parent=5 // pred_fallthru
      _
  $region6: #{_lambda_.39} parent=0 // loop_footer
    %s12 = sadd.s32 1, %s8
  $region7: #{_lambda_.39} parent=0 // loop_footer_branch
    %7 = sbr.rel target = $region3
  $region8: #{_lambda_.39} parent=0 // loop_exit
    _

// kernel: _lambda_.40
$region0: #{_lambda_.40}
  #allocation0 [shape = 'u32[]', space=smem, size = 0x4, offset = 0x4, fixed_abs, tag = 'smem constant byte address 0x4 - core index']
  #allocation1 [shape = 'u32[144,128]{1,0:T(1,128)}', space=vmem, size = 0x12000, scoped, tag = 'internal scratch']
  %s0 = inlined_call_operand.vmem [shape: bf16[16,32], index: 0, kind: input, shape index: {}]
  %s1 = inlined_call_operand.vmem [shape: bf16[32,32], index: 1, kind: input, shape index: {}]
  %s2 = inlined_call_operand.vmem [shape: f32[1,32], index: 2, kind: input, shape index: {}]
  %s3 = inlined_call_operand.vmem [shape: bf16[16,32], index: 3, kind: input, shape index: {}]
  %s4 = inlined_call_operand.vmem [shape: bf16[16,32], index: 4, kind: output, shape index: {}]
  %s5 = sld [smem:[#allocation0]]
  $region26: #{_lambda_.40} parent=0
    _
  %s7 = ssub.s32 1, %s5
  %s8 = scalar_select 0, %s7, %s5
  // Predicated region
  $region2: #{_lambda_.40} parent=0 // pred_check
    _
  $region3: #{_lambda_.40} parent=0 // pred_check_branch
    %10 = sbr.rel (0) target = $region5
  $region4: #{_lambda_.40} parent=0 // pred_region
    _
  $region5: #{_lambda_.40} parent=0 // pred_fallthru
    _
  // Predicated region
  $region6: #{_lambda_.40} parent=0 // pred_check
    _
  $region7: #{_lambda_.40} parent=0 // pred_check_branch
    %12 = sbr.rel (0) target = $region9
  $region8: #{_lambda_.40} parent=0 // pred_region
    _
  $region9: #{_lambda_.40} parent=0 // pred_fallthru
    _
  // Predicated region
  $region10: #{_lambda_.40} parent=0 // pred_check
    _
  $region11: #{_lambda_.40} parent=0 // pred_check_branch
    %14 = sbr.rel (0) target = $region13
  $region12: #{_lambda_.40} parent=0 // pred_region
    _
  $region13: #{_lambda_.40} parent=0 // pred_fallthru
    _
  // Predicated region
  $region14: #{_lambda_.40} parent=0 // pred_check
    _
  $region15: #{_lambda_.40} parent=0 // pred_check_branch
    %16 = sbr.rel (0) target = $region17
  $region16: #{_lambda_.40} parent=0 // pred_region
    _
  $region17: #{_lambda_.40} parent=0 // pred_fallthru
    _
  %v18 = vld [vmem:[%s0] sm:$0xf]
  %v19 = vld [vmem:[%s0 + $0x4] sm:$0xf]
  %v20 = vld [vmem:[%s1] sm:$0xf]
  %v21 = vld [vmem:[%s1 + $0x4] sm:$0xf]
  %v22 = vld [vmem:[%s1 + $0x8] sm:$0xf]
  %v23 = vld [vmem:[%s1 + $0xc] sm:$0xf]
  %v24 = vld [vmem:[%s2] sm:$0x1]
  %v26 = vlaneseq
  %v27 = vshrl.u32 %v26, 7
  %v28 = vsub.s32 0, %v27
  %v29 = vrot.slane %v24, %v28
  %v33 = vunpack.c.l.b16 %v18
  %v34 = vunpack.c.l.b16 %v19
  %v35 = vpack.c.b16 %v34, %v33
  %v40 = vunpack.c.l.b16 %v20
  %v41 = vunpack.c.l.b16 %v21
  %v42 = vunpack.c.l.b16 %v22
  %v43 = vunpack.c.l.b16 %v23
  %v44 = vpack.c.b16 %v41, %v40
  %v45 = vpack.c.b16 %v43, %v42
  %vm48 = vcmask 261120
  %v50 = vsel %vm48, %v35, 0
  %52 = vmatprep.subr.bf16.mxu0 0
  %53 = vmatpush1.bf16.msra.mxu0 0
  %54 = vmatprep.subr.bf16.mxu0 0
  %55 = vmatpush1.bf16.msra.mxu0 0
  %56 = vmatprep.subr.bf16.mxu0 0
  %57 = vmatpush1.bf16.msra.mxu0 0
  %58 = vmatprep.subr.bf16.mxu0 0
  %59 = vmatpush1.bf16.msra.mxu0 0
  %60 = vmatprep.subr.bf16.mxu0 0
  %61 = vmatpush1.bf16.msra.mxu0 0
  %62 = vmatprep.subr.bf16.mxu0 0
  %63 = vmatpush1.bf16.msra.mxu0 0
  %64 = vmatprep.subr.bf16.mxu0 0
  %65 = vmatpush1.bf16.msra.mxu0 %v45
  %66 = vmatprep.subr.bf16.mxu0 0
  %67 = vmatpush1.bf16.msra.mxu0 %v44
  %68 = vmatprep.subr.bf16.mxu0 0
  %69 = vmatpush2.bf16.msra.mxu0 0
  %70 = vmatprep.subr.bf16.mxu0 0
  %71 = vmatpush2.bf16.msra.mxu0 0
  %72 = vmatprep.subr.bf16.mxu0 0
  %73 = vmatpush2.bf16.msra.mxu0 0
  %74 = vmatprep.subr.bf16.mxu0 0
  %75 = vmatpush2.bf16.msra.mxu0 0
  %76 = vmatprep.subr.bf16.mxu0 0
  %77 = vmatpush2.bf16.msra.mxu0 0
  %78 = vmatprep.subr.bf16.mxu0 0
  %79 = vmatpush2.bf16.msra.mxu0 0
  %80 = vmatprep.subr.bf16.mxu0 0
  %81 = vmatpush2.bf16.msra.mxu0 0
  %82 = vmatprep.subr.bf16.mxu0 0
  %83 = vmatpush2.bf16.msra.mxu0 0
  %84 = vmatprep.mubr.bf16.mxu0 0
  %85 = vmatmul.mubr.bf16.gmra.mxu0 %v50
  %v86 = vpop.f32.mrf.mxu0
  %v87 = vadd.f32 %v29, %v86
  %v88 = vpop.f32.mrf.mxu0
  %v89 = vpop.f32.mrf.mxu0
  %v90 = vadd.f32 %v29, %v89
  %v91 = vpop.f32.mrf.mxu0
  %92 = vdwg.mxu0
  %v93 = vld [vmem:[%s3] sm:$0xf]
  %v94 = vld [vmem:[%s3 + $0x4] sm:$0xf]
  %v95 = vunpack.c.l.bf16 %v93
  %v96 = vunpack.c.l.bf16 %v94
  %v97 = vadd.f32 %v87, %v95
  %v98 = vadd.f32 %v90, %v96
  %v99 = vpack.c.bf16 %v98, %v97
  %v101 = vunpack.c.l.b16 %v99
  %v102 = vunpack.c.h.b16 %v99
  %v103 = vpack.c.b16 %v101, %v101
  %v104 = vpack.c.b16 %v102, %v102
  %vm107 = vcmask 257024
  %108 = vst.msk [vmem:[%s4] sm:$0xf] %vm107, %v103
  %109 = vst.msk [vmem:[%s4 + $0x4] sm:$0xf] %vm107, %v104
  // Predicated region
  $region18: #{_lambda_.40} parent=0 // pred_check
    _
  $region19: #{_lambda_.40} parent=0 // pred_check_branch
    %111 = sbr.rel (0) target = $region21
  $region20: #{_lambda_.40} parent=0 // pred_region
    _
  $region21: #{_lambda_.40} parent=0 // pred_fallthru
    _
  // Predicated region
  $region22: #{_lambda_.40} parent=0 // pred_check
    _
  $region23: #{_lambda_.40} parent=0 // pred_check_branch
    %113 = sbr.rel (0) target = $region25
  $region24: #{_lambda_.40} parent=0 // pred_region
    _
  $region25: #{_lambda_.40} parent=0 // pred_fallthru
    _

// kernel: _lambda_.41
$region0: #{_lambda_.41}
  #allocation0 [shape = 'u32[]', space=smem, size = 0x4, offset = 0x4, fixed_abs, tag = 'smem constant byte address 0x4 - core index']
  #allocation1 [shape = 'u32[144,128]{1,0:T(1,128)}', space=vmem, size = 0x12000, scoped, tag = 'internal scratch']
  %s0 = inlined_call_operand.vmem [shape: bf16[16,32], index: 0, kind: input, shape index: {}]
  %s1 = inlined_call_operand.vmem [shape: f32[1,32], index: 1, kind: input, shape index: {}]
  %s2 = inlined_call_operand.vmem [shape: f32[1,32], index: 2, kind: input, shape index: {}]
  %s3 = inlined_call_operand.vmem [shape: bf16[32,64], index: 3, kind: input, shape index: {}]
  %s4 = inlined_call_operand.vmem [shape: f32[1,64], index: 4, kind: input, shape index: {}]
  %s5 = inlined_call_operand.vmem [shape: bf16[16,64], index: 5, kind: output, shape index: {}]
  %s6 = sld [smem:[#allocation0]]
  $region30: #{_lambda_.41} parent=0
    _
  %s8 = ssub.s32 1, %s6
  %s9 = scalar_select 0, %s8, %s6
  // Predicated region
  $region2: #{_lambda_.41} parent=0 // pred_check
    _
  $region3: #{_lambda_.41} parent=0 // pred_check_branch
    %11 = sbr.rel (0) target = $region5
  $region4: #{_lambda_.41} parent=0 // pred_region
    _
  $region5: #{_lambda_.41} parent=0 // pred_fallthru
    _
  // Predicated region
  $region6: #{_lambda_.41} parent=0 // pred_check
    _
  $region7: #{_lambda_.41} parent=0 // pred_check_branch
    %13 = sbr.rel (0) target = $region9
  $region8: #{_lambda_.41} parent=0 // pred_region
    _
  $region9: #{_lambda_.41} parent=0 // pred_fallthru
    _
  // Predicated region
  $region10: #{_lambda_.41} parent=0 // pred_check
    _
  $region11: #{_lambda_.41} parent=0 // pred_check_branch
    %15 = sbr.rel (0) target = $region13
  $region12: #{_lambda_.41} parent=0 // pred_region
    _
  $region13: #{_lambda_.41} parent=0 // pred_fallthru
    _
  // Predicated region
  $region14: #{_lambda_.41} parent=0 // pred_check
    _
  $region15: #{_lambda_.41} parent=0 // pred_check_branch
    %17 = sbr.rel (0) target = $region17
  $region16: #{_lambda_.41} parent=0 // pred_region
    _
  $region17: #{_lambda_.41} parent=0 // pred_fallthru
    _
  // Predicated region
  $region18: #{_lambda_.41} parent=0 // pred_check
    _
  $region19: #{_lambda_.41} parent=0 // pred_check_branch
    %19 = sbr.rel (0) target = $region21
  $region20: #{_lambda_.41} parent=0 // pred_region
    _
  $region21: #{_lambda_.41} parent=0 // pred_fallthru
    _
  %v21 = vld [vmem:[%s0] sm:$0xf]
  %v22 = vld [vmem:[%s0 + $0x4] sm:$0xf]
  %v23 = vunpack.c.l.bf16 %v21
  %v24 = vunpack.c.l.bf16 %v22
  %vm25 = vcmask 261120
  %v26 = vsel %vm25, %v23, 0.0
  %27 = vadd.xlane.f32.xlu0 %v26
  %v28 = vpop.xlane.xlu0 %27
  %v29 = vsel %vm25, %v24, 0.0
  %30 = vadd.xlane.f32.xlu0 %v29
  %v31 = vpop.xlane.xlu0 %30
  %v32 = vrcp.pop 32.0
  %v33 = vmul.f32 %v28, %v32
  %v34 = vmul.f32 %v31, %v32
  %v35 = vsub.f32 %v23, %v33
  %v36 = vsub.f32 %v24, %v34
  %v37 = vmul.f32 %v35, %v35
  %v38 = vmul.f32 %v36, %v36
  %v39 = vsel %vm25, %v37, 0.0
  %40 = vadd.xlane.f32.xlu0 %v39
  %v41 = vpop.xlane.xlu0 %40
  %v42 = vsel %vm25, %v38, 0.0
  %43 = vadd.xlane.f32.xlu0 %v42
  %v44 = vpop.xlane.xlu0 %43
  %v45 = vmul.f32 %v41, %v32
  %v46 = vmul.f32 %v44, %v32
  %v47 = vadd.f32 %v45, 1e-05
  %v48 = vadd.f32 %v46, 1e-05
  %v49 = vrsqrt.pop %v47
  %v50 = vrsqrt.pop %v48
  %v51 = vmul.f32 %v35, %v49
  %v52 = vmul.f32 %v36, %v50
  %v53 = vld [vmem:[%s1] sm:$0x1]
  %v55 = vlaneseq
  %v56 = vshrl.u32 %v55, 7
  %v57 = vsub.s32 0, %v56
  %v58 = vrot.slane %v53, %v57
  %v60 = vmul.f32 %v51, %v58
  %v61 = vmul.f32 %v52, %v58
  %v62 = vld [vmem:[%s2] sm:$0x1]
  %v64 = vlaneseq
  %v65 = vshrl.u32 %v64, 7
  %v66 = vsub.s32 0, %v65
  %v67 = vrot.slane %v62, %v66
  %v69 = vadd.f32 %v60, %v67
  %v70 = vadd.f32 %v61, %v67
  %v71 = vpack.c.bf16 %v70, %v69
  %v72 = vld [vmem:[%s3] sm:$0xf]
  %v73 = vld [vmem:[%s3 + $0x4] sm:$0xf]
  %v74 = vld [vmem:[%s3 + $0x8] sm:$0xf]
  %v75 = vld [vmem:[%s3 + $0xc] sm:$0xf]
  %v76 = vld [vmem:[%s4] sm:$0x1]
  %v78 = vlaneseq
  %v79 = vshrl.u32 %v78, 7
  %v80 = vsub.s32 0, %v79
  %v81 = vrot.slane %v76, %v80
  %v87 = vunpack.c.l.b16 %v72
  %v88 = vunpack.c.l.b16 %v73
  %v89 = vunpack.c.l.b16 %v74
  %v90 = vunpack.c.l.b16 %v75
  %v91 = vpack.c.b16 %v88, %v87
  %v92 = vpack.c.b16 %v90, %v89
  %v96 = vsel %vm25, %v71, 0
  %98 = vmatprep.subr.bf16.mxu0 0
  %99 = vmatpush1.bf16.msra.mxu0 0
  %100 = vmatprep.subr.bf16.mxu0 0
  %101 = vmatpush1.bf16.msra.mxu0 0
  %102 = vmatprep.subr.bf16.mxu0 0
  %103 = vmatpush1.bf16.msra.mxu0 0
  %104 = vmatprep.subr.bf16.mxu0 0
  %105 = vmatpush1.bf16.msra.mxu0 0
  %106 = vmatprep.subr.bf16.mxu0 0
  %107 = vmatpush1.bf16.msra.mxu0 0
  %108 = vmatprep.subr.bf16.mxu0 0
  %109 = vmatpush1.bf16.msra.mxu0 0
  %110 = vmatprep.subr.bf16.mxu0 0
  %111 = vmatpush1.bf16.msra.mxu0 %v92
  %112 = vmatprep.subr.bf16.mxu0 0
  %113 = vmatpush1.bf16.msra.mxu0 %v91
  %114 = vmatprep.subr.bf16.mxu0 0
  %115 = vmatpush2.bf16.msra.mxu0 0
  %116 = vmatprep.subr.bf16.mxu0 0
  %117 = vmatpush2.bf16.msra.mxu0 0
  %118 = vmatprep.subr.bf16.mxu0 0
  %119 = vmatpush2.bf16.msra.mxu0 0
  %120 = vmatprep.subr.bf16.mxu0 0
  %121 = vmatpush2.bf16.msra.mxu0 0
  %122 = vmatprep.subr.bf16.mxu0 0
  %123 = vmatpush2.bf16.msra.mxu0 0
  %124 = vmatprep.subr.bf16.mxu0 0
  %125 = vmatpush2.bf16.msra.mxu0 0
  %126 = vmatprep.subr.bf16.mxu0 0
  %127 = vmatpush2.bf16.msra.mxu0 0
  %128 = vmatprep.subr.bf16.mxu0 0
  %129 = vmatpush2.bf16.msra.mxu0 0
  %130 = vmatprep.mubr.bf16.mxu0 0
  %131 = vmatmul.mubr.bf16.gmra.mxu0 %v96
  %v132 = vpop.f32.mrf.mxu0
  %v133 = vadd.f32 %v81, %v132
  %v134 = vpop.f32.mrf.mxu0
  %v135 = vpop.f32.mrf.mxu0
  %v136 = vadd.f32 %v81, %v135
  %v137 = vpop.f32.mrf.mxu0
  %138 = vdwg.mxu0
  %v139 = vmul.f32 %v133, 1.702
  %v140 = vmul.f32 %v136, 1.702
  %v141 = vxor.u32 %v139, 2147483648
  %v142 = vxor.u32 %v140, 2147483648
  %v143 = vmul.f32 %v141, 1.442695
  %v144 = vpow.pop %v143
  %v145 = vmul.f32 %v142, 1.442695
  %v146 = vpow.pop %v145
  %v147 = vadd.f32 %v144, 1.0
  %v148 = vadd.f32 %v146, 1.0
  %v149 = vrcp.pop %v147
  %v150 = vmul.f32 1.0, %v149
  %v151 = vrcp.pop %v148
  %v152 = vmul.f32 1.0, %v151
  %v153 = vmul.f32 %v133, %v150
  %v154 = vmul.f32 %v136, %v152
  %v155 = vpack.c.bf16 %v154, %v153
  %v157 = vunpack.c.l.b16 %v155
  %v158 = vunpack.c.h.b16 %v155
  %v159 = vpack.c.b16 %v157, %v157
  %v160 = vpack.c.b16 %v158, %v158
  %vm163 = vcmask 519168
  %164 = vst.msk [vmem:[%s5] sm:$0xf] %vm163, %v159
  %165 = vst.msk [vmem:[%s5 + $0x4] sm:$0xf] %vm163, %v160
  // Predicated region
  $region22: #{_lambda_.41} parent=0 // pred_check
    _
  $region23: #{_lambda_.41} parent=0 // pred_check_branch
    %167 = sbr.rel (0) target = $region25
  $region24: #{_lambda_.41} parent=0 // pred_region
    _
  $region25: #{_lambda_.41} parent=0 // pred_fallthru
    _
  // Predicated region
  $region26: #{_lambda_.41} parent=0 // pred_check
    _
  $region27: #{_lambda_.41} parent=0 // pred_check_branch
    %169 = sbr.rel (0) target = $region29
  $region28: #{_lambda_.41} parent=0 // pred_region
    _
  $region29: #{_lambda_.41} parent=0 // pred_fallthru
    _

// kernel: _lambda_.42
$region0: #{_lambda_.42}
  #allocation0 [shape = 'u32[]', space=smem, size = 0x4, offset = 0x4, fixed_abs, tag = 'smem constant byte address 0x4 - core index']
  #allocation1 [shape = 'u32[144,128]{1,0:T(1,128)}', space=vmem, size = 0x12000, scoped, tag = 'internal scratch']
  %s0 = inlined_call_operand.vmem [shape: bf16[16,64], index: 0, kind: input, shape index: {}]
  %s1 = inlined_call_operand.vmem [shape: bf16[64,32], index: 1, kind: input, shape index: {}]
  %s2 = inlined_call_operand.vmem [shape: f32[1,32], index: 2, kind: input, shape index: {}]
  %s3 = inlined_call_operand.vmem [shape: bf16[16,32], index: 3, kind: input, shape index: {}]
  %s4 = inlined_call_operand.vmem [shape: bf16[16,32], index: 4, kind: output, shape index: {}]
  %s5 = sld [smem:[#allocation0]]
  $region26: #{_lambda_.42} parent=0
    _
  %s7 = ssub.s32 1, %s5
  %s8 = scalar_select 0, %s7, %s5
  // Predicated region
  $region2: #{_lambda_.42} parent=0 // pred_check
    _
  $region3: #{_lambda_.42} parent=0 // pred_check_branch
    %10 = sbr.rel (0) target = $region5
  $region4: #{_lambda_.42} parent=0 // pred_region
    _
  $region5: #{_lambda_.42} parent=0 // pred_fallthru
    _
  // Predicated region
  $region6: #{_lambda_.42} parent=0 // pred_check
    _
  $region7: #{_lambda_.42} parent=0 // pred_check_branch
    %12 = sbr.rel (0) target = $region9
  $region8: #{_lambda_.42} parent=0 // pred_region
    _
  $region9: #{_lambda_.42} parent=0 // pred_fallthru
    _
  // Predicated region
  $region10: #{_lambda_.42} parent=0 // pred_check
    _
  $region11: #{_lambda_.42} parent=0 // pred_check_branch
    %14 = sbr.rel (0) target = $region13
  $region12: #{_lambda_.42} parent=0 // pred_region
    _
  $region13: #{_lambda_.42} parent=0 // pred_fallthru
    _
  // Predicated region
  $region14: #{_lambda_.42} parent=0 // pred_check
    _
  $region15: #{_lambda_.42} parent=0 // pred_check_branch
    %16 = sbr.rel (0) target = $region17
  $region16: #{_lambda_.42} parent=0 // pred_region
    _
  $region17: #{_lambda_.42} parent=0 // pred_fallthru
    _
  %v18 = vld [vmem:[%s0] sm:$0xf]
  %v19 = vld [vmem:[%s0 + $0x4] sm:$0xf]
  %v20 = vld [vmem:[%s1] sm:$0xf]
  %v21 = vld [vmem:[%s1 + $0x4] sm:$0xf]
  %v22 = vld [vmem:[%s1 + $0x8] sm:$0xf]
  %v23 = vld [vmem:[%s1 + $0xc] sm:$0xf]
  %v24 = vld [vmem:[%s1 + $0x10] sm:$0xf]
  %v25 = vld [vmem:[%s1 + $0x14] sm:$0xf]
  %v26 = vld [vmem:[%s1 + $0x18] sm:$0xf]
  %v27 = vld [vmem:[%s1 + $0x1c] sm:$0xf]
  %v28 = vld [vmem:[%s2] sm:$0x1]
  %v30 = vlaneseq
  %v31 = vshrl.u32 %v30, 7
  %v32 = vsub.s32 0, %v31
  %v33 = vrot.slane %v28, %v32
  %v37 = vunpack.c.l.b16 %v18
  %v38 = vunpack.c.l.b16 %v19
  %v39 = vpack.c.b16 %v38, %v37
  %v48 = vunpack.c.l.b16 %v20
  %v49 = vunpack.c.l.b16 %v21
  %v50 = vunpack.c.l.b16 %v22
  %v51 = vunpack.c.l.b16 %v23
  %v52 = vunpack.c.l.b16 %v24
  %v53 = vunpack.c.l.b16 %v25
  %v54 = vunpack.c.l.b16 %v26
  %v55 = vunpack.c.l.b16 %v27
  %v56 = vpack.c.b16 %v49, %v48
  %v57 = vpack.c.b16 %v51, %v50
  %v58 = vpack.c.b16 %v53, %v52
  %v59 = vpack.c.b16 %v55, %v54
  %vm64 = vcmask 523264
  %v66 = vsel %vm64, %v39, 0
  %68 = vmatprep.subr.bf16.mxu0 0
  %69 = vmatpush1.bf16.msra.mxu0 0
  %70 = vmatprep.subr.bf16.mxu0 0
  %71 = vmatpush1.bf16.msra.mxu0 0
  %72 = vmatprep.subr.bf16.mxu0 0
  %73 = vmatpush1.bf16.msra.mxu0 0
  %74 = vmatprep.subr.bf16.mxu0 0
  %75 = vmatpush1.bf16.msra.mxu0 0
  %76 = vmatprep.subr.bf16.mxu0 0
  %77 = vmatpush1.bf16.msra.mxu0 %v59
  %78 = vmatprep.subr.bf16.mxu0 0
  %79 = vmatpush1.bf16.msra.mxu0 %v58
  %80 = vmatprep.subr.bf16.mxu0 0
  %81 = vmatpush1.bf16.msra.mxu0 %v57
  %82 = vmatprep.subr.bf16.mxu0 0
  %83 = vmatpush1.bf16.msra.mxu0 %v56
  %84 = vmatprep.subr.bf16.mxu0 0
  %85 = vmatpush2.bf16.msra.mxu0 0
  %86 = vmatprep.subr.bf16.mxu0 0
  %87 = vmatpush2.bf16.msra.mxu0 0
  %88 = vmatprep.subr.bf16.mxu0 0
  %89 = vmatpush2.bf16.msra.mxu0 0
  %90 = vmatprep.subr.bf16.mxu0 0
  %91 = vmatpush2.bf16.msra.mxu0 0
  %92 = vmatprep.subr.bf16.mxu0 0
  %93 = vmatpush2.bf16.msra.mxu0 0
  %94 = vmatprep.subr.bf16.mxu0 0
  %95 = vmatpush2.bf16.msra.mxu0 0
  %96 = vmatprep.subr.bf16.mxu0 0
  %97 = vmatpush2.bf16.msra.mxu0 0
  %98 = vmatprep.subr.bf16.mxu0 0
  %99 = vmatpush2.bf16.msra.mxu0 0
  %100 = vmatprep.mubr.bf16.mxu0 0
  %101 = vmatmul.mubr.bf16.gmra.mxu0 %v66
  %v102 = vpop.f32.mrf.mxu0
  %v103 = vadd.f32 %v33, %v102
  %v104 = vpop.f32.mrf.mxu0
  %v105 = vpop.f32.mrf.mxu0
  %v106 = vadd.f32 %v33, %v105
  %v107 = vpop.f32.mrf.mxu0
  %108 = vdwg.mxu0
  %v109 = vld [vmem:[%s3] sm:$0xf]
  %v110 = vld [vmem:[%s3 + $0x4] sm:$0xf]
  %v111 = vunpack.c.l.bf16 %v109
  %v112 = vunpack.c.l.bf16 %v110
  %v113 = vadd.f32 %v103, %v111
  %v114 = vadd.f32 %v106, %v112
  %v115 = vpack.c.bf16 %v114, %v113
  %v117 = vunpack.c.l.b16 %v115
  %v118 = vunpack.c.h.b16 %v115
  %v119 = vpack.c.b16 %v117, %v117
  %v120 = vpack.c.b16 %v118, %v118
  %vm123 = vcmask 257024
  %124 = vst.msk [vmem:[%s4] sm:$0xf] %vm123, %v119
  %125 = vst.msk [vmem:[%s4 + $0x4] sm:$0xf] %vm123, %v120
  // Predicated region
  $region18: #{_lambda_.42} parent=0 // pred_check
    _
  $region19: #{_lambda_.42} parent=0 // pred_check_branch
    %127 = sbr.rel (0) target = $region21
  $region20: #{_lambda_.42} parent=0 // pred_region
    _
  $region21: #{_lambda_.42} parent=0 // pred_fallthru
    _
  // Predicated region
  $region22: #{_lambda_.42} parent=0 // pred_check
    _
  $region23: #{_lambda_.42} parent=0 // pred_check_branch
    %129 = sbr.rel (0) target = $region25
  $region24: #{_lambda_.42} parent=0 // pred_region
    _
  $region25: #{_lambda_.42} parent=0 // pred_fallthru
    _

// kernel: _lambda_.49
$region0: #{_lambda_.49}
  #allocation0 [shape = 'u32[]', space=smem, size = 0x4, offset = 0x4, fixed_abs, tag = 'smem constant byte address 0x4 - core index']
  #allocation1 [shape = 'u32[144,128]{1,0:T(1,128)}', space=vmem, size = 0x12000, scoped, tag = 'internal scratch']
  #allocation2 [shape = 'f32[1,1]{1,0:T(1,128)S(1)}', space=vmem, size = 0x200, scoped, tag = 'scoped memory for _lambda_.49']
  %s0 = inlined_call_operand.vmem [shape: f32[2,16], index: 0, kind: input, shape index: {}]
  %s1 = inlined_call_operand.vmem [shape: f32[2,16], index: 1, kind: input, shape index: {}]
  %s2 = inlined_call_operand.<no memory space> [shape: f32[1,1], index: 2, kind: input, shape index: {}]
  %s3 = inlined_call_operand.hbm [shape: f32[2,2], index: 3, kind: output, shape index: {}]
  %s4 = sld [smem:[#allocation0]]
  $region22: #{_lambda_.49} parent=0
    _
  %s6 = ssub.s32 1, %s4
  %s7 = scalar_select 0, %s6, %s4
  %v8 = vstv %s2
  %9 = vst [vmem:[#allocation2] sm:$0x1] %v8
  $region1: #{_lambda_.49} parent=0
    #allocation3 [shape = 'u8[1024]{0}', space=vmem, size = 0x400, scoped, tag = 'output window, operand 0, single buffered']
    #allocation4 [shape = 's32[1]{0}', space=sflag, size = 0x4, scoped, tag = 'scoped memory for _lambda_.49']
    %10 = vsyncpa [#allocation4], 0
    // Predicated region
    $region2: #{_lambda_.49} parent=1 // pred_check
      _
    $region3: #{_lambda_.49} parent=1 // pred_check_branch
      %12 = sbr.rel (0) target = $region5
    $region4: #{_lambda_.49} parent=1 // pred_region
      _
    $region5: #{_lambda_.49} parent=1 // pred_fallthru
      _
    // Predicated region
    $region6: #{_lambda_.49} parent=1 // pred_check
      _
    $region7: #{_lambda_.49} parent=1 // pred_check_branch
      %14 = sbr.rel (0) target = $region9
    $region8: #{_lambda_.49} parent=1 // pred_region
      _
    $region9: #{_lambda_.49} parent=1 // pred_fallthru
      _
    // Predicated region
    $region10: #{_lambda_.49} parent=1 // pred_check
      _
    $region11: #{_lambda_.49} parent=1 // pred_check_branch
      %16 = sbr.rel (0) target = $region13
    $region12: #{_lambda_.49} parent=1 // pred_region
      _
    $region13: #{_lambda_.49} parent=1 // pred_fallthru
      _
    %v17 = vld [vmem:[%s0] sm:$0x3]
    %v18 = vld [vmem:[%s1] sm:$0x3]
    %v19 = vmul.f32 %v17, %v17
    %vm20 = vcmask 123904
    %v21 = vsel %vm20, %v19, 0.0
    %22 = vadd.xlane.f32.xlu0 %v21
    %v23 = vpop.xlane.xlu0 %22
    %v24 = vadd.f32 %v23, 1e-12
    %v25 = vrsqrt.pop %v24
    %v26 = vmul.f32 %v17, %v25
    %v27 = vmul.f32 %v18, %v18
    %v28 = vsel %vm20, %v27, 0.0
    %29 = vadd.xlane.f32.xlu0 %v28
    %v30 = vpop.xlane.xlu0 %29
    %v31 = vadd.f32 %v30, 1e-12
    %v32 = vrsqrt.pop %v31
    %v33 = vmul.f32 %v18, %v32
    %vm34 = vcmask 130048
    %v36 = vsel %vm34, %v26, 0
    %v39 = vsel %vm34, %v33, 0
    %41 = vmatprep.subr.mxu0 0.0
    %42 = vmatpush1.xpose.msra.mxu0 0.0
    %43 = vmatprep.subr.mxu0 0.0
    %44 = vmatpush1.xpose.msra.mxu0 0.0
    %45 = vmatprep.subr.mxu0 0.0
    %46 = vmatpush1.xpose.msra.mxu0 0.0
    %47 = vmatprep.subr.mxu0 0.0
    %48 = vmatpush1.xpose.msra.mxu0 0.0
    %49 = vmatprep.subr.mxu0 0.0
    %50 = vmatpush1.xpose.msra.mxu0 0.0
    %51 = vmatprep.subr.mxu0 0.0
    %52 = vmatpush1.xpose.msra.mxu0 0.0
    %53 = vmatprep.subr.mxu0 0.0
    %54 = vmatpush1.xpose.msra.mxu0 0.0
    %55 = vmatprep.subr.mxu0 0.0
    %56 = vmatpush1.xpose.msra.mxu0 0.0
    %57 = vmatprep.subr.mxu0 0.0
    %58 = vmatpush1.xpose.msra.mxu0 0.0
    %59 = vmatprep.subr.mxu0 0.0
    %60 = vmatpush1.xpose.msra.mxu0 0.0
    %61 = vmatprep.subr.mxu0 0.0
    %62 = vmatpush1.xpose.msra.mxu0 0.0
    %63 = vmatprep.subr.mxu0 0.0
    %64 = vmatpush1.xpose.msra.mxu0 0.0
    %65 = vmatprep.subr.mxu0 0.0
    %66 = vmatpush1.xpose.msra.mxu0 0.0
    %67 = vmatprep.subr.mxu0 0.0
    %68 = vmatpush1.xpose.msra.mxu0 0.0
    %69 = vmatprep.subr.mxu0 0.0
    %70 = vmatpush1.xpose.msra.mxu0 0.0
    %71 = vmatprep.subr.mxu0 0.0
    %72 = vmatpush1.xpose.msra.mxu0 %v39
    %73 = vmatprep.subr.mxu0 0.0
    %74 = vmatpush2.xpose.msra.mxu0 0.0
    %75 = vmatprep.subr.mxu0 0.0
    %76 = vmatpush2.xpose.msra.mxu0 0.0
    %77 = vmatprep.subr.mxu0 0.0
    %78 = vmatpush2.xpose.msra.mxu0 0.0
    %79 = vmatprep.subr.mxu0 0.0
    %80 = vmatpush2.xpose.msra.mxu0 0.0
    %81 = vmatprep.subr.mxu0 0.0
    %82 = vmatpush2.xpose.msra.mxu0 0.0
    %83 = vmatprep.subr.mxu0 0.0
    %84 = vmatpush2.xpose.msra.mxu0 0.0
    %85 = vmatprep.subr.mxu0 0.0
    %86 = vmatpush2.xpose.msra.mxu0 0.0
    %87 = vmatprep.subr.mxu0 0.0
    %88 = vmatpush2.xpose.msra.mxu0 0.0
    %89 = vmatprep.subr.mxu0 0.0
    %90 = vmatpush2.xpose.msra.mxu0 0.0
    %91 = vmatprep.subr.mxu0 0.0
    %92 = vmatpush2.xpose.msra.mxu0 0.0
    %93 = vmatprep.subr.mxu0 0.0
    %94 = vmatpush2.xpose.msra.mxu0 0.0
    %95 = vmatprep.subr.mxu0 0.0
    %96 = vmatpush2.xpose.msra.mxu0 0.0
    %97 = vmatprep.subr.mxu0 0.0
    %98 = vmatpush2.xpose.msra.mxu0 0.0
    %99 = vmatprep.subr.mxu0 0.0
    %100 = vmatpush2.xpose.msra.mxu0 0.0
    %101 = vmatprep.subr.mxu0 0.0
    %102 = vmatpush2.xpose.msra.mxu0 0.0
    %103 = vmatprep.subr.mxu0 0.0
    %104 = vmatpush2.xpose.msra.mxu0 0.0
    %105 = vmatprep.mubr.f32.mxu0 0.0
    %106 = vmatmul.mubr.f32.gmra.mxu0 %v36
    %v107 = vpop.f32.mrf.mxu0
    %v108 = vadd.f32 0.0, %v107
    %v109 = vpop.f32.mrf.mxu0
    %110 = vdwg.mxu0
    %v111 = vld [vmem:[#allocation2] sm:$0x1]
    %s112 = vtos %v111
    %v113 = vstv %s112
    %v114 = vmul.f32 %v108, %v113
    %vm115 = vcmask 9216
    %v116 = vsel %vm115, %v114, -inf
    %117 = vmax.xlane.f32.xlu0 %v116
    %v118 = vpop.xlane.xlu0 %117
    %v119 = vsub.f32 %v114, %v118
    %v120 = vmul.f32 %v119, 1.442695
    %v121 = vpow.pop %v120
    %v122 = vsel %vm115, %v121, 0.0
    %123 = vadd.xlane.f32.xlu0 %v122
    %v124 = vpop.xlane.xlu0 %123
    %v125 = vrcp.pop %v124
    %v126 = vmul.f32 %v121, %v125
    %127 = vst.msk [vmem:[#allocation3] sm:$0x3] %vm115, %v126
    // Predicated region
    $region14: #{_lambda_.49} parent=1 // pred_check
      _
    $region15: #{_lambda_.49} parent=1 // pred_check_branch
      %129 = sbr.rel (0) target = $region17
    $region16: #{_lambda_.49} parent=1 // pred_region
      %s131 = ssub.s32 32, 32
      %132 = vsyncadd [#allocation4], %s131
      %s134 = sshll.u32 [#allocation3], 4
      %s135 = int_to_ptr.vmem [resolvable:$true] %s134
      %137 = dma.vmem_to_hbm [thread:$0]  %s135, 32, %s3, [#allocation4]
    $region17: #{_lambda_.49} parent=1 // pred_fallthru
      _
    // Predicated region
    $region18: #{_lambda_.49} parent=1 // pred_check
      _
    $region19: #{_lambda_.49} parent=1 // pred_check_branch
      %139 = sbr.rel (0) target = $region21
    $region20: #{_lambda_.49} parent=1 // pred_region
      %140 = dma.done [#allocation4], 32
    $region21: #{_lambda_.49} parent=1 // pred_fallthru
      _
    %141 = vsyncpa [#allocation4], 1

</llo_original>
